<compile_context>
chip_gen: v5e
topology: v5e:2x2
jax: 0.10.0
libtpu: 0.0.40
codegen_flags: <defaults>
</compile_context>

<pallas_src>
import jax
import jax.numpy as jnp
from jax.experimental import pallas as pl
from jax.experimental.pallas import tpu as pltpu

KH = KW = 3
CIN = 3
COUT = 16


def conv_bn_relu_kernel(x_ref, w_ref, b_ref, o_ref, xpad_ref):
    # x_ref:    (CIN, H, W)        full input image of this batch element (VMEM)
    # w_ref:    (KH*KW*CIN*COUT,)  BN-scaled weights, (kh, kw, cin, cout) order (SMEM)
    # b_ref:    (COUT,)            folded BN bias (SMEM)
    # o_ref:    (COUT, TH, W)      output row strip, NCHW layout -> W on lanes (VMEM)
    # xpad_ref: (CIN, TH+2, W+2)   zero-padded input strip scratch (VMEM)
    H, W = x_ref.shape[1], x_ref.shape[2]
    TH = o_ref.shape[1]

    s = pl.program_id(1)
    num_s = pl.num_programs(1)
    r0 = s * TH
    if TH % 8 == 0:
        r0 = pl.multiple_of(r0, 8)

    # Build the zero-padded (halo'd) strip in VMEM scratch.  The 1-wide border
    # implements conv padding=1; top/bottom halo rows are real neighbor rows
    # except at the global image edges where they are zero.
    xpad_ref[...] = jnp.zeros((CIN, TH + 2, W + 2), jnp.float32)
    xpad_ref[:, 1:TH + 1, 1:W + 1] = x_ref[:, pl.ds(r0, TH), :]

    top = x_ref[:, pl.ds(jnp.maximum(r0 - 1, 0), 1), :]          # (CIN, 1, W)
    xpad_ref[:, 0:1, 1:W + 1] = jnp.where(s > 0, top, jnp.zeros_like(top))

    bot = x_ref[:, pl.ds(jnp.minimum(r0 + TH, H - 1), 1), :]     # (CIN, 1, W)
    xpad_ref[:, TH + 1:TH + 2, 1:W + 1] = jnp.where(
        s < num_s - 1, bot, jnp.zeros_like(bot))

    # 27 shifted tap planes (kh, kw, cin) as (TH, W) values; static slices of the
    # padded scratch (lane offsets 0/1/2 are cheap XLU rotates).
    planes = []
    for kh in range(KH):
        for kw in range(KW):
            for ci in range(CIN):
                planes.append(xpad_ref[ci, kh:kh + TH, kw:kw + W])

    # Pure-VPU conv: per output channel, 27 scalar-broadcast FMAs in f32,
    # bias init + ReLU fused, one lane-dense (TH, W) store.
    for co in range(COUT):
        acc = jnp.full((TH, W), b_ref[co], dtype=jnp.float32)
        t = 0
        for kh in range(KH):
            for kw in range(KW):
                for ci in range(CIN):
                    acc = acc + w_ref[t * COUT + co] * planes[t]
                    t += 1
        o_ref[co] = jnp.maximum(acc, 0.0).astype(o_ref.dtype)


def _pick_tile_h(H, max_tile=32):
    if H % 8 != 0:
        return H  # whole-image strip (block dim == full array dim is always legal)
    best = 8
    for th in range(8, min(H, max_tile) + 1, 8):
        if H % th == 0:
            best = th
    return best


def conv_bn_relu(x_nchw, weight_oihw, gamma, beta, running_mean, running_var,
                 eps=1e-5, tile_h=None):
    """x_nchw: (N, 3, H, W) f32.  Returns (N, 16, H, W) f32 (NCHW in, NCHW out)."""
    N, C, H, W = x_nchw.shape
    assert C == CIN
    if tile_h is None:
        tile_h = _pick_tile_h(H)
    TH = tile_h
    assert TH == H or (TH % 8 == 0 and H % TH == 0)
    S = H // TH

    # Fold eval-mode BatchNorm into the conv weights + a per-channel bias.
    scale = (gamma / jnp.sqrt(running_var + eps)).astype(jnp.float32)   # (COUT,)
    bias = (beta - running_mean * scale).astype(jnp.float32)            # (COUT,)
    # (Cout, Cin, KH, KW) * scale[cout] -> (KH, KW, Cin, Cout) -> flat SMEM table.
    w_flat = jnp.transpose(weight_oihw * scale[:, None, None, None],
                           (2, 3, 1, 0)).reshape(-1).astype(jnp.float32)
    # TODO(synk): PyTorch BatchNorm2d in training mode uses batch statistics;
    # eval-mode (running-stats) semantics are implemented here.

    grid_spec = pltpu.PrefetchScalarGridSpec(
        num_scalar_prefetch=0,
        grid=(N, S),
        in_specs=[
            # Full image per batch element; the block index is constant in `s`, so
            # it is DMA'd once per n and revisited across row strips.
            pl.BlockSpec((pl.Squeezed(), CIN, H, W), lambda n, s: (n, 0, 0, 0)),
            pl.BlockSpec(memory_space=pltpu.MemorySpace.SMEM),   # weights (scalars)
            pl.BlockSpec(memory_space=pltpu.MemorySpace.SMEM),   # bias (scalars)
        ],
        out_specs=pl.BlockSpec((pl.Squeezed(), COUT, TH, W),
                               lambda n, s: (n, 0, s, 0)),
        scratch_shapes=[pltpu.VMEM((CIN, TH + 2, W + 2), jnp.float32)],
    )

    return pl.pallas_call(
        conv_bn_relu_kernel,
        out_shape=jax.ShapeDtypeStruct((N, COUT, H, W), jnp.float32),
        grid_spec=grid_spec,
        compiler_params=pltpu.CompilerParams(
            dimension_semantics=("parallel", "parallel"),
            vmem_limit_bytes=32 * 1024 * 1024),
    )(x_nchw.astype(jnp.float32), w_flat, bias)


def _reference(x_nchw, weight_oihw, gamma, beta, running_mean, running_var,
               eps=1e-5):
    y = jax.lax.conv_general_dilated(
        x_nchw, weight_oihw, window_strides=(1, 1), padding=((1, 1), (1, 1)),
        dimension_numbers=("NCHW", "OIHW", "NCHW"))
    scale = gamma / jnp.sqrt(running_var + eps)
    bias = beta - running_mean * scale
    y = y * scale[None, :, None, None] + bias[None, :, None, None]
    return jnp.maximum(y, 0.0)


if __name__ == "__main__":
    key = jax.random.PRNGKey(0)
    kx, kw_key, kg, kb, km, kv = jax.random.split(key, 6)

    N, H, W = 2, 16, 16
    x = jax.random.normal(kx, (N, CIN, H, W), dtype=jnp.float32)

    # Deterministic parameters; BN stats made non-trivial to exercise the fold.
    weight = 0.1 * jax.random.normal(kw_key, (COUT, CIN, KH, KW), dtype=jnp.float32)
    gamma = 1.0 + 0.2 * jax.random.normal(kg, (COUT,), dtype=jnp.float32)
    beta = 0.1 * jax.random.normal(kb, (COUT,), dtype=jnp.float32)
    running_mean = 0.1 * jax.random.normal(km, (COUT,), dtype=jnp.float32)
    running_var = 0.5 + jnp.abs(jax.random.normal(kv, (COUT,), dtype=jnp.float32))

    # tile_h=8 -> 2 row strips per image: exercises both the interior halo exchange
    # and the zero-padded global edges.
    out = conv_bn_relu(x, weight, gamma, beta, running_mean, running_var, tile_h=8)
    out = jax.block_until_ready(out)

    ref = _reference(x, weight, gamma, beta, running_mean, running_var)
    assert out.shape == (N, COUT, H, W)
    assert jnp.allclose(out, ref, atol=1e-4, rtol=1e-4)

    print("KERNEL_OK")
</pallas_src>

<mosaic_0001>
module attributes {stable_mosaic.version = 11 : i64} {
  func.func @conv_bn_relu_kernel(%arg0: i32, %arg1: i32, %arg2: memref<1x3x16x16xf32, #tpu.memory_space<vmem>>, %arg3: memref<432xf32, #tpu.memory_space<smem>>, %arg4: memref<16xf32, #tpu.memory_space<smem>>, %arg5: memref<1x16x8x16xf32, #tpu.memory_space<vmem>>, %arg6: memref<3x10x18xf32, #tpu.memory_space<vmem>>) attributes {dimension_semantics = [#tpu.dimension_semantics<parallel>, #tpu.dimension_semantics<parallel>], iteration_bounds = array<i64: 2, 2>, scalar_prefetch = 0 : i64, scratch_operands = 1 : i64, tpu.core_type = #tpu.core_type<tc>, window_params = [{transform_indices = @transform_0, window_bounds = array<i64: 1, 3, 16, 16>}, {transform_indices = @transform_1, window_bounds = array<i64: 432>}, {transform_indices = @transform_2, window_bounds = array<i64: 16>}, {transform_indices = @transform_3, window_bounds = array<i64: 1, 16, 8, 16>}]} {
    %c8_i32 = arith.constant 8 : i32
    %0 = arith.muli %arg1, %c8_i32 : i32
    %1 = tpu.assume_multiple %0, 8 : i32
    %cst = arith.constant 0.000000e+00 : f32
    %2 = vector.broadcast %cst : f32 to vector<3x10x18xf32>
    %c0 = arith.constant 0 : index
    %c0_0 = arith.constant 0 : index
    %c0_1 = arith.constant 0 : index
    %3 = vector.load %arg6[%c0, %c0_0, %c0_1] : memref<3x10x18xf32, #tpu.memory_space<vmem>>, vector<3x10x18xf32>
    tpu.vector_store %arg6[%c0, %c0_0, %c0_1], %2 {strides = array<i32>} : memref<3x10x18xf32, #tpu.memory_space<vmem>>, vector<3x10x18xf32>,
    %c0_2 = arith.constant 0 : index
    %c0_3 = arith.constant 0 : index
    %4 = arith.index_cast %1 : i32 to index
    %c0_4 = arith.constant 0 : index
    %5 = vector.load %arg2[%c0_2, %c0_3, %4, %c0_4] : memref<1x3x16x16xf32, #tpu.memory_space<vmem>>, vector<1x3x8x16xf32>
    %6 = vector.shape_cast %5 : vector<1x3x8x16xf32> to vector<3x8x16xf32>
    %c0_5 = arith.constant 0 : index
    %c1 = arith.constant 1 : index
    %c1_6 = arith.constant 1 : index
    %7 = vector.load %arg6[%c0_5, %c1, %c1_6] : memref<3x10x18xf32, #tpu.memory_space<vmem>>, vector<3x8x16xf32>
    tpu.vector_store %arg6[%c0_5, %c1, %c1_6], %6 {strides = array<i32>} : memref<3x10x18xf32, #tpu.memory_space<vmem>>, vector<3x8x16xf32>,
    %c1_i32 = arith.constant 1 : i32
    %8 = arith.subi %1, %c1_i32 : i32
    %c0_i32 = arith.constant 0 : i32
    %9 = arith.maxsi %8, %c0_i32 : i32
    %c0_7 = arith.constant 0 : index
    %c0_8 = arith.constant 0 : index
    %10 = arith.index_cast %9 : i32 to index
    %c0_9 = arith.constant 0 : index
    %11 = vector.load %arg2[%c0_7, %c0_8, %10, %c0_9] : memref<1x3x16x16xf32, #tpu.memory_space<vmem>>, vector<1x3x1x16xf32>
    %12 = vector.shape_cast %11 : vector<1x3x1x16xf32> to vector<3x1x16xf32>
    %c0_i32_10 = arith.constant 0 : i32
    %13 = arith.cmpi sgt, %arg1, %c0_i32_10 : i32
    %cst_11 = arith.constant 0.000000e+00 : f32
    %14 = vector.broadcast %cst_11 : f32 to vector<3x1x16xf32>
    %15 = arith.select %13, %12, %14 : vector<3x1x16xf32>
    %c0_12 = arith.constant 0 : index
    %c0_13 = arith.constant 0 : index
    %c1_14 = arith.constant 1 : index
    %16 = vector.load %arg6[%c0_12, %c0_13, %c1_14] : memref<3x10x18xf32, #tpu.memory_space<vmem>>, vector<3x1x16xf32>
    tpu.vector_store %arg6[%c0_12, %c0_13, %c1_14], %15 {strides = array<i32>} : memref<3x10x18xf32, #tpu.memory_space<vmem>>, vector<3x1x16xf32>,
    %c8_i32_15 = arith.constant 8 : i32
    %17 = arith.addi %1, %c8_i32_15 : i32
    %c15_i32 = arith.constant 15 : i32
    %18 = arith.minsi %17, %c15_i32 : i32
    %c0_16 = arith.constant 0 : index
    %c0_17 = arith.constant 0 : index
    %19 = arith.index_cast %18 : i32 to index
    %c0_18 = arith.constant 0 : index
    %20 = vector.load %arg2[%c0_16, %c0_17, %19, %c0_18] : memref<1x3x16x16xf32, #tpu.memory_space<vmem>>, vector<1x3x1x16xf32>
    %21 = vector.shape_cast %20 : vector<1x3x1x16xf32> to vector<3x1x16xf32>
    %c1_i32_19 = arith.constant 1 : i32
    %22 = arith.cmpi slt, %arg1, %c1_i32_19 : i32
    %cst_20 = arith.constant 0.000000e+00 : f32
    %23 = vector.broadcast %cst_20 : f32 to vector<3x1x16xf32>
    %24 = arith.select %22, %21, %23 : vector<3x1x16xf32>
    %c0_21 = arith.constant 0 : index
    %c9 = arith.constant 9 : index
    %c1_22 = arith.constant 1 : index
    %25 = vector.load %arg6[%c0_21, %c9, %c1_22] : memref<3x10x18xf32, #tpu.memory_space<vmem>>, vector<3x1x16xf32>
    tpu.vector_store %arg6[%c0_21, %c9, %c1_22], %24 {strides = array<i32>} : memref<3x10x18xf32, #tpu.memory_space<vmem>>, vector<3x1x16xf32>,
    %c0_23 = arith.constant 0 : index
    %c0_24 = arith.constant 0 : index
    %c0_25 = arith.constant 0 : index
    %26 = vector.load %arg6[%c0_23, %c0_24, %c0_25] : memref<3x10x18xf32, #tpu.memory_space<vmem>>, vector<1x8x16xf32>
    %27 = vector.shape_cast %26 : vector<1x8x16xf32> to vector<8x16xf32>
    %c1_26 = arith.constant 1 : index
    %c0_27 = arith.constant 0 : index
    %c0_28 = arith.constant 0 : index
    %28 = vector.load %arg6[%c1_26, %c0_27, %c0_28] : memref<3x10x18xf32, #tpu.memory_space<vmem>>, vector<1x8x16xf32>
    %29 = vector.shape_cast %28 : vector<1x8x16xf32> to vector<8x16xf32>
    %c2 = arith.constant 2 : index
    %c0_29 = arith.constant 0 : index
    %c0_30 = arith.constant 0 : index
    %30 = vector.load %arg6[%c2, %c0_29, %c0_30] : memref<3x10x18xf32, #tpu.memory_space<vmem>>, vector<1x8x16xf32>
    %31 = vector.shape_cast %30 : vector<1x8x16xf32> to vector<8x16xf32>
    %c0_31 = arith.constant 0 : index
    %c0_32 = arith.constant 0 : index
    %c1_33 = arith.constant 1 : index
    %32 = vector.load %arg6[%c0_31, %c0_32, %c1_33] : memref<3x10x18xf32, #tpu.memory_space<vmem>>, vector<1x8x16xf32>
    %33 = vector.shape_cast %32 : vector<1x8x16xf32> to vector<8x16xf32>
    %c1_34 = arith.constant 1 : index
    %c0_35 = arith.constant 0 : index
    %c1_36 = arith.constant 1 : index
    %34 = vector.load %arg6[%c1_34, %c0_35, %c1_36] : memref<3x10x18xf32, #tpu.memory_space<vmem>>, vector<1x8x16xf32>
    %35 = vector.shape_cast %34 : vector<1x8x16xf32> to vector<8x16xf32>
    %c2_37 = arith.constant 2 : index
    %c0_38 = arith.constant 0 : index
    %c1_39 = arith.constant 1 : index
    %36 = vector.load %arg6[%c2_37, %c0_38, %c1_39] : memref<3x10x18xf32, #tpu.memory_space<vmem>>, vector<1x8x16xf32>
    %37 = vector.shape_cast %36 : vector<1x8x16xf32> to vector<8x16xf32>
    %c0_40 = arith.constant 0 : index
    %c0_41 = arith.constant 0 : index
    %c2_42 = arith.constant 2 : index
    %38 = vector.load %arg6[%c0_40, %c0_41, %c2_42] : memref<3x10x18xf32, #tpu.memory_space<vmem>>, vector<1x8x16xf32>
    %39 = vector.shape_cast %38 : vector<1x8x16xf32> to vector<8x16xf32>
    %c1_43 = arith.constant 1 : index
    %c0_44 = arith.constant 0 : index
    %c2_45 = arith.constant 2 : index
    %40 = vector.load %arg6[%c1_43, %c0_44, %c2_45] : memref<3x10x18xf32, #tpu.memory_space<vmem>>, vector<1x8x16xf32>
    %41 = vector.shape_cast %40 : vector<1x8x16xf32> to vector<8x16xf32>
    %c2_46 = arith.constant 2 : index
    %c0_47 = arith.constant 0 : index
    %c2_48 = arith.constant 2 : index
    %42 = vector.load %arg6[%c2_46, %c0_47, %c2_48] : memref<3x10x18xf32, #tpu.memory_space<vmem>>, vector<1x8x16xf32>
    %43 = vector.shape_cast %42 : vector<1x8x16xf32> to vector<8x16xf32>
    %c0_49 = arith.constant 0 : index
    %c1_50 = arith.constant 1 : index
    %c0_51 = arith.constant 0 : index
    %44 = vector.load %arg6[%c0_49, %c1_50, %c0_51] : memref<3x10x18xf32, #tpu.memory_space<vmem>>, vector<1x8x16xf32>
    %45 = vector.shape_cast %44 : vector<1x8x16xf32> to vector<8x16xf32>
    %c1_52 = arith.constant 1 : index
    %c1_53 = arith.constant 1 : index
    %c0_54 = arith.constant 0 : index
    %46 = vector.load %arg6[%c1_52, %c1_53, %c0_54] : memref<3x10x18xf32, #tpu.memory_space<vmem>>, vector<1x8x16xf32>
    %47 = vector.shape_cast %46 : vector<1x8x16xf32> to vector<8x16xf32>
    %c2_55 = arith.constant 2 : index
    %c1_56 = arith.constant 1 : index
    %c0_57 = arith.constant 0 : index
    %48 = vector.load %arg6[%c2_55, %c1_56, %c0_57] : memref<3x10x18xf32, #tpu.memory_space<vmem>>, vector<1x8x16xf32>
    %49 = vector.shape_cast %48 : vector<1x8x16xf32> to vector<8x16xf32>
    %c0_58 = arith.constant 0 : index
    %c1_59 = arith.constant 1 : index
    %c1_60 = arith.constant 1 : index
    %50 = vector.load %arg6[%c0_58, %c1_59, %c1_60] : memref<3x10x18xf32, #tpu.memory_space<vmem>>, vector<1x8x16xf32>
    %51 = vector.shape_cast %50 : vector<1x8x16xf32> to vector<8x16xf32>
    %c1_61 = arith.constant 1 : index
    %c1_62 = arith.constant 1 : index
    %c1_63 = arith.constant 1 : index
    %52 = vector.load %arg6[%c1_61, %c1_62, %c1_63] : memref<3x10x18xf32, #tpu.memory_space<vmem>>, vector<1x8x16xf32>
    %53 = vector.shape_cast %52 : vector<1x8x16xf32> to vector<8x16xf32>
    %c2_64 = arith.constant 2 : index
    %c1_65 = arith.constant 1 : index
    %c1_66 = arith.constant 1 : index
    %54 = vector.load %arg6[%c2_64, %c1_65, %c1_66] : memref<3x10x18xf32, #tpu.memory_space<vmem>>, vector<1x8x16xf32>
    %55 = vector.shape_cast %54 : vector<1x8x16xf32> to vector<8x16xf32>
    %c0_67 = arith.constant 0 : index
    %c1_68 = arith.constant 1 : index
    %c2_69 = arith.constant 2 : index
    %56 = vector.load %arg6[%c0_67, %c1_68, %c2_69] : memref<3x10x18xf32, #tpu.memory_space<vmem>>, vector<1x8x16xf32>
    %57 = vector.shape_cast %56 : vector<1x8x16xf32> to vector<8x16xf32>
    %c1_70 = arith.constant 1 : index
    %c1_71 = arith.constant 1 : index
    %c2_72 = arith.constant 2 : index
    %58 = vector.load %arg6[%c1_70, %c1_71, %c2_72] : memref<3x10x18xf32, #tpu.memory_space<vmem>>, vector<1x8x16xf32>
    %59 = vector.shape_cast %58 : vector<1x8x16xf32> to vector<8x16xf32>
    %c2_73 = arith.constant 2 : index
    %c1_74 = arith.constant 1 : index
    %c2_75 = arith.constant 2 : index
    %60 = vector.load %arg6[%c2_73, %c1_74, %c2_75] : memref<3x10x18xf32, #tpu.memory_space<vmem>>, vector<1x8x16xf32>
    %61 = vector.shape_cast %60 : vector<1x8x16xf32> to vector<8x16xf32>
    %c0_76 = arith.constant 0 : index
    %c2_77 = arith.constant 2 : index
    %c0_78 = arith.constant 0 : index
    %62 = vector.load %arg6[%c0_76, %c2_77, %c0_78] : memref<3x10x18xf32, #tpu.memory_space<vmem>>, vector<1x8x16xf32>
    %63 = vector.shape_cast %62 : vector<1x8x16xf32> to vector<8x16xf32>
    %c1_79 = arith.constant 1 : index
    %c2_80 = arith.constant 2 : index
    %c0_81 = arith.constant 0 : index
    %64 = vector.load %arg6[%c1_79, %c2_80, %c0_81] : memref<3x10x18xf32, #tpu.memory_space<vmem>>, vector<1x8x16xf32>
    %65 = vector.shape_cast %64 : vector<1x8x16xf32> to vector<8x16xf32>
    %c2_82 = arith.constant 2 : index
    %c2_83 = arith.constant 2 : index
    %c0_84 = arith.constant 0 : index
    %66 = vector.load %arg6[%c2_82, %c2_83, %c0_84] : memref<3x10x18xf32, #tpu.memory_space<vmem>>, vector<1x8x16xf32>
    %67 = vector.shape_cast %66 : vector<1x8x16xf32> to vector<8x16xf32>
    %c0_85 = arith.constant 0 : index
    %c2_86 = arith.constant 2 : index
    %c1_87 = arith.constant 1 : index
    %68 = vector.load %arg6[%c0_85, %c2_86, %c1_87] : memref<3x10x18xf32, #tpu.memory_space<vmem>>, vector<1x8x16xf32>
    %69 = vector.shape_cast %68 : vector<1x8x16xf32> to vector<8x16xf32>
    %c1_88 = arith.constant 1 : index
    %c2_89 = arith.constant 2 : index
    %c1_90 = arith.constant 1 : index
    %70 = vector.load %arg6[%c1_88, %c2_89, %c1_90] : memref<3x10x18xf32, #tpu.memory_space<vmem>>, vector<1x8x16xf32>
    %71 = vector.shape_cast %70 : vector<1x8x16xf32> to vector<8x16xf32>
    %c2_91 = arith.constant 2 : index
    %c2_92 = arith.constant 2 : index
    %c1_93 = arith.constant 1 : index
    %72 = vector.load %arg6[%c2_91, %c2_92, %c1_93] : memref<3x10x18xf32, #tpu.memory_space<vmem>>, vector<1x8x16xf32>
    %73 = vector.shape_cast %72 : vector<1x8x16xf32> to vector<8x16xf32>
    %c0_94 = arith.constant 0 : index
    %c2_95 = arith.constant 2 : index
    %c2_96 = arith.constant 2 : index
    %74 = vector.load %arg6[%c0_94, %c2_95, %c2_96] : memref<3x10x18xf32, #tpu.memory_space<vmem>>, vector<1x8x16xf32>
    %75 = vector.shape_cast %74 : vector<1x8x16xf32> to vector<8x16xf32>
    %c1_97 = arith.constant 1 : index
    %c2_98 = arith.constant 2 : index
    %c2_99 = arith.constant 2 : index
    %76 = vector.load %arg6[%c1_97, %c2_98, %c2_99] : memref<3x10x18xf32, #tpu.memory_space<vmem>>, vector<1x8x16xf32>
    %77 = vector.shape_cast %76 : vector<1x8x16xf32> to vector<8x16xf32>
    %c2_100 = arith.constant 2 : index
    %c2_101 = arith.constant 2 : index
    %c2_102 = arith.constant 2 : index
    %78 = vector.load %arg6[%c2_100, %c2_101, %c2_102] : memref<3x10x18xf32, #tpu.memory_space<vmem>>, vector<1x8x16xf32>
    %79 = vector.shape_cast %78 : vector<1x8x16xf32> to vector<8x16xf32>
    %c0_103 = arith.constant 0 : index
    %80 = memref.load %arg4[%c0_103] : memref<16xf32, #tpu.memory_space<smem>>
    %81 = vector.broadcast %80 : f32 to vector<8x16xf32>
    %c0_104 = arith.constant 0 : index
    %82 = memref.load %arg3[%c0_104] : memref<432xf32, #tpu.memory_space<smem>>
    %83 = vector.broadcast %82 : f32 to vector<8x16xf32>
    %84 = arith.mulf %83, %27 : vector<8x16xf32>
    %85 = arith.addf %81, %84 : vector<8x16xf32>
    %c16 = arith.constant 16 : index
    %86 = memref.load %arg3[%c16] : memref<432xf32, #tpu.memory_space<smem>>
    %87 = vector.broadcast %86 : f32 to vector<8x16xf32>
    %88 = arith.mulf %87, %29 : vector<8x16xf32>
    %89 = arith.addf %85, %88 : vector<8x16xf32>
    %c32 = arith.constant 32 : index
    %90 = memref.load %arg3[%c32] : memref<432xf32, #tpu.memory_space<smem>>
    %91 = vector.broadcast %90 : f32 to vector<8x16xf32>
    %92 = arith.mulf %91, %31 : vector<8x16xf32>
    %93 = arith.addf %89, %92 : vector<8x16xf32>
    %c48 = arith.constant 48 : index
    %94 = memref.load %arg3[%c48] : memref<432xf32, #tpu.memory_space<smem>>
    %95 = vector.broadcast %94 : f32 to vector<8x16xf32>
    %96 = arith.mulf %95, %33 : vector<8x16xf32>
    %97 = arith.addf %93, %96 : vector<8x16xf32>
    %c64 = arith.constant 64 : index
    %98 = memref.load %arg3[%c64] : memref<432xf32, #tpu.memory_space<smem>>
    %99 = vector.broadcast %98 : f32 to vector<8x16xf32>
    %100 = arith.mulf %99, %35 : vector<8x16xf32>
    %101 = arith.addf %97, %100 : vector<8x16xf32>
    %c80 = arith.constant 80 : index
    %102 = memref.load %arg3[%c80] : memref<432xf32, #tpu.memory_space<smem>>
    %103 = vector.broadcast %102 : f32 to vector<8x16xf32>
    %104 = arith.mulf %103, %37 : vector<8x16xf32>
    %105 = arith.addf %101, %104 : vector<8x16xf32>
    %c96 = arith.constant 96 : index
    %106 = memref.load %arg3[%c96] : memref<432xf32, #tpu.memory_space<smem>>
    %107 = vector.broadcast %106 : f32 to vector<8x16xf32>
    %108 = arith.mulf %107, %39 : vector<8x16xf32>
    %109 = arith.addf %105, %108 : vector<8x16xf32>
    %c112 = arith.constant 112 : index
    %110 = memref.load %arg3[%c112] : memref<432xf32, #tpu.memory_space<smem>>
    %111 = vector.broadcast %110 : f32 to vector<8x16xf32>
    %112 = arith.mulf %111, %41 : vector<8x16xf32>
    %113 = arith.addf %109, %112 : vector<8x16xf32>
    %c128 = arith.constant 128 : index
    %114 = memref.load %arg3[%c128] : memref<432xf32, #tpu.memory_space<smem>>
    %115 = vector.broadcast %114 : f32 to vector<8x16xf32>
    %116 = arith.mulf %115, %43 : vector<8x16xf32>
    %117 = arith.addf %113, %116 : vector<8x16xf32>
    %c144 = arith.constant 144 : index
    %118 = memref.load %arg3[%c144] : memref<432xf32, #tpu.memory_space<smem>>
    %119 = vector.broadcast %118 : f32 to vector<8x16xf32>
    %120 = arith.mulf %119, %45 : vector<8x16xf32>
    %121 = arith.addf %117, %120 : vector<8x16xf32>
    %c160 = arith.constant 160 : index
    %122 = memref.load %arg3[%c160] : memref<432xf32, #tpu.memory_space<smem>>
    %123 = vector.broadcast %122 : f32 to vector<8x16xf32>
    %124 = arith.mulf %123, %47 : vector<8x16xf32>
    %125 = arith.addf %121, %124 : vector<8x16xf32>
    %c176 = arith.constant 176 : index
    %126 = memref.load %arg3[%c176] : memref<432xf32, #tpu.memory_space<smem>>
    %127 = vector.broadcast %126 : f32 to vector<8x16xf32>
    %128 = arith.mulf %127, %49 : vector<8x16xf32>
    %129 = arith.addf %125, %128 : vector<8x16xf32>
    %c192 = arith.constant 192 : index
    %130 = memref.load %arg3[%c192] : memref<432xf32, #tpu.memory_space<smem>>
    %131 = vector.broadcast %130 : f32 to vector<8x16xf32>
    %132 = arith.mulf %131, %51 : vector<8x16xf32>
    %133 = arith.addf %129, %132 : vector<8x16xf32>
    %c208 = arith.constant 208 : index
    %134 = memref.load %arg3[%c208] : memref<432xf32, #tpu.memory_space<smem>>
    %135 = vector.broadcast %134 : f32 to vector<8x16xf32>
    %136 = arith.mulf %135, %53 : vector<8x16xf32>
    %137 = arith.addf %133, %136 : vector<8x16xf32>
    %c224 = arith.constant 224 : index
    %138 = memref.load %arg3[%c224] : memref<432xf32, #tpu.memory_space<smem>>
    %139 = vector.broadcast %138 : f32 to vector<8x16xf32>
    %140 = arith.mulf %139, %55 : vector<8x16xf32>
    %141 = arith.addf %137, %140 : vector<8x16xf32>
    %c240 = arith.constant 240 : index
    %142 = memref.load %arg3[%c240] : memref<432xf32, #tpu.memory_space<smem>>
    %143 = vector.broadcast %142 : f32 to vector<8x16xf32>
    %144 = arith.mulf %143, %57 : vector<8x16xf32>
    %145 = arith.addf %141, %144 : vector<8x16xf32>
    %c256 = arith.constant 256 : index
    %146 = memref.load %arg3[%c256] : memref<432xf32, #tpu.memory_space<smem>>
    %147 = vector.broadcast %146 : f32 to vector<8x16xf32>
    %148 = arith.mulf %147, %59 : vector<8x16xf32>
    %149 = arith.addf %145, %148 : vector<8x16xf32>
    %c272 = arith.constant 272 : index
    %150 = memref.load %arg3[%c272] : memref<432xf32, #tpu.memory_space<smem>>
    %151 = vector.broadcast %150 : f32 to vector<8x16xf32>
    %152 = arith.mulf %151, %61 : vector<8x16xf32>
    %153 = arith.addf %149, %152 : vector<8x16xf32>
    %c288 = arith.constant 288 : index
    %154 = memref.load %arg3[%c288] : memref<432xf32, #tpu.memory_space<smem>>
    %155 = vector.broadcast %154 : f32 to vector<8x16xf32>
    %156 = arith.mulf %155, %63 : vector<8x16xf32>
    %157 = arith.addf %153, %156 : vector<8x16xf32>
    %c304 = arith.constant 304 : index
    %158 = memref.load %arg3[%c304] : memref<432xf32, #tpu.memory_space<smem>>
    %159 = vector.broadcast %158 : f32 to vector<8x16xf32>
    %160 = arith.mulf %159, %65 : vector<8x16xf32>
    %161 = arith.addf %157, %160 : vector<8x16xf32>
    %c320 = arith.constant 320 : index
    %162 = memref.load %arg3[%c320] : memref<432xf32, #tpu.memory_space<smem>>
    %163 = vector.broadcast %162 : f32 to vector<8x16xf32>
    %164 = arith.mulf %163, %67 : vector<8x16xf32>
    %165 = arith.addf %161, %164 : vector<8x16xf32>
    %c336 = arith.constant 336 : index
    %166 = memref.load %arg3[%c336] : memref<432xf32, #tpu.memory_space<smem>>
    %167 = vector.broadcast %166 : f32 to vector<8x16xf32>
    %168 = arith.mulf %167, %69 : vector<8x16xf32>
    %169 = arith.addf %165, %168 : vector<8x16xf32>
    %c352 = arith.constant 352 : index
    %170 = memref.load %arg3[%c352] : memref<432xf32, #tpu.memory_space<smem>>
    %171 = vector.broadcast %170 : f32 to vector<8x16xf32>
    %172 = arith.mulf %171, %71 : vector<8x16xf32>
    %173 = arith.addf %169, %172 : vector<8x16xf32>
    %c368 = arith.constant 368 : index
    %174 = memref.load %arg3[%c368] : memref<432xf32, #tpu.memory_space<smem>>
    %175 = vector.broadcast %174 : f32 to vector<8x16xf32>
    %176 = arith.mulf %175, %73 : vector<8x16xf32>
    %177 = arith.addf %173, %176 : vector<8x16xf32>
    %c384 = arith.constant 384 : index
    %178 = memref.load %arg3[%c384] : memref<432xf32, #tpu.memory_space<smem>>
    %179 = vector.broadcast %178 : f32 to vector<8x16xf32>
    %180 = arith.mulf %179, %75 : vector<8x16xf32>
    %181 = arith.addf %177, %180 : vector<8x16xf32>
    %c400 = arith.constant 400 : index
    %182 = memref.load %arg3[%c400] : memref<432xf32, #tpu.memory_space<smem>>
    %183 = vector.broadcast %182 : f32 to vector<8x16xf32>
    %184 = arith.mulf %183, %77 : vector<8x16xf32>
    %185 = arith.addf %181, %184 : vector<8x16xf32>
    %c416 = arith.constant 416 : index
    %186 = memref.load %arg3[%c416] : memref<432xf32, #tpu.memory_space<smem>>
    %187 = vector.broadcast %186 : f32 to vector<8x16xf32>
    %188 = arith.mulf %187, %79 : vector<8x16xf32>
    %189 = arith.addf %185, %188 : vector<8x16xf32>
    %cst_105 = arith.constant 0.000000e+00 : f32
    %190 = vector.broadcast %cst_105 : f32 to vector<8x16xf32>
    %191 = arith.maximumf %189, %190 : vector<8x16xf32>
    %c0_106 = arith.constant 0 : index
    %c0_107 = arith.constant 0 : index
    %c0_108 = arith.constant 0 : index
    %c0_109 = arith.constant 0 : index
    %192 = vector.load %arg5[%c0_106, %c0_107, %c0_108, %c0_109] : memref<1x16x8x16xf32, #tpu.memory_space<vmem>>, vector<1x1x8x16xf32>
    %193 = vector.shape_cast %192 : vector<1x1x8x16xf32> to vector<8x16xf32>
    %194 = vector.shape_cast %191 : vector<8x16xf32> to vector<1x1x8x16xf32>
    tpu.vector_store %arg5[%c0_106, %c0_107, %c0_108, %c0_109], %194 {strides = array<i32>} : memref<1x16x8x16xf32, #tpu.memory_space<vmem>>, vector<1x1x8x16xf32>,
    %c1_110 = arith.constant 1 : index
    %195 = memref.load %arg4[%c1_110] : memref<16xf32, #tpu.memory_space<smem>>
    %196 = vector.broadcast %195 : f32 to vector<8x16xf32>
    %c1_111 = arith.constant 1 : index
    %197 = memref.load %arg3[%c1_111] : memref<432xf32, #tpu.memory_space<smem>>
    %198 = vector.broadcast %197 : f32 to vector<8x16xf32>
    %199 = arith.mulf %198, %27 : vector<8x16xf32>
    %200 = arith.addf %196, %199 : vector<8x16xf32>
    %c17 = arith.constant 17 : index
    %201 = memref.load %arg3[%c17] : memref<432xf32, #tpu.memory_space<smem>>
    %202 = vector.broadcast %201 : f32 to vector<8x16xf32>
    %203 = arith.mulf %202, %29 : vector<8x16xf32>
    %204 = arith.addf %200, %203 : vector<8x16xf32>
    %c33 = arith.constant 33 : index
    %205 = memref.load %arg3[%c33] : memref<432xf32, #tpu.memory_space<smem>>
    %206 = vector.broadcast %205 : f32 to vector<8x16xf32>
    %207 = arith.mulf %206, %31 : vector<8x16xf32>
    %208 = arith.addf %204, %207 : vector<8x16xf32>
    %c49 = arith.constant 49 : index
    %209 = memref.load %arg3[%c49] : memref<432xf32, #tpu.memory_space<smem>>
    %210 = vector.broadcast %209 : f32 to vector<8x16xf32>
    %211 = arith.mulf %210, %33 : vector<8x16xf32>
    %212 = arith.addf %208, %211 : vector<8x16xf32>
    %c65 = arith.constant 65 : index
    %213 = memref.load %arg3[%c65] : memref<432xf32, #tpu.memory_space<smem>>
    %214 = vector.broadcast %213 : f32 to vector<8x16xf32>
    %215 = arith.mulf %214, %35 : vector<8x16xf32>
    %216 = arith.addf %212, %215 : vector<8x16xf32>
    %c81 = arith.constant 81 : index
    %217 = memref.load %arg3[%c81] : memref<432xf32, #tpu.memory_space<smem>>
    %218 = vector.broadcast %217 : f32 to vector<8x16xf32>
    %219 = arith.mulf %218, %37 : vector<8x16xf32>
    %220 = arith.addf %216, %219 : vector<8x16xf32>
    %c97 = arith.constant 97 : index
    %221 = memref.load %arg3[%c97] : memref<432xf32, #tpu.memory_space<smem>>
    %222 = vector.broadcast %221 : f32 to vector<8x16xf32>
    %223 = arith.mulf %222, %39 : vector<8x16xf32>
    %224 = arith.addf %220, %223 : vector<8x16xf32>
    %c113 = arith.constant 113 : index
    %225 = memref.load %arg3[%c113] : memref<432xf32, #tpu.memory_space<smem>>
    %226 = vector.broadcast %225 : f32 to vector<8x16xf32>
    %227 = arith.mulf %226, %41 : vector<8x16xf32>
    %228 = arith.addf %224, %227 : vector<8x16xf32>
    %c129 = arith.constant 129 : index
    %229 = memref.load %arg3[%c129] : memref<432xf32, #tpu.memory_space<smem>>
    %230 = vector.broadcast %229 : f32 to vector<8x16xf32>
    %231 = arith.mulf %230, %43 : vector<8x16xf32>
    %232 = arith.addf %228, %231 : vector<8x16xf32>
    %c145 = arith.constant 145 : index
    %233 = memref.load %arg3[%c145] : memref<432xf32, #tpu.memory_space<smem>>
    %234 = vector.broadcast %233 : f32 to vector<8x16xf32>
    %235 = arith.mulf %234, %45 : vector<8x16xf32>
    %236 = arith.addf %232, %235 : vector<8x16xf32>
    %c161 = arith.constant 161 : index
    %237 = memref.load %arg3[%c161] : memref<432xf32, #tpu.memory_space<smem>>
    %238 = vector.broadcast %237 : f32 to vector<8x16xf32>
    %239 = arith.mulf %238, %47 : vector<8x16xf32>
    %240 = arith.addf %236, %239 : vector<8x16xf32>
    %c177 = arith.constant 177 : index
    %241 = memref.load %arg3[%c177] : memref<432xf32, #tpu.memory_space<smem>>
    %242 = vector.broadcast %241 : f32 to vector<8x16xf32>
    %243 = arith.mulf %242, %49 : vector<8x16xf32>
    %244 = arith.addf %240, %243 : vector<8x16xf32>
    %c193 = arith.constant 193 : index
    %245 = memref.load %arg3[%c193] : memref<432xf32, #tpu.memory_space<smem>>
    %246 = vector.broadcast %245 : f32 to vector<8x16xf32>
    %247 = arith.mulf %246, %51 : vector<8x16xf32>
    %248 = arith.addf %244, %247 : vector<8x16xf32>
    %c209 = arith.constant 209 : index
    %249 = memref.load %arg3[%c209] : memref<432xf32, #tpu.memory_space<smem>>
    %250 = vector.broadcast %249 : f32 to vector<8x16xf32>
    %251 = arith.mulf %250, %53 : vector<8x16xf32>
    %252 = arith.addf %248, %251 : vector<8x16xf32>
    %c225 = arith.constant 225 : index
    %253 = memref.load %arg3[%c225] : memref<432xf32, #tpu.memory_space<smem>>
    %254 = vector.broadcast %253 : f32 to vector<8x16xf32>
    %255 = arith.mulf %254, %55 : vector<8x16xf32>
    %256 = arith.addf %252, %255 : vector<8x16xf32>
    %c241 = arith.constant 241 : index
    %257 = memref.load %arg3[%c241] : memref<432xf32, #tpu.memory_space<smem>>
    %258 = vector.broadcast %257 : f32 to vector<8x16xf32>
    %259 = arith.mulf %258, %57 : vector<8x16xf32>
    %260 = arith.addf %256, %259 : vector<8x16xf32>
    %c257 = arith.constant 257 : index
    %261 = memref.load %arg3[%c257] : memref<432xf32, #tpu.memory_space<smem>>
    %262 = vector.broadcast %261 : f32 to vector<8x16xf32>
    %263 = arith.mulf %262, %59 : vector<8x16xf32>
    %264 = arith.addf %260, %263 : vector<8x16xf32>
    %c273 = arith.constant 273 : index
    %265 = memref.load %arg3[%c273] : memref<432xf32, #tpu.memory_space<smem>>
    %266 = vector.broadcast %265 : f32 to vector<8x16xf32>
    %267 = arith.mulf %266, %61 : vector<8x16xf32>
    %268 = arith.addf %264, %267 : vector<8x16xf32>
    %c289 = arith.constant 289 : index
    %269 = memref.load %arg3[%c289] : memref<432xf32, #tpu.memory_space<smem>>
    %270 = vector.broadcast %269 : f32 to vector<8x16xf32>
    %271 = arith.mulf %270, %63 : vector<8x16xf32>
    %272 = arith.addf %268, %271 : vector<8x16xf32>
    %c305 = arith.constant 305 : index
    %273 = memref.load %arg3[%c305] : memref<432xf32, #tpu.memory_space<smem>>
    %274 = vector.broadcast %273 : f32 to vector<8x16xf32>
    %275 = arith.mulf %274, %65 : vector<8x16xf32>
    %276 = arith.addf %272, %275 : vector<8x16xf32>
    %c321 = arith.constant 321 : index
    %277 = memref.load %arg3[%c321] : memref<432xf32, #tpu.memory_space<smem>>
    %278 = vector.broadcast %277 : f32 to vector<8x16xf32>
    %279 = arith.mulf %278, %67 : vector<8x16xf32>
    %280 = arith.addf %276, %279 : vector<8x16xf32>
    %c337 = arith.constant 337 : index
    %281 = memref.load %arg3[%c337] : memref<432xf32, #tpu.memory_space<smem>>
    %282 = vector.broadcast %281 : f32 to vector<8x16xf32>
    %283 = arith.mulf %282, %69 : vector<8x16xf32>
    %284 = arith.addf %280, %283 : vector<8x16xf32>
    %c353 = arith.constant 353 : index
    %285 = memref.load %arg3[%c353] : memref<432xf32, #tpu.memory_space<smem>>
    %286 = vector.broadcast %285 : f32 to vector<8x16xf32>
    %287 = arith.mulf %286, %71 : vector<8x16xf32>
    %288 = arith.addf %284, %287 : vector<8x16xf32>
    %c369 = arith.constant 369 : index
    %289 = memref.load %arg3[%c369] : memref<432xf32, #tpu.memory_space<smem>>
    %290 = vector.broadcast %289 : f32 to vector<8x16xf32>
    %291 = arith.mulf %290, %73 : vector<8x16xf32>
    %292 = arith.addf %288, %291 : vector<8x16xf32>
    %c385 = arith.constant 385 : index
    %293 = memref.load %arg3[%c385] : memref<432xf32, #tpu.memory_space<smem>>
    %294 = vector.broadcast %293 : f32 to vector<8x16xf32>
    %295 = arith.mulf %294, %75 : vector<8x16xf32>
    %296 = arith.addf %292, %295 : vector<8x16xf32>
    %c401 = arith.constant 401 : index
    %297 = memref.load %arg3[%c401] : memref<432xf32, #tpu.memory_space<smem>>
    %298 = vector.broadcast %297 : f32 to vector<8x16xf32>
    %299 = arith.mulf %298, %77 : vector<8x16xf32>
    %300 = arith.addf %296, %299 : vector<8x16xf32>
    %c417 = arith.constant 417 : index
    %301 = memref.load %arg3[%c417] : memref<432xf32, #tpu.memory_space<smem>>
    %302 = vector.broadcast %301 : f32 to vector<8x16xf32>
    %303 = arith.mulf %302, %79 : vector<8x16xf32>
    %304 = arith.addf %300, %303 : vector<8x16xf32>
    %cst_112 = arith.constant 0.000000e+00 : f32
    %305 = vector.broadcast %cst_112 : f32 to vector<8x16xf32>
    %306 = arith.maximumf %304, %305 : vector<8x16xf32>
    %c0_113 = arith.constant 0 : index
    %c1_114 = arith.constant 1 : index
    %c0_115 = arith.constant 0 : index
    %c0_116 = arith.constant 0 : index
    %307 = vector.load %arg5[%c0_113, %c1_114, %c0_115, %c0_116] : memref<1x16x8x16xf32, #tpu.memory_space<vmem>>, vector<1x1x8x16xf32>
    %308 = vector.shape_cast %307 : vector<1x1x8x16xf32> to vector<8x16xf32>
    %309 = vector.shape_cast %306 : vector<8x16xf32> to vector<1x1x8x16xf32>
    tpu.vector_store %arg5[%c0_113, %c1_114, %c0_115, %c0_116], %309 {strides = array<i32>} : memref<1x16x8x16xf32, #tpu.memory_space<vmem>>, vector<1x1x8x16xf32>,
    %c2_117 = arith.constant 2 : index
    %310 = memref.load %arg4[%c2_117] : memref<16xf32, #tpu.memory_space<smem>>
    %311 = vector.broadcast %310 : f32 to vector<8x16xf32>
    %c2_118 = arith.constant 2 : index
    %312 = memref.load %arg3[%c2_118] : memref<432xf32, #tpu.memory_space<smem>>
    %313 = vector.broadcast %312 : f32 to vector<8x16xf32>
    %314 = arith.mulf %313, %27 : vector<8x16xf32>
    %315 = arith.addf %311, %314 : vector<8x16xf32>
    %c18 = arith.constant 18 : index
    %316 = memref.load %arg3[%c18] : memref<432xf32, #tpu.memory_space<smem>>
    %317 = vector.broadcast %316 : f32 to vector<8x16xf32>
    %318 = arith.mulf %317, %29 : vector<8x16xf32>
    %319 = arith.addf %315, %318 : vector<8x16xf32>
    %c34 = arith.constant 34 : index
    %320 = memref.load %arg3[%c34] : memref<432xf32, #tpu.memory_space<smem>>
    %321 = vector.broadcast %320 : f32 to vector<8x16xf32>
    %322 = arith.mulf %321, %31 : vector<8x16xf32>
    %323 = arith.addf %319, %322 : vector<8x16xf32>
    %c50 = arith.constant 50 : index
    %324 = memref.load %arg3[%c50] : memref<432xf32, #tpu.memory_space<smem>>
    %325 = vector.broadcast %324 : f32 to vector<8x16xf32>
    %326 = arith.mulf %325, %33 : vector<8x16xf32>
    %327 = arith.addf %323, %326 : vector<8x16xf32>
    %c66 = arith.constant 66 : index
    %328 = memref.load %arg3[%c66] : memref<432xf32, #tpu.memory_space<smem>>
    %329 = vector.broadcast %328 : f32 to vector<8x16xf32>
    %330 = arith.mulf %329, %35 : vector<8x16xf32>
    %331 = arith.addf %327, %330 : vector<8x16xf32>
    %c82 = arith.constant 82 : index
    %332 = memref.load %arg3[%c82] : memref<432xf32, #tpu.memory_space<smem>>
    %333 = vector.broadcast %332 : f32 to vector<8x16xf32>
    %334 = arith.mulf %333, %37 : vector<8x16xf32>
    %335 = arith.addf %331, %334 : vector<8x16xf32>
    %c98 = arith.constant 98 : index
    %336 = memref.load %arg3[%c98] : memref<432xf32, #tpu.memory_space<smem>>
    %337 = vector.broadcast %336 : f32 to vector<8x16xf32>
    %338 = arith.mulf %337, %39 : vector<8x16xf32>
    %339 = arith.addf %335, %338 : vector<8x16xf32>
    %c114 = arith.constant 114 : index
    %340 = memref.load %arg3[%c114] : memref<432xf32, #tpu.memory_space<smem>>
    %341 = vector.broadcast %340 : f32 to vector<8x16xf32>
    %342 = arith.mulf %341, %41 : vector<8x16xf32>
    %343 = arith.addf %339, %342 : vector<8x16xf32>
    %c130 = arith.constant 130 : index
    %344 = memref.load %arg3[%c130] : memref<432xf32, #tpu.memory_space<smem>>
    %345 = vector.broadcast %344 : f32 to vector<8x16xf32>
    %346 = arith.mulf %345, %43 : vector<8x16xf32>
    %347 = arith.addf %343, %346 : vector<8x16xf32>
    %c146 = arith.constant 146 : index
    %348 = memref.load %arg3[%c146] : memref<432xf32, #tpu.memory_space<smem>>
    %349 = vector.broadcast %348 : f32 to vector<8x16xf32>
    %350 = arith.mulf %349, %45 : vector<8x16xf32>
    %351 = arith.addf %347, %350 : vector<8x16xf32>
    %c162 = arith.constant 162 : index
    %352 = memref.load %arg3[%c162] : memref<432xf32, #tpu.memory_space<smem>>
    %353 = vector.broadcast %352 : f32 to vector<8x16xf32>
    %354 = arith.mulf %353, %47 : vector<8x16xf32>
    %355 = arith.addf %351, %354 : vector<8x16xf32>
    %c178 = arith.constant 178 : index
    %356 = memref.load %arg3[%c178] : memref<432xf32, #tpu.memory_space<smem>>
    %357 = vector.broadcast %356 : f32 to vector<8x16xf32>
    %358 = arith.mulf %357, %49 : vector<8x16xf32>
    %359 = arith.addf %355, %358 : vector<8x16xf32>
    %c194 = arith.constant 194 : index
    %360 = memref.load %arg3[%c194] : memref<432xf32, #tpu.memory_space<smem>>
    %361 = vector.broadcast %360 : f32 to vector<8x16xf32>
    %362 = arith.mulf %361, %51 : vector<8x16xf32>
    %363 = arith.addf %359, %362 : vector<8x16xf32>
    %c210 = arith.constant 210 : index
    %364 = memref.load %arg3[%c210] : memref<432xf32, #tpu.memory_space<smem>>
    %365 = vector.broadcast %364 : f32 to vector<8x16xf32>
    %366 = arith.mulf %365, %53 : vector<8x16xf32>
    %367 = arith.addf %363, %366 : vector<8x16xf32>
    %c226 = arith.constant 226 : index
    %368 = memref.load %arg3[%c226] : memref<432xf32, #tpu.memory_space<smem>>
    %369 = vector.broadcast %368 : f32 to vector<8x16xf32>
    %370 = arith.mulf %369, %55 : vector<8x16xf32>
    %371 = arith.addf %367, %370 : vector<8x16xf32>
    %c242 = arith.constant 242 : index
    %372 = memref.load %arg3[%c242] : memref<432xf32, #tpu.memory_space<smem>>
    %373 = vector.broadcast %372 : f32 to vector<8x16xf32>
    %374 = arith.mulf %373, %57 : vector<8x16xf32>
    %375 = arith.addf %371, %374 : vector<8x16xf32>
    %c258 = arith.constant 258 : index
    %376 = memref.load %arg3[%c258] : memref<432xf32, #tpu.memory_space<smem>>
    %377 = vector.broadcast %376 : f32 to vector<8x16xf32>
    %378 = arith.mulf %377, %59 : vector<8x16xf32>
    %379 = arith.addf %375, %378 : vector<8x16xf32>
    %c274 = arith.constant 274 : index
    %380 = memref.load %arg3[%c274] : memref<432xf32, #tpu.memory_space<smem>>
    %381 = vector.broadcast %380 : f32 to vector<8x16xf32>
    %382 = arith.mulf %381, %61 : vector<8x16xf32>
    %383 = arith.addf %379, %382 : vector<8x16xf32>
    %c290 = arith.constant 290 : index
    %384 = memref.load %arg3[%c290] : memref<432xf32, #tpu.memory_space<smem>>
    %385 = vector.broadcast %384 : f32 to vector<8x16xf32>
    %386 = arith.mulf %385, %63 : vector<8x16xf32>
    %387 = arith.addf %383, %386 : vector<8x16xf32>
    %c306 = arith.constant 306 : index
    %388 = memref.load %arg3[%c306] : memref<432xf32, #tpu.memory_space<smem>>
    %389 = vector.broadcast %388 : f32 to vector<8x16xf32>
    %390 = arith.mulf %389, %65 : vector<8x16xf32>
    %391 = arith.addf %387, %390 : vector<8x16xf32>
    %c322 = arith.constant 322 : index
    %392 = memref.load %arg3[%c322] : memref<432xf32, #tpu.memory_space<smem>>
    %393 = vector.broadcast %392 : f32 to vector<8x16xf32>
    %394 = arith.mulf %393, %67 : vector<8x16xf32>
    %395 = arith.addf %391, %394 : vector<8x16xf32>
    %c338 = arith.constant 338 : index
    %396 = memref.load %arg3[%c338] : memref<432xf32, #tpu.memory_space<smem>>
    %397 = vector.broadcast %396 : f32 to vector<8x16xf32>
    %398 = arith.mulf %397, %69 : vector<8x16xf32>
    %399 = arith.addf %395, %398 : vector<8x16xf32>
    %c354 = arith.constant 354 : index
    %400 = memref.load %arg3[%c354] : memref<432xf32, #tpu.memory_space<smem>>
    %401 = vector.broadcast %400 : f32 to vector<8x16xf32>
    %402 = arith.mulf %401, %71 : vector<8x16xf32>
    %403 = arith.addf %399, %402 : vector<8x16xf32>
    %c370 = arith.constant 370 : index
    %404 = memref.load %arg3[%c370] : memref<432xf32, #tpu.memory_space<smem>>
    %405 = vector.broadcast %404 : f32 to vector<8x16xf32>
    %406 = arith.mulf %405, %73 : vector<8x16xf32>
    %407 = arith.addf %403, %406 : vector<8x16xf32>
    %c386 = arith.constant 386 : index
    %408 = memref.load %arg3[%c386] : memref<432xf32, #tpu.memory_space<smem>>
    %409 = vector.broadcast %408 : f32 to vector<8x16xf32>
    %410 = arith.mulf %409, %75 : vector<8x16xf32>
    %411 = arith.addf %407, %410 : vector<8x16xf32>
    %c402 = arith.constant 402 : index
    %412 = memref.load %arg3[%c402] : memref<432xf32, #tpu.memory_space<smem>>
    %413 = vector.broadcast %412 : f32 to vector<8x16xf32>
    %414 = arith.mulf %413, %77 : vector<8x16xf32>
    %415 = arith.addf %411, %414 : vector<8x16xf32>
    %c418 = arith.constant 418 : index
    %416 = memref.load %arg3[%c418] : memref<432xf32, #tpu.memory_space<smem>>
    %417 = vector.broadcast %416 : f32 to vector<8x16xf32>
    %418 = arith.mulf %417, %79 : vector<8x16xf32>
    %419 = arith.addf %415, %418 : vector<8x16xf32>
    %cst_119 = arith.constant 0.000000e+00 : f32
    %420 = vector.broadcast %cst_119 : f32 to vector<8x16xf32>
    %421 = arith.maximumf %419, %420 : vector<8x16xf32>
    %c0_120 = arith.constant 0 : index
    %c2_121 = arith.constant 2 : index
    %c0_122 = arith.constant 0 : index
    %c0_123 = arith.constant 0 : index
    %422 = vector.load %arg5[%c0_120, %c2_121, %c0_122, %c0_123] : memref<1x16x8x16xf32, #tpu.memory_space<vmem>>, vector<1x1x8x16xf32>
    %423 = vector.shape_cast %422 : vector<1x1x8x16xf32> to vector<8x16xf32>
    %424 = vector.shape_cast %421 : vector<8x16xf32> to vector<1x1x8x16xf32>
    tpu.vector_store %arg5[%c0_120, %c2_121, %c0_122, %c0_123], %424 {strides = array<i32>} : memref<1x16x8x16xf32, #tpu.memory_space<vmem>>, vector<1x1x8x16xf32>,
    %c3 = arith.constant 3 : index
    %425 = memref.load %arg4[%c3] : memref<16xf32, #tpu.memory_space<smem>>
    %426 = vector.broadcast %425 : f32 to vector<8x16xf32>
    %c3_124 = arith.constant 3 : index
    %427 = memref.load %arg3[%c3_124] : memref<432xf32, #tpu.memory_space<smem>>
    %428 = vector.broadcast %427 : f32 to vector<8x16xf32>
    %429 = arith.mulf %428, %27 : vector<8x16xf32>
    %430 = arith.addf %426, %429 : vector<8x16xf32>
    %c19 = arith.constant 19 : index
    %431 = memref.load %arg3[%c19] : memref<432xf32, #tpu.memory_space<smem>>
    %432 = vector.broadcast %431 : f32 to vector<8x16xf32>
    %433 = arith.mulf %432, %29 : vector<8x16xf32>
    %434 = arith.addf %430, %433 : vector<8x16xf32>
    %c35 = arith.constant 35 : index
    %435 = memref.load %arg3[%c35] : memref<432xf32, #tpu.memory_space<smem>>
    %436 = vector.broadcast %435 : f32 to vector<8x16xf32>
    %437 = arith.mulf %436, %31 : vector<8x16xf32>
    %438 = arith.addf %434, %437 : vector<8x16xf32>
    %c51 = arith.constant 51 : index
    %439 = memref.load %arg3[%c51] : memref<432xf32, #tpu.memory_space<smem>>
    %440 = vector.broadcast %439 : f32 to vector<8x16xf32>
    %441 = arith.mulf %440, %33 : vector<8x16xf32>
    %442 = arith.addf %438, %441 : vector<8x16xf32>
    %c67 = arith.constant 67 : index
    %443 = memref.load %arg3[%c67] : memref<432xf32, #tpu.memory_space<smem>>
    %444 = vector.broadcast %443 : f32 to vector<8x16xf32>
    %445 = arith.mulf %444, %35 : vector<8x16xf32>
    %446 = arith.addf %442, %445 : vector<8x16xf32>
    %c83 = arith.constant 83 : index
    %447 = memref.load %arg3[%c83] : memref<432xf32, #tpu.memory_space<smem>>
    %448 = vector.broadcast %447 : f32 to vector<8x16xf32>
    %449 = arith.mulf %448, %37 : vector<8x16xf32>
    %450 = arith.addf %446, %449 : vector<8x16xf32>
    %c99 = arith.constant 99 : index
    %451 = memref.load %arg3[%c99] : memref<432xf32, #tpu.memory_space<smem>>
    %452 = vector.broadcast %451 : f32 to vector<8x16xf32>
    %453 = arith.mulf %452, %39 : vector<8x16xf32>
    %454 = arith.addf %450, %453 : vector<8x16xf32>
    %c115 = arith.constant 115 : index
    %455 = memref.load %arg3[%c115] : memref<432xf32, #tpu.memory_space<smem>>
    %456 = vector.broadcast %455 : f32 to vector<8x16xf32>
    %457 = arith.mulf %456, %41 : vector<8x16xf32>
    %458 = arith.addf %454, %457 : vector<8x16xf32>
    %c131 = arith.constant 131 : index
    %459 = memref.load %arg3[%c131] : memref<432xf32, #tpu.memory_space<smem>>
    %460 = vector.broadcast %459 : f32 to vector<8x16xf32>
    %461 = arith.mulf %460, %43 : vector<8x16xf32>
    %462 = arith.addf %458, %461 : vector<8x16xf32>
    %c147 = arith.constant 147 : index
    %463 = memref.load %arg3[%c147] : memref<432xf32, #tpu.memory_space<smem>>
    %464 = vector.broadcast %463 : f32 to vector<8x16xf32>
    %465 = arith.mulf %464, %45 : vector<8x16xf32>
    %466 = arith.addf %462, %465 : vector<8x16xf32>
    %c163 = arith.constant 163 : index
    %467 = memref.load %arg3[%c163] : memref<432xf32, #tpu.memory_space<smem>>
    %468 = vector.broadcast %467 : f32 to vector<8x16xf32>
    %469 = arith.mulf %468, %47 : vector<8x16xf32>
    %470 = arith.addf %466, %469 : vector<8x16xf32>
    %c179 = arith.constant 179 : index
    %471 = memref.load %arg3[%c179] : memref<432xf32, #tpu.memory_space<smem>>
    %472 = vector.broadcast %471 : f32 to vector<8x16xf32>
    %473 = arith.mulf %472, %49 : vector<8x16xf32>
    %474 = arith.addf %470, %473 : vector<8x16xf32>
    %c195 = arith.constant 195 : index
    %475 = memref.load %arg3[%c195] : memref<432xf32, #tpu.memory_space<smem>>
    %476 = vector.broadcast %475 : f32 to vector<8x16xf32>
    %477 = arith.mulf %476, %51 : vector<8x16xf32>
    %478 = arith.addf %474, %477 : vector<8x16xf32>
    %c211 = arith.constant 211 : index
    %479 = memref.load %arg3[%c211] : memref<432xf32, #tpu.memory_space<smem>>
    %480 = vector.broadcast %479 : f32 to vector<8x16xf32>
    %481 = arith.mulf %480, %53 : vector<8x16xf32>
    %482 = arith.addf %478, %481 : vector<8x16xf32>
    %c227 = arith.constant 227 : index
    %483 = memref.load %arg3[%c227] : memref<432xf32, #tpu.memory_space<smem>>
    %484 = vector.broadcast %483 : f32 to vector<8x16xf32>
    %485 = arith.mulf %484, %55 : vector<8x16xf32>
    %486 = arith.addf %482, %485 : vector<8x16xf32>
    %c243 = arith.constant 243 : index
    %487 = memref.load %arg3[%c243] : memref<432xf32, #tpu.memory_space<smem>>
    %488 = vector.broadcast %487 : f32 to vector<8x16xf32>
    %489 = arith.mulf %488, %57 : vector<8x16xf32>
    %490 = arith.addf %486, %489 : vector<8x16xf32>
    %c259 = arith.constant 259 : index
    %491 = memref.load %arg3[%c259] : memref<432xf32, #tpu.memory_space<smem>>
    %492 = vector.broadcast %491 : f32 to vector<8x16xf32>
    %493 = arith.mulf %492, %59 : vector<8x16xf32>
    %494 = arith.addf %490, %493 : vector<8x16xf32>
    %c275 = arith.constant 275 : index
    %495 = memref.load %arg3[%c275] : memref<432xf32, #tpu.memory_space<smem>>
    %496 = vector.broadcast %495 : f32 to vector<8x16xf32>
    %497 = arith.mulf %496, %61 : vector<8x16xf32>
    %498 = arith.addf %494, %497 : vector<8x16xf32>
    %c291 = arith.constant 291 : index
    %499 = memref.load %arg3[%c291] : memref<432xf32, #tpu.memory_space<smem>>
    %500 = vector.broadcast %499 : f32 to vector<8x16xf32>
    %501 = arith.mulf %500, %63 : vector<8x16xf32>
    %502 = arith.addf %498, %501 : vector<8x16xf32>
    %c307 = arith.constant 307 : index
    %503 = memref.load %arg3[%c307] : memref<432xf32, #tpu.memory_space<smem>>
    %504 = vector.broadcast %503 : f32 to vector<8x16xf32>
    %505 = arith.mulf %504, %65 : vector<8x16xf32>
    %506 = arith.addf %502, %505 : vector<8x16xf32>
    %c323 = arith.constant 323 : index
    %507 = memref.load %arg3[%c323] : memref<432xf32, #tpu.memory_space<smem>>
    %508 = vector.broadcast %507 : f32 to vector<8x16xf32>
    %509 = arith.mulf %508, %67 : vector<8x16xf32>
    %510 = arith.addf %506, %509 : vector<8x16xf32>
    %c339 = arith.constant 339 : index
    %511 = memref.load %arg3[%c339] : memref<432xf32, #tpu.memory_space<smem>>
    %512 = vector.broadcast %511 : f32 to vector<8x16xf32>
    %513 = arith.mulf %512, %69 : vector<8x16xf32>
    %514 = arith.addf %510, %513 : vector<8x16xf32>
    %c355 = arith.constant 355 : index
    %515 = memref.load %arg3[%c355] : memref<432xf32, #tpu.memory_space<smem>>
    %516 = vector.broadcast %515 : f32 to vector<8x16xf32>
    %517 = arith.mulf %516, %71 : vector<8x16xf32>
    %518 = arith.addf %514, %517 : vector<8x16xf32>
    %c371 = arith.constant 371 : index
    %519 = memref.load %arg3[%c371] : memref<432xf32, #tpu.memory_space<smem>>
    %520 = vector.broadcast %519 : f32 to vector<8x16xf32>
    %521 = arith.mulf %520, %73 : vector<8x16xf32>
    %522 = arith.addf %518, %521 : vector<8x16xf32>
    %c387 = arith.constant 387 : index
    %523 = memref.load %arg3[%c387] : memref<432xf32, #tpu.memory_space<smem>>
    %524 = vector.broadcast %523 : f32 to vector<8x16xf32>
    %525 = arith.mulf %524, %75 : vector<8x16xf32>
    %526 = arith.addf %522, %525 : vector<8x16xf32>
    %c403 = arith.constant 403 : index
    %527 = memref.load %arg3[%c403] : memref<432xf32, #tpu.memory_space<smem>>
    %528 = vector.broadcast %527 : f32 to vector<8x16xf32>
    %529 = arith.mulf %528, %77 : vector<8x16xf32>
    %530 = arith.addf %526, %529 : vector<8x16xf32>
    %c419 = arith.constant 419 : index
    %531 = memref.load %arg3[%c419] : memref<432xf32, #tpu.memory_space<smem>>
    %532 = vector.broadcast %531 : f32 to vector<8x16xf32>
    %533 = arith.mulf %532, %79 : vector<8x16xf32>
    %534 = arith.addf %530, %533 : vector<8x16xf32>
    %cst_125 = arith.constant 0.000000e+00 : f32
    %535 = vector.broadcast %cst_125 : f32 to vector<8x16xf32>
    %536 = arith.maximumf %534, %535 : vector<8x16xf32>
    %c0_126 = arith.constant 0 : index
    %c3_127 = arith.constant 3 : index
    %c0_128 = arith.constant 0 : index
    %c0_129 = arith.constant 0 : index
    %537 = vector.load %arg5[%c0_126, %c3_127, %c0_128, %c0_129] : memref<1x16x8x16xf32, #tpu.memory_space<vmem>>, vector<1x1x8x16xf32>
    %538 = vector.shape_cast %537 : vector<1x1x8x16xf32> to vector<8x16xf32>
    %539 = vector.shape_cast %536 : vector<8x16xf32> to vector<1x1x8x16xf32>
    tpu.vector_store %arg5[%c0_126, %c3_127, %c0_128, %c0_129], %539 {strides = array<i32>} : memref<1x16x8x16xf32, #tpu.memory_space<vmem>>, vector<1x1x8x16xf32>,
    %c4 = arith.constant 4 : index
    %540 = memref.load %arg4[%c4] : memref<16xf32, #tpu.memory_space<smem>>
    %541 = vector.broadcast %540 : f32 to vector<8x16xf32>
    %c4_130 = arith.constant 4 : index
    %542 = memref.load %arg3[%c4_130] : memref<432xf32, #tpu.memory_space<smem>>
    %543 = vector.broadcast %542 : f32 to vector<8x16xf32>
    %544 = arith.mulf %543, %27 : vector<8x16xf32>
    %545 = arith.addf %541, %544 : vector<8x16xf32>
    %c20 = arith.constant 20 : index
    %546 = memref.load %arg3[%c20] : memref<432xf32, #tpu.memory_space<smem>>
    %547 = vector.broadcast %546 : f32 to vector<8x16xf32>
    %548 = arith.mulf %547, %29 : vector<8x16xf32>
    %549 = arith.addf %545, %548 : vector<8x16xf32>
    %c36 = arith.constant 36 : index
    %550 = memref.load %arg3[%c36] : memref<432xf32, #tpu.memory_space<smem>>
    %551 = vector.broadcast %550 : f32 to vector<8x16xf32>
    %552 = arith.mulf %551, %31 : vector<8x16xf32>
    %553 = arith.addf %549, %552 : vector<8x16xf32>
    %c52 = arith.constant 52 : index
    %554 = memref.load %arg3[%c52] : memref<432xf32, #tpu.memory_space<smem>>
    %555 = vector.broadcast %554 : f32 to vector<8x16xf32>
    %556 = arith.mulf %555, %33 : vector<8x16xf32>
    %557 = arith.addf %553, %556 : vector<8x16xf32>
    %c68 = arith.constant 68 : index
    %558 = memref.load %arg3[%c68] : memref<432xf32, #tpu.memory_space<smem>>
    %559 = vector.broadcast %558 : f32 to vector<8x16xf32>
    %560 = arith.mulf %559, %35 : vector<8x16xf32>
    %561 = arith.addf %557, %560 : vector<8x16xf32>
    %c84 = arith.constant 84 : index
    %562 = memref.load %arg3[%c84] : memref<432xf32, #tpu.memory_space<smem>>
    %563 = vector.broadcast %562 : f32 to vector<8x16xf32>
    %564 = arith.mulf %563, %37 : vector<8x16xf32>
    %565 = arith.addf %561, %564 : vector<8x16xf32>
    %c100 = arith.constant 100 : index
    %566 = memref.load %arg3[%c100] : memref<432xf32, #tpu.memory_space<smem>>
    %567 = vector.broadcast %566 : f32 to vector<8x16xf32>
    %568 = arith.mulf %567, %39 : vector<8x16xf32>
    %569 = arith.addf %565, %568 : vector<8x16xf32>
    %c116 = arith.constant 116 : index
    %570 = memref.load %arg3[%c116] : memref<432xf32, #tpu.memory_space<smem>>
    %571 = vector.broadcast %570 : f32 to vector<8x16xf32>
    %572 = arith.mulf %571, %41 : vector<8x16xf32>
    %573 = arith.addf %569, %572 : vector<8x16xf32>
    %c132 = arith.constant 132 : index
    %574 = memref.load %arg3[%c132] : memref<432xf32, #tpu.memory_space<smem>>
    %575 = vector.broadcast %574 : f32 to vector<8x16xf32>
    %576 = arith.mulf %575, %43 : vector<8x16xf32>
    %577 = arith.addf %573, %576 : vector<8x16xf32>
    %c148 = arith.constant 148 : index
    %578 = memref.load %arg3[%c148] : memref<432xf32, #tpu.memory_space<smem>>
    %579 = vector.broadcast %578 : f32 to vector<8x16xf32>
    %580 = arith.mulf %579, %45 : vector<8x16xf32>
    %581 = arith.addf %577, %580 : vector<8x16xf32>
    %c164 = arith.constant 164 : index
    %582 = memref.load %arg3[%c164] : memref<432xf32, #tpu.memory_space<smem>>
    %583 = vector.broadcast %582 : f32 to vector<8x16xf32>
    %584 = arith.mulf %583, %47 : vector<8x16xf32>
    %585 = arith.addf %581, %584 : vector<8x16xf32>
    %c180 = arith.constant 180 : index
    %586 = memref.load %arg3[%c180] : memref<432xf32, #tpu.memory_space<smem>>
    %587 = vector.broadcast %586 : f32 to vector<8x16xf32>
    %588 = arith.mulf %587, %49 : vector<8x16xf32>
    %589 = arith.addf %585, %588 : vector<8x16xf32>
    %c196 = arith.constant 196 : index
    %590 = memref.load %arg3[%c196] : memref<432xf32, #tpu.memory_space<smem>>
    %591 = vector.broadcast %590 : f32 to vector<8x16xf32>
    %592 = arith.mulf %591, %51 : vector<8x16xf32>
    %593 = arith.addf %589, %592 : vector<8x16xf32>
    %c212 = arith.constant 212 : index
    %594 = memref.load %arg3[%c212] : memref<432xf32, #tpu.memory_space<smem>>
    %595 = vector.broadcast %594 : f32 to vector<8x16xf32>
    %596 = arith.mulf %595, %53 : vector<8x16xf32>
    %597 = arith.addf %593, %596 : vector<8x16xf32>
    %c228 = arith.constant 228 : index
    %598 = memref.load %arg3[%c228] : memref<432xf32, #tpu.memory_space<smem>>
    %599 = vector.broadcast %598 : f32 to vector<8x16xf32>
    %600 = arith.mulf %599, %55 : vector<8x16xf32>
    %601 = arith.addf %597, %600 : vector<8x16xf32>
    %c244 = arith.constant 244 : index
    %602 = memref.load %arg3[%c244] : memref<432xf32, #tpu.memory_space<smem>>
    %603 = vector.broadcast %602 : f32 to vector<8x16xf32>
    %604 = arith.mulf %603, %57 : vector<8x16xf32>
    %605 = arith.addf %601, %604 : vector<8x16xf32>
    %c260 = arith.constant 260 : index
    %606 = memref.load %arg3[%c260] : memref<432xf32, #tpu.memory_space<smem>>
    %607 = vector.broadcast %606 : f32 to vector<8x16xf32>
    %608 = arith.mulf %607, %59 : vector<8x16xf32>
    %609 = arith.addf %605, %608 : vector<8x16xf32>
    %c276 = arith.constant 276 : index
    %610 = memref.load %arg3[%c276] : memref<432xf32, #tpu.memory_space<smem>>
    %611 = vector.broadcast %610 : f32 to vector<8x16xf32>
    %612 = arith.mulf %611, %61 : vector<8x16xf32>
    %613 = arith.addf %609, %612 : vector<8x16xf32>
    %c292 = arith.constant 292 : index
    %614 = memref.load %arg3[%c292] : memref<432xf32, #tpu.memory_space<smem>>
    %615 = vector.broadcast %614 : f32 to vector<8x16xf32>
    %616 = arith.mulf %615, %63 : vector<8x16xf32>
    %617 = arith.addf %613, %616 : vector<8x16xf32>
    %c308 = arith.constant 308 : index
    %618 = memref.load %arg3[%c308] : memref<432xf32, #tpu.memory_space<smem>>
    %619 = vector.broadcast %618 : f32 to vector<8x16xf32>
    %620 = arith.mulf %619, %65 : vector<8x16xf32>
    %621 = arith.addf %617, %620 : vector<8x16xf32>
    %c324 = arith.constant 324 : index
    %622 = memref.load %arg3[%c324] : memref<432xf32, #tpu.memory_space<smem>>
    %623 = vector.broadcast %622 : f32 to vector<8x16xf32>
    %624 = arith.mulf %623, %67 : vector<8x16xf32>
    %625 = arith.addf %621, %624 : vector<8x16xf32>
    %c340 = arith.constant 340 : index
    %626 = memref.load %arg3[%c340] : memref<432xf32, #tpu.memory_space<smem>>
    %627 = vector.broadcast %626 : f32 to vector<8x16xf32>
    %628 = arith.mulf %627, %69 : vector<8x16xf32>
    %629 = arith.addf %625, %628 : vector<8x16xf32>
    %c356 = arith.constant 356 : index
    %630 = memref.load %arg3[%c356] : memref<432xf32, #tpu.memory_space<smem>>
    %631 = vector.broadcast %630 : f32 to vector<8x16xf32>
    %632 = arith.mulf %631, %71 : vector<8x16xf32>
    %633 = arith.addf %629, %632 : vector<8x16xf32>
    %c372 = arith.constant 372 : index
    %634 = memref.load %arg3[%c372] : memref<432xf32, #tpu.memory_space<smem>>
    %635 = vector.broadcast %634 : f32 to vector<8x16xf32>
    %636 = arith.mulf %635, %73 : vector<8x16xf32>
    %637 = arith.addf %633, %636 : vector<8x16xf32>
    %c388 = arith.constant 388 : index
    %638 = memref.load %arg3[%c388] : memref<432xf32, #tpu.memory_space<smem>>
    %639 = vector.broadcast %638 : f32 to vector<8x16xf32>
    %640 = arith.mulf %639, %75 : vector<8x16xf32>
    %641 = arith.addf %637, %640 : vector<8x16xf32>
    %c404 = arith.constant 404 : index
    %642 = memref.load %arg3[%c404] : memref<432xf32, #tpu.memory_space<smem>>
    %643 = vector.broadcast %642 : f32 to vector<8x16xf32>
    %644 = arith.mulf %643, %77 : vector<8x16xf32>
    %645 = arith.addf %641, %644 : vector<8x16xf32>
    %c420 = arith.constant 420 : index
    %646 = memref.load %arg3[%c420] : memref<432xf32, #tpu.memory_space<smem>>
    %647 = vector.broadcast %646 : f32 to vector<8x16xf32>
    %648 = arith.mulf %647, %79 : vector<8x16xf32>
    %649 = arith.addf %645, %648 : vector<8x16xf32>
    %cst_131 = arith.constant 0.000000e+00 : f32
    %650 = vector.broadcast %cst_131 : f32 to vector<8x16xf32>
    %651 = arith.maximumf %649, %650 : vector<8x16xf32>
    %c0_132 = arith.constant 0 : index
    %c4_133 = arith.constant 4 : index
    %c0_134 = arith.constant 0 : index
    %c0_135 = arith.constant 0 : index
    %652 = vector.load %arg5[%c0_132, %c4_133, %c0_134, %c0_135] : memref<1x16x8x16xf32, #tpu.memory_space<vmem>>, vector<1x1x8x16xf32>
    %653 = vector.shape_cast %652 : vector<1x1x8x16xf32> to vector<8x16xf32>
    %654 = vector.shape_cast %651 : vector<8x16xf32> to vector<1x1x8x16xf32>
    tpu.vector_store %arg5[%c0_132, %c4_133, %c0_134, %c0_135], %654 {strides = array<i32>} : memref<1x16x8x16xf32, #tpu.memory_space<vmem>>, vector<1x1x8x16xf32>,
    %c5 = arith.constant 5 : index
    %655 = memref.load %arg4[%c5] : memref<16xf32, #tpu.memory_space<smem>>
    %656 = vector.broadcast %655 : f32 to vector<8x16xf32>
    %c5_136 = arith.constant 5 : index
    %657 = memref.load %arg3[%c5_136] : memref<432xf32, #tpu.memory_space<smem>>
    %658 = vector.broadcast %657 : f32 to vector<8x16xf32>
    %659 = arith.mulf %658, %27 : vector<8x16xf32>
    %660 = arith.addf %656, %659 : vector<8x16xf32>
    %c21 = arith.constant 21 : index
    %661 = memref.load %arg3[%c21] : memref<432xf32, #tpu.memory_space<smem>>
    %662 = vector.broadcast %661 : f32 to vector<8x16xf32>
    %663 = arith.mulf %662, %29 : vector<8x16xf32>
    %664 = arith.addf %660, %663 : vector<8x16xf32>
    %c37 = arith.constant 37 : index
    %665 = memref.load %arg3[%c37] : memref<432xf32, #tpu.memory_space<smem>>
    %666 = vector.broadcast %665 : f32 to vector<8x16xf32>
    %667 = arith.mulf %666, %31 : vector<8x16xf32>
    %668 = arith.addf %664, %667 : vector<8x16xf32>
    %c53 = arith.constant 53 : index
    %669 = memref.load %arg3[%c53] : memref<432xf32, #tpu.memory_space<smem>>
    %670 = vector.broadcast %669 : f32 to vector<8x16xf32>
    %671 = arith.mulf %670, %33 : vector<8x16xf32>
    %672 = arith.addf %668, %671 : vector<8x16xf32>
    %c69 = arith.constant 69 : index
    %673 = memref.load %arg3[%c69] : memref<432xf32, #tpu.memory_space<smem>>
    %674 = vector.broadcast %673 : f32 to vector<8x16xf32>
    %675 = arith.mulf %674, %35 : vector<8x16xf32>
    %676 = arith.addf %672, %675 : vector<8x16xf32>
    %c85 = arith.constant 85 : index
    %677 = memref.load %arg3[%c85] : memref<432xf32, #tpu.memory_space<smem>>
    %678 = vector.broadcast %677 : f32 to vector<8x16xf32>
    %679 = arith.mulf %678, %37 : vector<8x16xf32>
    %680 = arith.addf %676, %679 : vector<8x16xf32>
    %c101 = arith.constant 101 : index
    %681 = memref.load %arg3[%c101] : memref<432xf32, #tpu.memory_space<smem>>
    %682 = vector.broadcast %681 : f32 to vector<8x16xf32>
    %683 = arith.mulf %682, %39 : vector<8x16xf32>
    %684 = arith.addf %680, %683 : vector<8x16xf32>
    %c117 = arith.constant 117 : index
    %685 = memref.load %arg3[%c117] : memref<432xf32, #tpu.memory_space<smem>>
    %686 = vector.broadcast %685 : f32 to vector<8x16xf32>
    %687 = arith.mulf %686, %41 : vector<8x16xf32>
    %688 = arith.addf %684, %687 : vector<8x16xf32>
    %c133 = arith.constant 133 : index
    %689 = memref.load %arg3[%c133] : memref<432xf32, #tpu.memory_space<smem>>
    %690 = vector.broadcast %689 : f32 to vector<8x16xf32>
    %691 = arith.mulf %690, %43 : vector<8x16xf32>
    %692 = arith.addf %688, %691 : vector<8x16xf32>
    %c149 = arith.constant 149 : index
    %693 = memref.load %arg3[%c149] : memref<432xf32, #tpu.memory_space<smem>>
    %694 = vector.broadcast %693 : f32 to vector<8x16xf32>
    %695 = arith.mulf %694, %45 : vector<8x16xf32>
    %696 = arith.addf %692, %695 : vector<8x16xf32>
    %c165 = arith.constant 165 : index
    %697 = memref.load %arg3[%c165] : memref<432xf32, #tpu.memory_space<smem>>
    %698 = vector.broadcast %697 : f32 to vector<8x16xf32>
    %699 = arith.mulf %698, %47 : vector<8x16xf32>
    %700 = arith.addf %696, %699 : vector<8x16xf32>
    %c181 = arith.constant 181 : index
    %701 = memref.load %arg3[%c181] : memref<432xf32, #tpu.memory_space<smem>>
    %702 = vector.broadcast %701 : f32 to vector<8x16xf32>
    %703 = arith.mulf %702, %49 : vector<8x16xf32>
    %704 = arith.addf %700, %703 : vector<8x16xf32>
    %c197 = arith.constant 197 : index
    %705 = memref.load %arg3[%c197] : memref<432xf32, #tpu.memory_space<smem>>
    %706 = vector.broadcast %705 : f32 to vector<8x16xf32>
    %707 = arith.mulf %706, %51 : vector<8x16xf32>
    %708 = arith.addf %704, %707 : vector<8x16xf32>
    %c213 = arith.constant 213 : index
    %709 = memref.load %arg3[%c213] : memref<432xf32, #tpu.memory_space<smem>>
    %710 = vector.broadcast %709 : f32 to vector<8x16xf32>
    %711 = arith.mulf %710, %53 : vector<8x16xf32>
    %712 = arith.addf %708, %711 : vector<8x16xf32>
    %c229 = arith.constant 229 : index
    %713 = memref.load %arg3[%c229] : memref<432xf32, #tpu.memory_space<smem>>
    %714 = vector.broadcast %713 : f32 to vector<8x16xf32>
    %715 = arith.mulf %714, %55 : vector<8x16xf32>
    %716 = arith.addf %712, %715 : vector<8x16xf32>
    %c245 = arith.constant 245 : index
    %717 = memref.load %arg3[%c245] : memref<432xf32, #tpu.memory_space<smem>>
    %718 = vector.broadcast %717 : f32 to vector<8x16xf32>
    %719 = arith.mulf %718, %57 : vector<8x16xf32>
    %720 = arith.addf %716, %719 : vector<8x16xf32>
    %c261 = arith.constant 261 : index
    %721 = memref.load %arg3[%c261] : memref<432xf32, #tpu.memory_space<smem>>
    %722 = vector.broadcast %721 : f32 to vector<8x16xf32>
    %723 = arith.mulf %722, %59 : vector<8x16xf32>
    %724 = arith.addf %720, %723 : vector<8x16xf32>
    %c277 = arith.constant 277 : index
    %725 = memref.load %arg3[%c277] : memref<432xf32, #tpu.memory_space<smem>>
    %726 = vector.broadcast %725 : f32 to vector<8x16xf32>
    %727 = arith.mulf %726, %61 : vector<8x16xf32>
    %728 = arith.addf %724, %727 : vector<8x16xf32>
    %c293 = arith.constant 293 : index
    %729 = memref.load %arg3[%c293] : memref<432xf32, #tpu.memory_space<smem>>
    %730 = vector.broadcast %729 : f32 to vector<8x16xf32>
    %731 = arith.mulf %730, %63 : vector<8x16xf32>
    %732 = arith.addf %728, %731 : vector<8x16xf32>
    %c309 = arith.constant 309 : index
    %733 = memref.load %arg3[%c309] : memref<432xf32, #tpu.memory_space<smem>>
    %734 = vector.broadcast %733 : f32 to vector<8x16xf32>
    %735 = arith.mulf %734, %65 : vector<8x16xf32>
    %736 = arith.addf %732, %735 : vector<8x16xf32>
    %c325 = arith.constant 325 : index
    %737 = memref.load %arg3[%c325] : memref<432xf32, #tpu.memory_space<smem>>
    %738 = vector.broadcast %737 : f32 to vector<8x16xf32>
    %739 = arith.mulf %738, %67 : vector<8x16xf32>
    %740 = arith.addf %736, %739 : vector<8x16xf32>
    %c341 = arith.constant 341 : index
    %741 = memref.load %arg3[%c341] : memref<432xf32, #tpu.memory_space<smem>>
    %742 = vector.broadcast %741 : f32 to vector<8x16xf32>
    %743 = arith.mulf %742, %69 : vector<8x16xf32>
    %744 = arith.addf %740, %743 : vector<8x16xf32>
    %c357 = arith.constant 357 : index
    %745 = memref.load %arg3[%c357] : memref<432xf32, #tpu.memory_space<smem>>
    %746 = vector.broadcast %745 : f32 to vector<8x16xf32>
    %747 = arith.mulf %746, %71 : vector<8x16xf32>
    %748 = arith.addf %744, %747 : vector<8x16xf32>
    %c373 = arith.constant 373 : index
    %749 = memref.load %arg3[%c373] : memref<432xf32, #tpu.memory_space<smem>>
    %750 = vector.broadcast %749 : f32 to vector<8x16xf32>
    %751 = arith.mulf %750, %73 : vector<8x16xf32>
    %752 = arith.addf %748, %751 : vector<8x16xf32>
    %c389 = arith.constant 389 : index
    %753 = memref.load %arg3[%c389] : memref<432xf32, #tpu.memory_space<smem>>
    %754 = vector.broadcast %753 : f32 to vector<8x16xf32>
    %755 = arith.mulf %754, %75 : vector<8x16xf32>
    %756 = arith.addf %752, %755 : vector<8x16xf32>
    %c405 = arith.constant 405 : index
    %757 = memref.load %arg3[%c405] : memref<432xf32, #tpu.memory_space<smem>>
    %758 = vector.broadcast %757 : f32 to vector<8x16xf32>
    %759 = arith.mulf %758, %77 : vector<8x16xf32>
    %760 = arith.addf %756, %759 : vector<8x16xf32>
    %c421 = arith.constant 421 : index
    %761 = memref.load %arg3[%c421] : memref<432xf32, #tpu.memory_space<smem>>
    %762 = vector.broadcast %761 : f32 to vector<8x16xf32>
    %763 = arith.mulf %762, %79 : vector<8x16xf32>
    %764 = arith.addf %760, %763 : vector<8x16xf32>
    %cst_137 = arith.constant 0.000000e+00 : f32
    %765 = vector.broadcast %cst_137 : f32 to vector<8x16xf32>
    %766 = arith.maximumf %764, %765 : vector<8x16xf32>
    %c0_138 = arith.constant 0 : index
    %c5_139 = arith.constant 5 : index
    %c0_140 = arith.constant 0 : index
    %c0_141 = arith.constant 0 : index
    %767 = vector.load %arg5[%c0_138, %c5_139, %c0_140, %c0_141] : memref<1x16x8x16xf32, #tpu.memory_space<vmem>>, vector<1x1x8x16xf32>
    %768 = vector.shape_cast %767 : vector<1x1x8x16xf32> to vector<8x16xf32>
    %769 = vector.shape_cast %766 : vector<8x16xf32> to vector<1x1x8x16xf32>
    tpu.vector_store %arg5[%c0_138, %c5_139, %c0_140, %c0_141], %769 {strides = array<i32>} : memref<1x16x8x16xf32, #tpu.memory_space<vmem>>, vector<1x1x8x16xf32>,
    %c6 = arith.constant 6 : index
    %770 = memref.load %arg4[%c6] : memref<16xf32, #tpu.memory_space<smem>>
    %771 = vector.broadcast %770 : f32 to vector<8x16xf32>
    %c6_142 = arith.constant 6 : index
    %772 = memref.load %arg3[%c6_142] : memref<432xf32, #tpu.memory_space<smem>>
    %773 = vector.broadcast %772 : f32 to vector<8x16xf32>
    %774 = arith.mulf %773, %27 : vector<8x16xf32>
    %775 = arith.addf %771, %774 : vector<8x16xf32>
    %c22 = arith.constant 22 : index
    %776 = memref.load %arg3[%c22] : memref<432xf32, #tpu.memory_space<smem>>
    %777 = vector.broadcast %776 : f32 to vector<8x16xf32>
    %778 = arith.mulf %777, %29 : vector<8x16xf32>
    %779 = arith.addf %775, %778 : vector<8x16xf32>
    %c38 = arith.constant 38 : index
    %780 = memref.load %arg3[%c38] : memref<432xf32, #tpu.memory_space<smem>>
    %781 = vector.broadcast %780 : f32 to vector<8x16xf32>
    %782 = arith.mulf %781, %31 : vector<8x16xf32>
    %783 = arith.addf %779, %782 : vector<8x16xf32>
    %c54 = arith.constant 54 : index
    %784 = memref.load %arg3[%c54] : memref<432xf32, #tpu.memory_space<smem>>
    %785 = vector.broadcast %784 : f32 to vector<8x16xf32>
    %786 = arith.mulf %785, %33 : vector<8x16xf32>
    %787 = arith.addf %783, %786 : vector<8x16xf32>
    %c70 = arith.constant 70 : index
    %788 = memref.load %arg3[%c70] : memref<432xf32, #tpu.memory_space<smem>>
    %789 = vector.broadcast %788 : f32 to vector<8x16xf32>
    %790 = arith.mulf %789, %35 : vector<8x16xf32>
    %791 = arith.addf %787, %790 : vector<8x16xf32>
    %c86 = arith.constant 86 : index
    %792 = memref.load %arg3[%c86] : memref<432xf32, #tpu.memory_space<smem>>
    %793 = vector.broadcast %792 : f32 to vector<8x16xf32>
    %794 = arith.mulf %793, %37 : vector<8x16xf32>
    %795 = arith.addf %791, %794 : vector<8x16xf32>
    %c102 = arith.constant 102 : index
    %796 = memref.load %arg3[%c102] : memref<432xf32, #tpu.memory_space<smem>>
    %797 = vector.broadcast %796 : f32 to vector<8x16xf32>
    %798 = arith.mulf %797, %39 : vector<8x16xf32>
    %799 = arith.addf %795, %798 : vector<8x16xf32>
    %c118 = arith.constant 118 : index
    %800 = memref.load %arg3[%c118] : memref<432xf32, #tpu.memory_space<smem>>
    %801 = vector.broadcast %800 : f32 to vector<8x16xf32>
    %802 = arith.mulf %801, %41 : vector<8x16xf32>
    %803 = arith.addf %799, %802 : vector<8x16xf32>
    %c134 = arith.constant 134 : index
    %804 = memref.load %arg3[%c134] : memref<432xf32, #tpu.memory_space<smem>>
    %805 = vector.broadcast %804 : f32 to vector<8x16xf32>
    %806 = arith.mulf %805, %43 : vector<8x16xf32>
    %807 = arith.addf %803, %806 : vector<8x16xf32>
    %c150 = arith.constant 150 : index
    %808 = memref.load %arg3[%c150] : memref<432xf32, #tpu.memory_space<smem>>
    %809 = vector.broadcast %808 : f32 to vector<8x16xf32>
    %810 = arith.mulf %809, %45 : vector<8x16xf32>
    %811 = arith.addf %807, %810 : vector<8x16xf32>
    %c166 = arith.constant 166 : index
    %812 = memref.load %arg3[%c166] : memref<432xf32, #tpu.memory_space<smem>>
    %813 = vector.broadcast %812 : f32 to vector<8x16xf32>
    %814 = arith.mulf %813, %47 : vector<8x16xf32>
    %815 = arith.addf %811, %814 : vector<8x16xf32>
    %c182 = arith.constant 182 : index
    %816 = memref.load %arg3[%c182] : memref<432xf32, #tpu.memory_space<smem>>
    %817 = vector.broadcast %816 : f32 to vector<8x16xf32>
    %818 = arith.mulf %817, %49 : vector<8x16xf32>
    %819 = arith.addf %815, %818 : vector<8x16xf32>
    %c198 = arith.constant 198 : index
    %820 = memref.load %arg3[%c198] : memref<432xf32, #tpu.memory_space<smem>>
    %821 = vector.broadcast %820 : f32 to vector<8x16xf32>
    %822 = arith.mulf %821, %51 : vector<8x16xf32>
    %823 = arith.addf %819, %822 : vector<8x16xf32>
    %c214 = arith.constant 214 : index
    %824 = memref.load %arg3[%c214] : memref<432xf32, #tpu.memory_space<smem>>
    %825 = vector.broadcast %824 : f32 to vector<8x16xf32>
    %826 = arith.mulf %825, %53 : vector<8x16xf32>
    %827 = arith.addf %823, %826 : vector<8x16xf32>
    %c230 = arith.constant 230 : index
    %828 = memref.load %arg3[%c230] : memref<432xf32, #tpu.memory_space<smem>>
    %829 = vector.broadcast %828 : f32 to vector<8x16xf32>
    %830 = arith.mulf %829, %55 : vector<8x16xf32>
    %831 = arith.addf %827, %830 : vector<8x16xf32>
    %c246 = arith.constant 246 : index
    %832 = memref.load %arg3[%c246] : memref<432xf32, #tpu.memory_space<smem>>
    %833 = vector.broadcast %832 : f32 to vector<8x16xf32>
    %834 = arith.mulf %833, %57 : vector<8x16xf32>
    %835 = arith.addf %831, %834 : vector<8x16xf32>
    %c262 = arith.constant 262 : index
    %836 = memref.load %arg3[%c262] : memref<432xf32, #tpu.memory_space<smem>>
    %837 = vector.broadcast %836 : f32 to vector<8x16xf32>
    %838 = arith.mulf %837, %59 : vector<8x16xf32>
    %839 = arith.addf %835, %838 : vector<8x16xf32>
    %c278 = arith.constant 278 : index
    %840 = memref.load %arg3[%c278] : memref<432xf32, #tpu.memory_space<smem>>
    %841 = vector.broadcast %840 : f32 to vector<8x16xf32>
    %842 = arith.mulf %841, %61 : vector<8x16xf32>
    %843 = arith.addf %839, %842 : vector<8x16xf32>
    %c294 = arith.constant 294 : index
    %844 = memref.load %arg3[%c294] : memref<432xf32, #tpu.memory_space<smem>>
    %845 = vector.broadcast %844 : f32 to vector<8x16xf32>
    %846 = arith.mulf %845, %63 : vector<8x16xf32>
    %847 = arith.addf %843, %846 : vector<8x16xf32>
    %c310 = arith.constant 310 : index
    %848 = memref.load %arg3[%c310] : memref<432xf32, #tpu.memory_space<smem>>
    %849 = vector.broadcast %848 : f32 to vector<8x16xf32>
    %850 = arith.mulf %849, %65 : vector<8x16xf32>
    %851 = arith.addf %847, %850 : vector<8x16xf32>
    %c326 = arith.constant 326 : index
    %852 = memref.load %arg3[%c326] : memref<432xf32, #tpu.memory_space<smem>>
    %853 = vector.broadcast %852 : f32 to vector<8x16xf32>
    %854 = arith.mulf %853, %67 : vector<8x16xf32>
    %855 = arith.addf %851, %854 : vector<8x16xf32>
    %c342 = arith.constant 342 : index
    %856 = memref.load %arg3[%c342] : memref<432xf32, #tpu.memory_space<smem>>
    %857 = vector.broadcast %856 : f32 to vector<8x16xf32>
    %858 = arith.mulf %857, %69 : vector<8x16xf32>
    %859 = arith.addf %855, %858 : vector<8x16xf32>
    %c358 = arith.constant 358 : index
    %860 = memref.load %arg3[%c358] : memref<432xf32, #tpu.memory_space<smem>>
    %861 = vector.broadcast %860 : f32 to vector<8x16xf32>
    %862 = arith.mulf %861, %71 : vector<8x16xf32>
    %863 = arith.addf %859, %862 : vector<8x16xf32>
    %c374 = arith.constant 374 : index
    %864 = memref.load %arg3[%c374] : memref<432xf32, #tpu.memory_space<smem>>
    %865 = vector.broadcast %864 : f32 to vector<8x16xf32>
    %866 = arith.mulf %865, %73 : vector<8x16xf32>
    %867 = arith.addf %863, %866 : vector<8x16xf32>
    %c390 = arith.constant 390 : index
    %868 = memref.load %arg3[%c390] : memref<432xf32, #tpu.memory_space<smem>>
    %869 = vector.broadcast %868 : f32 to vector<8x16xf32>
    %870 = arith.mulf %869, %75 : vector<8x16xf32>
    %871 = arith.addf %867, %870 : vector<8x16xf32>
    %c406 = arith.constant 406 : index
    %872 = memref.load %arg3[%c406] : memref<432xf32, #tpu.memory_space<smem>>
    %873 = vector.broadcast %872 : f32 to vector<8x16xf32>
    %874 = arith.mulf %873, %77 : vector<8x16xf32>
    %875 = arith.addf %871, %874 : vector<8x16xf32>
    %c422 = arith.constant 422 : index
    %876 = memref.load %arg3[%c422] : memref<432xf32, #tpu.memory_space<smem>>
    %877 = vector.broadcast %876 : f32 to vector<8x16xf32>
    %878 = arith.mulf %877, %79 : vector<8x16xf32>
    %879 = arith.addf %875, %878 : vector<8x16xf32>
    %cst_143 = arith.constant 0.000000e+00 : f32
    %880 = vector.broadcast %cst_143 : f32 to vector<8x16xf32>
    %881 = arith.maximumf %879, %880 : vector<8x16xf32>
    %c0_144 = arith.constant 0 : index
    %c6_145 = arith.constant 6 : index
    %c0_146 = arith.constant 0 : index
    %c0_147 = arith.constant 0 : index
    %882 = vector.load %arg5[%c0_144, %c6_145, %c0_146, %c0_147] : memref<1x16x8x16xf32, #tpu.memory_space<vmem>>, vector<1x1x8x16xf32>
    %883 = vector.shape_cast %882 : vector<1x1x8x16xf32> to vector<8x16xf32>
    %884 = vector.shape_cast %881 : vector<8x16xf32> to vector<1x1x8x16xf32>
    tpu.vector_store %arg5[%c0_144, %c6_145, %c0_146, %c0_147], %884 {strides = array<i32>} : memref<1x16x8x16xf32, #tpu.memory_space<vmem>>, vector<1x1x8x16xf32>,
    %c7 = arith.constant 7 : index
    %885 = memref.load %arg4[%c7] : memref<16xf32, #tpu.memory_space<smem>>
    %886 = vector.broadcast %885 : f32 to vector<8x16xf32>
    %c7_148 = arith.constant 7 : index
    %887 = memref.load %arg3[%c7_148] : memref<432xf32, #tpu.memory_space<smem>>
    %888 = vector.broadcast %887 : f32 to vector<8x16xf32>
    %889 = arith.mulf %888, %27 : vector<8x16xf32>
    %890 = arith.addf %886, %889 : vector<8x16xf32>
    %c23 = arith.constant 23 : index
    %891 = memref.load %arg3[%c23] : memref<432xf32, #tpu.memory_space<smem>>
    %892 = vector.broadcast %891 : f32 to vector<8x16xf32>
    %893 = arith.mulf %892, %29 : vector<8x16xf32>
    %894 = arith.addf %890, %893 : vector<8x16xf32>
    %c39 = arith.constant 39 : index
    %895 = memref.load %arg3[%c39] : memref<432xf32, #tpu.memory_space<smem>>
    %896 = vector.broadcast %895 : f32 to vector<8x16xf32>
    %897 = arith.mulf %896, %31 : vector<8x16xf32>
    %898 = arith.addf %894, %897 : vector<8x16xf32>
    %c55 = arith.constant 55 : index
    %899 = memref.load %arg3[%c55] : memref<432xf32, #tpu.memory_space<smem>>
    %900 = vector.broadcast %899 : f32 to vector<8x16xf32>
    %901 = arith.mulf %900, %33 : vector<8x16xf32>
    %902 = arith.addf %898, %901 : vector<8x16xf32>
    %c71 = arith.constant 71 : index
    %903 = memref.load %arg3[%c71] : memref<432xf32, #tpu.memory_space<smem>>
    %904 = vector.broadcast %903 : f32 to vector<8x16xf32>
    %905 = arith.mulf %904, %35 : vector<8x16xf32>
    %906 = arith.addf %902, %905 : vector<8x16xf32>
    %c87 = arith.constant 87 : index
    %907 = memref.load %arg3[%c87] : memref<432xf32, #tpu.memory_space<smem>>
    %908 = vector.broadcast %907 : f32 to vector<8x16xf32>
    %909 = arith.mulf %908, %37 : vector<8x16xf32>
    %910 = arith.addf %906, %909 : vector<8x16xf32>
    %c103 = arith.constant 103 : index
    %911 = memref.load %arg3[%c103] : memref<432xf32, #tpu.memory_space<smem>>
    %912 = vector.broadcast %911 : f32 to vector<8x16xf32>
    %913 = arith.mulf %912, %39 : vector<8x16xf32>
    %914 = arith.addf %910, %913 : vector<8x16xf32>
    %c119 = arith.constant 119 : index
    %915 = memref.load %arg3[%c119] : memref<432xf32, #tpu.memory_space<smem>>
    %916 = vector.broadcast %915 : f32 to vector<8x16xf32>
    %917 = arith.mulf %916, %41 : vector<8x16xf32>
    %918 = arith.addf %914, %917 : vector<8x16xf32>
    %c135 = arith.constant 135 : index
    %919 = memref.load %arg3[%c135] : memref<432xf32, #tpu.memory_space<smem>>
    %920 = vector.broadcast %919 : f32 to vector<8x16xf32>
    %921 = arith.mulf %920, %43 : vector<8x16xf32>
    %922 = arith.addf %918, %921 : vector<8x16xf32>
    %c151 = arith.constant 151 : index
    %923 = memref.load %arg3[%c151] : memref<432xf32, #tpu.memory_space<smem>>
    %924 = vector.broadcast %923 : f32 to vector<8x16xf32>
    %925 = arith.mulf %924, %45 : vector<8x16xf32>
    %926 = arith.addf %922, %925 : vector<8x16xf32>
    %c167 = arith.constant 167 : index
    %927 = memref.load %arg3[%c167] : memref<432xf32, #tpu.memory_space<smem>>
    %928 = vector.broadcast %927 : f32 to vector<8x16xf32>
    %929 = arith.mulf %928, %47 : vector<8x16xf32>
    %930 = arith.addf %926, %929 : vector<8x16xf32>
    %c183 = arith.constant 183 : index
    %931 = memref.load %arg3[%c183] : memref<432xf32, #tpu.memory_space<smem>>
    %932 = vector.broadcast %931 : f32 to vector<8x16xf32>
    %933 = arith.mulf %932, %49 : vector<8x16xf32>
    %934 = arith.addf %930, %933 : vector<8x16xf32>
    %c199 = arith.constant 199 : index
    %935 = memref.load %arg3[%c199] : memref<432xf32, #tpu.memory_space<smem>>
    %936 = vector.broadcast %935 : f32 to vector<8x16xf32>
    %937 = arith.mulf %936, %51 : vector<8x16xf32>
    %938 = arith.addf %934, %937 : vector<8x16xf32>
    %c215 = arith.constant 215 : index
    %939 = memref.load %arg3[%c215] : memref<432xf32, #tpu.memory_space<smem>>
    %940 = vector.broadcast %939 : f32 to vector<8x16xf32>
    %941 = arith.mulf %940, %53 : vector<8x16xf32>
    %942 = arith.addf %938, %941 : vector<8x16xf32>
    %c231 = arith.constant 231 : index
    %943 = memref.load %arg3[%c231] : memref<432xf32, #tpu.memory_space<smem>>
    %944 = vector.broadcast %943 : f32 to vector<8x16xf32>
    %945 = arith.mulf %944, %55 : vector<8x16xf32>
    %946 = arith.addf %942, %945 : vector<8x16xf32>
    %c247 = arith.constant 247 : index
    %947 = memref.load %arg3[%c247] : memref<432xf32, #tpu.memory_space<smem>>
    %948 = vector.broadcast %947 : f32 to vector<8x16xf32>
    %949 = arith.mulf %948, %57 : vector<8x16xf32>
    %950 = arith.addf %946, %949 : vector<8x16xf32>
    %c263 = arith.constant 263 : index
    %951 = memref.load %arg3[%c263] : memref<432xf32, #tpu.memory_space<smem>>
    %952 = vector.broadcast %951 : f32 to vector<8x16xf32>
    %953 = arith.mulf %952, %59 : vector<8x16xf32>
    %954 = arith.addf %950, %953 : vector<8x16xf32>
    %c279 = arith.constant 279 : index
    %955 = memref.load %arg3[%c279] : memref<432xf32, #tpu.memory_space<smem>>
    %956 = vector.broadcast %955 : f32 to vector<8x16xf32>
    %957 = arith.mulf %956, %61 : vector<8x16xf32>
    %958 = arith.addf %954, %957 : vector<8x16xf32>
    %c295 = arith.constant 295 : index
    %959 = memref.load %arg3[%c295] : memref<432xf32, #tpu.memory_space<smem>>
    %960 = vector.broadcast %959 : f32 to vector<8x16xf32>
    %961 = arith.mulf %960, %63 : vector<8x16xf32>
    %962 = arith.addf %958, %961 : vector<8x16xf32>
    %c311 = arith.constant 311 : index
    %963 = memref.load %arg3[%c311] : memref<432xf32, #tpu.memory_space<smem>>
    %964 = vector.broadcast %963 : f32 to vector<8x16xf32>
    %965 = arith.mulf %964, %65 : vector<8x16xf32>
    %966 = arith.addf %962, %965 : vector<8x16xf32>
    %c327 = arith.constant 327 : index
    %967 = memref.load %arg3[%c327] : memref<432xf32, #tpu.memory_space<smem>>
    %968 = vector.broadcast %967 : f32 to vector<8x16xf32>
    %969 = arith.mulf %968, %67 : vector<8x16xf32>
    %970 = arith.addf %966, %969 : vector<8x16xf32>
    %c343 = arith.constant 343 : index
    %971 = memref.load %arg3[%c343] : memref<432xf32, #tpu.memory_space<smem>>
    %972 = vector.broadcast %971 : f32 to vector<8x16xf32>
    %973 = arith.mulf %972, %69 : vector<8x16xf32>
    %974 = arith.addf %970, %973 : vector<8x16xf32>
    %c359 = arith.constant 359 : index
    %975 = memref.load %arg3[%c359] : memref<432xf32, #tpu.memory_space<smem>>
    %976 = vector.broadcast %975 : f32 to vector<8x16xf32>
    %977 = arith.mulf %976, %71 : vector<8x16xf32>
    %978 = arith.addf %974, %977 : vector<8x16xf32>
    %c375 = arith.constant 375 : index
    %979 = memref.load %arg3[%c375] : memref<432xf32, #tpu.memory_space<smem>>
    %980 = vector.broadcast %979 : f32 to vector<8x16xf32>
    %981 = arith.mulf %980, %73 : vector<8x16xf32>
    %982 = arith.addf %978, %981 : vector<8x16xf32>
    %c391 = arith.constant 391 : index
    %983 = memref.load %arg3[%c391] : memref<432xf32, #tpu.memory_space<smem>>
    %984 = vector.broadcast %983 : f32 to vector<8x16xf32>
    %985 = arith.mulf %984, %75 : vector<8x16xf32>
    %986 = arith.addf %982, %985 : vector<8x16xf32>
    %c407 = arith.constant 407 : index
    %987 = memref.load %arg3[%c407] : memref<432xf32, #tpu.memory_space<smem>>
    %988 = vector.broadcast %987 : f32 to vector<8x16xf32>
    %989 = arith.mulf %988, %77 : vector<8x16xf32>
    %990 = arith.addf %986, %989 : vector<8x16xf32>
    %c423 = arith.constant 423 : index
    %991 = memref.load %arg3[%c423] : memref<432xf32, #tpu.memory_space<smem>>
    %992 = vector.broadcast %991 : f32 to vector<8x16xf32>
    %993 = arith.mulf %992, %79 : vector<8x16xf32>
    %994 = arith.addf %990, %993 : vector<8x16xf32>
    %cst_149 = arith.constant 0.000000e+00 : f32
    %995 = vector.broadcast %cst_149 : f32 to vector<8x16xf32>
    %996 = arith.maximumf %994, %995 : vector<8x16xf32>
    %c0_150 = arith.constant 0 : index
    %c7_151 = arith.constant 7 : index
    %c0_152 = arith.constant 0 : index
    %c0_153 = arith.constant 0 : index
    %997 = vector.load %arg5[%c0_150, %c7_151, %c0_152, %c0_153] : memref<1x16x8x16xf32, #tpu.memory_space<vmem>>, vector<1x1x8x16xf32>
    %998 = vector.shape_cast %997 : vector<1x1x8x16xf32> to vector<8x16xf32>
    %999 = vector.shape_cast %996 : vector<8x16xf32> to vector<1x1x8x16xf32>
    tpu.vector_store %arg5[%c0_150, %c7_151, %c0_152, %c0_153], %999 {strides = array<i32>} : memref<1x16x8x16xf32, #tpu.memory_space<vmem>>, vector<1x1x8x16xf32>,
    %c8 = arith.constant 8 : index
    %1000 = memref.load %arg4[%c8] : memref<16xf32, #tpu.memory_space<smem>>
    %1001 = vector.broadcast %1000 : f32 to vector<8x16xf32>
    %c8_154 = arith.constant 8 : index
    %1002 = memref.load %arg3[%c8_154] : memref<432xf32, #tpu.memory_space<smem>>
    %1003 = vector.broadcast %1002 : f32 to vector<8x16xf32>
    %1004 = arith.mulf %1003, %27 : vector<8x16xf32>
    %1005 = arith.addf %1001, %1004 : vector<8x16xf32>
    %c24 = arith.constant 24 : index
    %1006 = memref.load %arg3[%c24] : memref<432xf32, #tpu.memory_space<smem>>
    %1007 = vector.broadcast %1006 : f32 to vector<8x16xf32>
    %1008 = arith.mulf %1007, %29 : vector<8x16xf32>
    %1009 = arith.addf %1005, %1008 : vector<8x16xf32>
    %c40 = arith.constant 40 : index
    %1010 = memref.load %arg3[%c40] : memref<432xf32, #tpu.memory_space<smem>>
    %1011 = vector.broadcast %1010 : f32 to vector<8x16xf32>
    %1012 = arith.mulf %1011, %31 : vector<8x16xf32>
    %1013 = arith.addf %1009, %1012 : vector<8x16xf32>
    %c56 = arith.constant 56 : index
    %1014 = memref.load %arg3[%c56] : memref<432xf32, #tpu.memory_space<smem>>
    %1015 = vector.broadcast %1014 : f32 to vector<8x16xf32>
    %1016 = arith.mulf %1015, %33 : vector<8x16xf32>
    %1017 = arith.addf %1013, %1016 : vector<8x16xf32>
    %c72 = arith.constant 72 : index
    %1018 = memref.load %arg3[%c72] : memref<432xf32, #tpu.memory_space<smem>>
    %1019 = vector.broadcast %1018 : f32 to vector<8x16xf32>
    %1020 = arith.mulf %1019, %35 : vector<8x16xf32>
    %1021 = arith.addf %1017, %1020 : vector<8x16xf32>
    %c88 = arith.constant 88 : index
    %1022 = memref.load %arg3[%c88] : memref<432xf32, #tpu.memory_space<smem>>
    %1023 = vector.broadcast %1022 : f32 to vector<8x16xf32>
    %1024 = arith.mulf %1023, %37 : vector<8x16xf32>
    %1025 = arith.addf %1021, %1024 : vector<8x16xf32>
    %c104 = arith.constant 104 : index
    %1026 = memref.load %arg3[%c104] : memref<432xf32, #tpu.memory_space<smem>>
    %1027 = vector.broadcast %1026 : f32 to vector<8x16xf32>
    %1028 = arith.mulf %1027, %39 : vector<8x16xf32>
    %1029 = arith.addf %1025, %1028 : vector<8x16xf32>
    %c120 = arith.constant 120 : index
    %1030 = memref.load %arg3[%c120] : memref<432xf32, #tpu.memory_space<smem>>
    %1031 = vector.broadcast %1030 : f32 to vector<8x16xf32>
    %1032 = arith.mulf %1031, %41 : vector<8x16xf32>
    %1033 = arith.addf %1029, %1032 : vector<8x16xf32>
    %c136 = arith.constant 136 : index
    %1034 = memref.load %arg3[%c136] : memref<432xf32, #tpu.memory_space<smem>>
    %1035 = vector.broadcast %1034 : f32 to vector<8x16xf32>
    %1036 = arith.mulf %1035, %43 : vector<8x16xf32>
    %1037 = arith.addf %1033, %1036 : vector<8x16xf32>
    %c152 = arith.constant 152 : index
    %1038 = memref.load %arg3[%c152] : memref<432xf32, #tpu.memory_space<smem>>
    %1039 = vector.broadcast %1038 : f32 to vector<8x16xf32>
    %1040 = arith.mulf %1039, %45 : vector<8x16xf32>
    %1041 = arith.addf %1037, %1040 : vector<8x16xf32>
    %c168 = arith.constant 168 : index
    %1042 = memref.load %arg3[%c168] : memref<432xf32, #tpu.memory_space<smem>>
    %1043 = vector.broadcast %1042 : f32 to vector<8x16xf32>
    %1044 = arith.mulf %1043, %47 : vector<8x16xf32>
    %1045 = arith.addf %1041, %1044 : vector<8x16xf32>
    %c184 = arith.constant 184 : index
    %1046 = memref.load %arg3[%c184] : memref<432xf32, #tpu.memory_space<smem>>
    %1047 = vector.broadcast %1046 : f32 to vector<8x16xf32>
    %1048 = arith.mulf %1047, %49 : vector<8x16xf32>
    %1049 = arith.addf %1045, %1048 : vector<8x16xf32>
    %c200 = arith.constant 200 : index
    %1050 = memref.load %arg3[%c200] : memref<432xf32, #tpu.memory_space<smem>>
    %1051 = vector.broadcast %1050 : f32 to vector<8x16xf32>
    %1052 = arith.mulf %1051, %51 : vector<8x16xf32>
    %1053 = arith.addf %1049, %1052 : vector<8x16xf32>
    %c216 = arith.constant 216 : index
    %1054 = memref.load %arg3[%c216] : memref<432xf32, #tpu.memory_space<smem>>
    %1055 = vector.broadcast %1054 : f32 to vector<8x16xf32>
    %1056 = arith.mulf %1055, %53 : vector<8x16xf32>
    %1057 = arith.addf %1053, %1056 : vector<8x16xf32>
    %c232 = arith.constant 232 : index
    %1058 = memref.load %arg3[%c232] : memref<432xf32, #tpu.memory_space<smem>>
    %1059 = vector.broadcast %1058 : f32 to vector<8x16xf32>
    %1060 = arith.mulf %1059, %55 : vector<8x16xf32>
    %1061 = arith.addf %1057, %1060 : vector<8x16xf32>
    %c248 = arith.constant 248 : index
    %1062 = memref.load %arg3[%c248] : memref<432xf32, #tpu.memory_space<smem>>
    %1063 = vector.broadcast %1062 : f32 to vector<8x16xf32>
    %1064 = arith.mulf %1063, %57 : vector<8x16xf32>
    %1065 = arith.addf %1061, %1064 : vector<8x16xf32>
    %c264 = arith.constant 264 : index
    %1066 = memref.load %arg3[%c264] : memref<432xf32, #tpu.memory_space<smem>>
    %1067 = vector.broadcast %1066 : f32 to vector<8x16xf32>
    %1068 = arith.mulf %1067, %59 : vector<8x16xf32>
    %1069 = arith.addf %1065, %1068 : vector<8x16xf32>
    %c280 = arith.constant 280 : index
    %1070 = memref.load %arg3[%c280] : memref<432xf32, #tpu.memory_space<smem>>
    %1071 = vector.broadcast %1070 : f32 to vector<8x16xf32>
    %1072 = arith.mulf %1071, %61 : vector<8x16xf32>
    %1073 = arith.addf %1069, %1072 : vector<8x16xf32>
    %c296 = arith.constant 296 : index
    %1074 = memref.load %arg3[%c296] : memref<432xf32, #tpu.memory_space<smem>>
    %1075 = vector.broadcast %1074 : f32 to vector<8x16xf32>
    %1076 = arith.mulf %1075, %63 : vector<8x16xf32>
    %1077 = arith.addf %1073, %1076 : vector<8x16xf32>
    %c312 = arith.constant 312 : index
    %1078 = memref.load %arg3[%c312] : memref<432xf32, #tpu.memory_space<smem>>
    %1079 = vector.broadcast %1078 : f32 to vector<8x16xf32>
    %1080 = arith.mulf %1079, %65 : vector<8x16xf32>
    %1081 = arith.addf %1077, %1080 : vector<8x16xf32>
    %c328 = arith.constant 328 : index
    %1082 = memref.load %arg3[%c328] : memref<432xf32, #tpu.memory_space<smem>>
    %1083 = vector.broadcast %1082 : f32 to vector<8x16xf32>
    %1084 = arith.mulf %1083, %67 : vector<8x16xf32>
    %1085 = arith.addf %1081, %1084 : vector<8x16xf32>
    %c344 = arith.constant 344 : index
    %1086 = memref.load %arg3[%c344] : memref<432xf32, #tpu.memory_space<smem>>
    %1087 = vector.broadcast %1086 : f32 to vector<8x16xf32>
    %1088 = arith.mulf %1087, %69 : vector<8x16xf32>
    %1089 = arith.addf %1085, %1088 : vector<8x16xf32>
    %c360 = arith.constant 360 : index
    %1090 = memref.load %arg3[%c360] : memref<432xf32, #tpu.memory_space<smem>>
    %1091 = vector.broadcast %1090 : f32 to vector<8x16xf32>
    %1092 = arith.mulf %1091, %71 : vector<8x16xf32>
    %1093 = arith.addf %1089, %1092 : vector<8x16xf32>
    %c376 = arith.constant 376 : index
    %1094 = memref.load %arg3[%c376] : memref<432xf32, #tpu.memory_space<smem>>
    %1095 = vector.broadcast %1094 : f32 to vector<8x16xf32>
    %1096 = arith.mulf %1095, %73 : vector<8x16xf32>
    %1097 = arith.addf %1093, %1096 : vector<8x16xf32>
    %c392 = arith.constant 392 : index
    %1098 = memref.load %arg3[%c392] : memref<432xf32, #tpu.memory_space<smem>>
    %1099 = vector.broadcast %1098 : f32 to vector<8x16xf32>
    %1100 = arith.mulf %1099, %75 : vector<8x16xf32>
    %1101 = arith.addf %1097, %1100 : vector<8x16xf32>
    %c408 = arith.constant 408 : index
    %1102 = memref.load %arg3[%c408] : memref<432xf32, #tpu.memory_space<smem>>
    %1103 = vector.broadcast %1102 : f32 to vector<8x16xf32>
    %1104 = arith.mulf %1103, %77 : vector<8x16xf32>
    %1105 = arith.addf %1101, %1104 : vector<8x16xf32>
    %c424 = arith.constant 424 : index
    %1106 = memref.load %arg3[%c424] : memref<432xf32, #tpu.memory_space<smem>>
    %1107 = vector.broadcast %1106 : f32 to vector<8x16xf32>
    %1108 = arith.mulf %1107, %79 : vector<8x16xf32>
    %1109 = arith.addf %1105, %1108 : vector<8x16xf32>
    %cst_155 = arith.constant 0.000000e+00 : f32
    %1110 = vector.broadcast %cst_155 : f32 to vector<8x16xf32>
    %1111 = arith.maximumf %1109, %1110 : vector<8x16xf32>
    %c0_156 = arith.constant 0 : index
    %c8_157 = arith.constant 8 : index
    %c0_158 = arith.constant 0 : index
    %c0_159 = arith.constant 0 : index
    %1112 = vector.load %arg5[%c0_156, %c8_157, %c0_158, %c0_159] : memref<1x16x8x16xf32, #tpu.memory_space<vmem>>, vector<1x1x8x16xf32>
    %1113 = vector.shape_cast %1112 : vector<1x1x8x16xf32> to vector<8x16xf32>
    %1114 = vector.shape_cast %1111 : vector<8x16xf32> to vector<1x1x8x16xf32>
    tpu.vector_store %arg5[%c0_156, %c8_157, %c0_158, %c0_159], %1114 {strides = array<i32>} : memref<1x16x8x16xf32, #tpu.memory_space<vmem>>, vector<1x1x8x16xf32>,
    %c9_160 = arith.constant 9 : index
    %1115 = memref.load %arg4[%c9_160] : memref<16xf32, #tpu.memory_space<smem>>
    %1116 = vector.broadcast %1115 : f32 to vector<8x16xf32>
    %c9_161 = arith.constant 9 : index
    %1117 = memref.load %arg3[%c9_161] : memref<432xf32, #tpu.memory_space<smem>>
    %1118 = vector.broadcast %1117 : f32 to vector<8x16xf32>
    %1119 = arith.mulf %1118, %27 : vector<8x16xf32>
    %1120 = arith.addf %1116, %1119 : vector<8x16xf32>
    %c25 = arith.constant 25 : index
    %1121 = memref.load %arg3[%c25] : memref<432xf32, #tpu.memory_space<smem>>
    %1122 = vector.broadcast %1121 : f32 to vector<8x16xf32>
    %1123 = arith.mulf %1122, %29 : vector<8x16xf32>
    %1124 = arith.addf %1120, %1123 : vector<8x16xf32>
    %c41 = arith.constant 41 : index
    %1125 = memref.load %arg3[%c41] : memref<432xf32, #tpu.memory_space<smem>>
    %1126 = vector.broadcast %1125 : f32 to vector<8x16xf32>
    %1127 = arith.mulf %1126, %31 : vector<8x16xf32>
    %1128 = arith.addf %1124, %1127 : vector<8x16xf32>
    %c57 = arith.constant 57 : index
    %1129 = memref.load %arg3[%c57] : memref<432xf32, #tpu.memory_space<smem>>
    %1130 = vector.broadcast %1129 : f32 to vector<8x16xf32>
    %1131 = arith.mulf %1130, %33 : vector<8x16xf32>
    %1132 = arith.addf %1128, %1131 : vector<8x16xf32>
    %c73 = arith.constant 73 : index
    %1133 = memref.load %arg3[%c73] : memref<432xf32, #tpu.memory_space<smem>>
    %1134 = vector.broadcast %1133 : f32 to vector<8x16xf32>
    %1135 = arith.mulf %1134, %35 : vector<8x16xf32>
    %1136 = arith.addf %1132, %1135 : vector<8x16xf32>
    %c89 = arith.constant 89 : index
    %1137 = memref.load %arg3[%c89] : memref<432xf32, #tpu.memory_space<smem>>
    %1138 = vector.broadcast %1137 : f32 to vector<8x16xf32>
    %1139 = arith.mulf %1138, %37 : vector<8x16xf32>
    %1140 = arith.addf %1136, %1139 : vector<8x16xf32>
    %c105 = arith.constant 105 : index
    %1141 = memref.load %arg3[%c105] : memref<432xf32, #tpu.memory_space<smem>>
    %1142 = vector.broadcast %1141 : f32 to vector<8x16xf32>
    %1143 = arith.mulf %1142, %39 : vector<8x16xf32>
    %1144 = arith.addf %1140, %1143 : vector<8x16xf32>
    %c121 = arith.constant 121 : index
    %1145 = memref.load %arg3[%c121] : memref<432xf32, #tpu.memory_space<smem>>
    %1146 = vector.broadcast %1145 : f32 to vector<8x16xf32>
    %1147 = arith.mulf %1146, %41 : vector<8x16xf32>
    %1148 = arith.addf %1144, %1147 : vector<8x16xf32>
    %c137 = arith.constant 137 : index
    %1149 = memref.load %arg3[%c137] : memref<432xf32, #tpu.memory_space<smem>>
    %1150 = vector.broadcast %1149 : f32 to vector<8x16xf32>
    %1151 = arith.mulf %1150, %43 : vector<8x16xf32>
    %1152 = arith.addf %1148, %1151 : vector<8x16xf32>
    %c153 = arith.constant 153 : index
    %1153 = memref.load %arg3[%c153] : memref<432xf32, #tpu.memory_space<smem>>
    %1154 = vector.broadcast %1153 : f32 to vector<8x16xf32>
    %1155 = arith.mulf %1154, %45 : vector<8x16xf32>
    %1156 = arith.addf %1152, %1155 : vector<8x16xf32>
    %c169 = arith.constant 169 : index
    %1157 = memref.load %arg3[%c169] : memref<432xf32, #tpu.memory_space<smem>>
    %1158 = vector.broadcast %1157 : f32 to vector<8x16xf32>
    %1159 = arith.mulf %1158, %47 : vector<8x16xf32>
    %1160 = arith.addf %1156, %1159 : vector<8x16xf32>
    %c185 = arith.constant 185 : index
    %1161 = memref.load %arg3[%c185] : memref<432xf32, #tpu.memory_space<smem>>
    %1162 = vector.broadcast %1161 : f32 to vector<8x16xf32>
    %1163 = arith.mulf %1162, %49 : vector<8x16xf32>
    %1164 = arith.addf %1160, %1163 : vector<8x16xf32>
    %c201 = arith.constant 201 : index
    %1165 = memref.load %arg3[%c201] : memref<432xf32, #tpu.memory_space<smem>>
    %1166 = vector.broadcast %1165 : f32 to vector<8x16xf32>
    %1167 = arith.mulf %1166, %51 : vector<8x16xf32>
    %1168 = arith.addf %1164, %1167 : vector<8x16xf32>
    %c217 = arith.constant 217 : index
    %1169 = memref.load %arg3[%c217] : memref<432xf32, #tpu.memory_space<smem>>
    %1170 = vector.broadcast %1169 : f32 to vector<8x16xf32>
    %1171 = arith.mulf %1170, %53 : vector<8x16xf32>
    %1172 = arith.addf %1168, %1171 : vector<8x16xf32>
    %c233 = arith.constant 233 : index
    %1173 = memref.load %arg3[%c233] : memref<432xf32, #tpu.memory_space<smem>>
    %1174 = vector.broadcast %1173 : f32 to vector<8x16xf32>
    %1175 = arith.mulf %1174, %55 : vector<8x16xf32>
    %1176 = arith.addf %1172, %1175 : vector<8x16xf32>
    %c249 = arith.constant 249 : index
    %1177 = memref.load %arg3[%c249] : memref<432xf32, #tpu.memory_space<smem>>
    %1178 = vector.broadcast %1177 : f32 to vector<8x16xf32>
    %1179 = arith.mulf %1178, %57 : vector<8x16xf32>
    %1180 = arith.addf %1176, %1179 : vector<8x16xf32>
    %c265 = arith.constant 265 : index
    %1181 = memref.load %arg3[%c265] : memref<432xf32, #tpu.memory_space<smem>>
    %1182 = vector.broadcast %1181 : f32 to vector<8x16xf32>
    %1183 = arith.mulf %1182, %59 : vector<8x16xf32>
    %1184 = arith.addf %1180, %1183 : vector<8x16xf32>
    %c281 = arith.constant 281 : index
    %1185 = memref.load %arg3[%c281] : memref<432xf32, #tpu.memory_space<smem>>
    %1186 = vector.broadcast %1185 : f32 to vector<8x16xf32>
    %1187 = arith.mulf %1186, %61 : vector<8x16xf32>
    %1188 = arith.addf %1184, %1187 : vector<8x16xf32>
    %c297 = arith.constant 297 : index
    %1189 = memref.load %arg3[%c297] : memref<432xf32, #tpu.memory_space<smem>>
    %1190 = vector.broadcast %1189 : f32 to vector<8x16xf32>
    %1191 = arith.mulf %1190, %63 : vector<8x16xf32>
    %1192 = arith.addf %1188, %1191 : vector<8x16xf32>
    %c313 = arith.constant 313 : index
    %1193 = memref.load %arg3[%c313] : memref<432xf32, #tpu.memory_space<smem>>
    %1194 = vector.broadcast %1193 : f32 to vector<8x16xf32>
    %1195 = arith.mulf %1194, %65 : vector<8x16xf32>
    %1196 = arith.addf %1192, %1195 : vector<8x16xf32>
    %c329 = arith.constant 329 : index
    %1197 = memref.load %arg3[%c329] : memref<432xf32, #tpu.memory_space<smem>>
    %1198 = vector.broadcast %1197 : f32 to vector<8x16xf32>
    %1199 = arith.mulf %1198, %67 : vector<8x16xf32>
    %1200 = arith.addf %1196, %1199 : vector<8x16xf32>
    %c345 = arith.constant 345 : index
    %1201 = memref.load %arg3[%c345] : memref<432xf32, #tpu.memory_space<smem>>
    %1202 = vector.broadcast %1201 : f32 to vector<8x16xf32>
    %1203 = arith.mulf %1202, %69 : vector<8x16xf32>
    %1204 = arith.addf %1200, %1203 : vector<8x16xf32>
    %c361 = arith.constant 361 : index
    %1205 = memref.load %arg3[%c361] : memref<432xf32, #tpu.memory_space<smem>>
    %1206 = vector.broadcast %1205 : f32 to vector<8x16xf32>
    %1207 = arith.mulf %1206, %71 : vector<8x16xf32>
    %1208 = arith.addf %1204, %1207 : vector<8x16xf32>
    %c377 = arith.constant 377 : index
    %1209 = memref.load %arg3[%c377] : memref<432xf32, #tpu.memory_space<smem>>
    %1210 = vector.broadcast %1209 : f32 to vector<8x16xf32>
    %1211 = arith.mulf %1210, %73 : vector<8x16xf32>
    %1212 = arith.addf %1208, %1211 : vector<8x16xf32>
    %c393 = arith.constant 393 : index
    %1213 = memref.load %arg3[%c393] : memref<432xf32, #tpu.memory_space<smem>>
    %1214 = vector.broadcast %1213 : f32 to vector<8x16xf32>
    %1215 = arith.mulf %1214, %75 : vector<8x16xf32>
    %1216 = arith.addf %1212, %1215 : vector<8x16xf32>
    %c409 = arith.constant 409 : index
    %1217 = memref.load %arg3[%c409] : memref<432xf32, #tpu.memory_space<smem>>
    %1218 = vector.broadcast %1217 : f32 to vector<8x16xf32>
    %1219 = arith.mulf %1218, %77 : vector<8x16xf32>
    %1220 = arith.addf %1216, %1219 : vector<8x16xf32>
    %c425 = arith.constant 425 : index
    %1221 = memref.load %arg3[%c425] : memref<432xf32, #tpu.memory_space<smem>>
    %1222 = vector.broadcast %1221 : f32 to vector<8x16xf32>
    %1223 = arith.mulf %1222, %79 : vector<8x16xf32>
    %1224 = arith.addf %1220, %1223 : vector<8x16xf32>
    %cst_162 = arith.constant 0.000000e+00 : f32
    %1225 = vector.broadcast %cst_162 : f32 to vector<8x16xf32>
    %1226 = arith.maximumf %1224, %1225 : vector<8x16xf32>
    %c0_163 = arith.constant 0 : index
    %c9_164 = arith.constant 9 : index
    %c0_165 = arith.constant 0 : index
    %c0_166 = arith.constant 0 : index
    %1227 = vector.load %arg5[%c0_163, %c9_164, %c0_165, %c0_166] : memref<1x16x8x16xf32, #tpu.memory_space<vmem>>, vector<1x1x8x16xf32>
    %1228 = vector.shape_cast %1227 : vector<1x1x8x16xf32> to vector<8x16xf32>
    %1229 = vector.shape_cast %1226 : vector<8x16xf32> to vector<1x1x8x16xf32>
    tpu.vector_store %arg5[%c0_163, %c9_164, %c0_165, %c0_166], %1229 {strides = array<i32>} : memref<1x16x8x16xf32, #tpu.memory_space<vmem>>, vector<1x1x8x16xf32>,
    %c10 = arith.constant 10 : index
    %1230 = memref.load %arg4[%c10] : memref<16xf32, #tpu.memory_space<smem>>
    %1231 = vector.broadcast %1230 : f32 to vector<8x16xf32>
    %c10_167 = arith.constant 10 : index
    %1232 = memref.load %arg3[%c10_167] : memref<432xf32, #tpu.memory_space<smem>>
    %1233 = vector.broadcast %1232 : f32 to vector<8x16xf32>
    %1234 = arith.mulf %1233, %27 : vector<8x16xf32>
    %1235 = arith.addf %1231, %1234 : vector<8x16xf32>
    %c26 = arith.constant 26 : index
    %1236 = memref.load %arg3[%c26] : memref<432xf32, #tpu.memory_space<smem>>
    %1237 = vector.broadcast %1236 : f32 to vector<8x16xf32>
    %1238 = arith.mulf %1237, %29 : vector<8x16xf32>
    %1239 = arith.addf %1235, %1238 : vector<8x16xf32>
    %c42 = arith.constant 42 : index
    %1240 = memref.load %arg3[%c42] : memref<432xf32, #tpu.memory_space<smem>>
    %1241 = vector.broadcast %1240 : f32 to vector<8x16xf32>
    %1242 = arith.mulf %1241, %31 : vector<8x16xf32>
    %1243 = arith.addf %1239, %1242 : vector<8x16xf32>
    %c58 = arith.constant 58 : index
    %1244 = memref.load %arg3[%c58] : memref<432xf32, #tpu.memory_space<smem>>
    %1245 = vector.broadcast %1244 : f32 to vector<8x16xf32>
    %1246 = arith.mulf %1245, %33 : vector<8x16xf32>
    %1247 = arith.addf %1243, %1246 : vector<8x16xf32>
    %c74 = arith.constant 74 : index
    %1248 = memref.load %arg3[%c74] : memref<432xf32, #tpu.memory_space<smem>>
    %1249 = vector.broadcast %1248 : f32 to vector<8x16xf32>
    %1250 = arith.mulf %1249, %35 : vector<8x16xf32>
    %1251 = arith.addf %1247, %1250 : vector<8x16xf32>
    %c90 = arith.constant 90 : index
    %1252 = memref.load %arg3[%c90] : memref<432xf32, #tpu.memory_space<smem>>
    %1253 = vector.broadcast %1252 : f32 to vector<8x16xf32>
    %1254 = arith.mulf %1253, %37 : vector<8x16xf32>
    %1255 = arith.addf %1251, %1254 : vector<8x16xf32>
    %c106 = arith.constant 106 : index
    %1256 = memref.load %arg3[%c106] : memref<432xf32, #tpu.memory_space<smem>>
    %1257 = vector.broadcast %1256 : f32 to vector<8x16xf32>
    %1258 = arith.mulf %1257, %39 : vector<8x16xf32>
    %1259 = arith.addf %1255, %1258 : vector<8x16xf32>
    %c122 = arith.constant 122 : index
    %1260 = memref.load %arg3[%c122] : memref<432xf32, #tpu.memory_space<smem>>
    %1261 = vector.broadcast %1260 : f32 to vector<8x16xf32>
    %1262 = arith.mulf %1261, %41 : vector<8x16xf32>
    %1263 = arith.addf %1259, %1262 : vector<8x16xf32>
    %c138 = arith.constant 138 : index
    %1264 = memref.load %arg3[%c138] : memref<432xf32, #tpu.memory_space<smem>>
    %1265 = vector.broadcast %1264 : f32 to vector<8x16xf32>
    %1266 = arith.mulf %1265, %43 : vector<8x16xf32>
    %1267 = arith.addf %1263, %1266 : vector<8x16xf32>
    %c154 = arith.constant 154 : index
    %1268 = memref.load %arg3[%c154] : memref<432xf32, #tpu.memory_space<smem>>
    %1269 = vector.broadcast %1268 : f32 to vector<8x16xf32>
    %1270 = arith.mulf %1269, %45 : vector<8x16xf32>
    %1271 = arith.addf %1267, %1270 : vector<8x16xf32>
    %c170 = arith.constant 170 : index
    %1272 = memref.load %arg3[%c170] : memref<432xf32, #tpu.memory_space<smem>>
    %1273 = vector.broadcast %1272 : f32 to vector<8x16xf32>
    %1274 = arith.mulf %1273, %47 : vector<8x16xf32>
    %1275 = arith.addf %1271, %1274 : vector<8x16xf32>
    %c186 = arith.constant 186 : index
    %1276 = memref.load %arg3[%c186] : memref<432xf32, #tpu.memory_space<smem>>
    %1277 = vector.broadcast %1276 : f32 to vector<8x16xf32>
    %1278 = arith.mulf %1277, %49 : vector<8x16xf32>
    %1279 = arith.addf %1275, %1278 : vector<8x16xf32>
    %c202 = arith.constant 202 : index
    %1280 = memref.load %arg3[%c202] : memref<432xf32, #tpu.memory_space<smem>>
    %1281 = vector.broadcast %1280 : f32 to vector<8x16xf32>
    %1282 = arith.mulf %1281, %51 : vector<8x16xf32>
    %1283 = arith.addf %1279, %1282 : vector<8x16xf32>
    %c218 = arith.constant 218 : index
    %1284 = memref.load %arg3[%c218] : memref<432xf32, #tpu.memory_space<smem>>
    %1285 = vector.broadcast %1284 : f32 to vector<8x16xf32>
    %1286 = arith.mulf %1285, %53 : vector<8x16xf32>
    %1287 = arith.addf %1283, %1286 : vector<8x16xf32>
    %c234 = arith.constant 234 : index
    %1288 = memref.load %arg3[%c234] : memref<432xf32, #tpu.memory_space<smem>>
    %1289 = vector.broadcast %1288 : f32 to vector<8x16xf32>
    %1290 = arith.mulf %1289, %55 : vector<8x16xf32>
    %1291 = arith.addf %1287, %1290 : vector<8x16xf32>
    %c250 = arith.constant 250 : index
    %1292 = memref.load %arg3[%c250] : memref<432xf32, #tpu.memory_space<smem>>
    %1293 = vector.broadcast %1292 : f32 to vector<8x16xf32>
    %1294 = arith.mulf %1293, %57 : vector<8x16xf32>
    %1295 = arith.addf %1291, %1294 : vector<8x16xf32>
    %c266 = arith.constant 266 : index
    %1296 = memref.load %arg3[%c266] : memref<432xf32, #tpu.memory_space<smem>>
    %1297 = vector.broadcast %1296 : f32 to vector<8x16xf32>
    %1298 = arith.mulf %1297, %59 : vector<8x16xf32>
    %1299 = arith.addf %1295, %1298 : vector<8x16xf32>
    %c282 = arith.constant 282 : index
    %1300 = memref.load %arg3[%c282] : memref<432xf32, #tpu.memory_space<smem>>
    %1301 = vector.broadcast %1300 : f32 to vector<8x16xf32>
    %1302 = arith.mulf %1301, %61 : vector<8x16xf32>
    %1303 = arith.addf %1299, %1302 : vector<8x16xf32>
    %c298 = arith.constant 298 : index
    %1304 = memref.load %arg3[%c298] : memref<432xf32, #tpu.memory_space<smem>>
    %1305 = vector.broadcast %1304 : f32 to vector<8x16xf32>
    %1306 = arith.mulf %1305, %63 : vector<8x16xf32>
    %1307 = arith.addf %1303, %1306 : vector<8x16xf32>
    %c314 = arith.constant 314 : index
    %1308 = memref.load %arg3[%c314] : memref<432xf32, #tpu.memory_space<smem>>
    %1309 = vector.broadcast %1308 : f32 to vector<8x16xf32>
    %1310 = arith.mulf %1309, %65 : vector<8x16xf32>
    %1311 = arith.addf %1307, %1310 : vector<8x16xf32>
    %c330 = arith.constant 330 : index
    %1312 = memref.load %arg3[%c330] : memref<432xf32, #tpu.memory_space<smem>>
    %1313 = vector.broadcast %1312 : f32 to vector<8x16xf32>
    %1314 = arith.mulf %1313, %67 : vector<8x16xf32>
    %1315 = arith.addf %1311, %1314 : vector<8x16xf32>
    %c346 = arith.constant 346 : index
    %1316 = memref.load %arg3[%c346] : memref<432xf32, #tpu.memory_space<smem>>
    %1317 = vector.broadcast %1316 : f32 to vector<8x16xf32>
    %1318 = arith.mulf %1317, %69 : vector<8x16xf32>
    %1319 = arith.addf %1315, %1318 : vector<8x16xf32>
    %c362 = arith.constant 362 : index
    %1320 = memref.load %arg3[%c362] : memref<432xf32, #tpu.memory_space<smem>>
    %1321 = vector.broadcast %1320 : f32 to vector<8x16xf32>
    %1322 = arith.mulf %1321, %71 : vector<8x16xf32>
    %1323 = arith.addf %1319, %1322 : vector<8x16xf32>
    %c378 = arith.constant 378 : index
    %1324 = memref.load %arg3[%c378] : memref<432xf32, #tpu.memory_space<smem>>
    %1325 = vector.broadcast %1324 : f32 to vector<8x16xf32>
    %1326 = arith.mulf %1325, %73 : vector<8x16xf32>
    %1327 = arith.addf %1323, %1326 : vector<8x16xf32>
    %c394 = arith.constant 394 : index
    %1328 = memref.load %arg3[%c394] : memref<432xf32, #tpu.memory_space<smem>>
    %1329 = vector.broadcast %1328 : f32 to vector<8x16xf32>
    %1330 = arith.mulf %1329, %75 : vector<8x16xf32>
    %1331 = arith.addf %1327, %1330 : vector<8x16xf32>
    %c410 = arith.constant 410 : index
    %1332 = memref.load %arg3[%c410] : memref<432xf32, #tpu.memory_space<smem>>
    %1333 = vector.broadcast %1332 : f32 to vector<8x16xf32>
    %1334 = arith.mulf %1333, %77 : vector<8x16xf32>
    %1335 = arith.addf %1331, %1334 : vector<8x16xf32>
    %c426 = arith.constant 426 : index
    %1336 = memref.load %arg3[%c426] : memref<432xf32, #tpu.memory_space<smem>>
    %1337 = vector.broadcast %1336 : f32 to vector<8x16xf32>
    %1338 = arith.mulf %1337, %79 : vector<8x16xf32>
    %1339 = arith.addf %1335, %1338 : vector<8x16xf32>
    %cst_168 = arith.constant 0.000000e+00 : f32
    %1340 = vector.broadcast %cst_168 : f32 to vector<8x16xf32>
    %1341 = arith.maximumf %1339, %1340 : vector<8x16xf32>
    %c0_169 = arith.constant 0 : index
    %c10_170 = arith.constant 10 : index
    %c0_171 = arith.constant 0 : index
    %c0_172 = arith.constant 0 : index
    %1342 = vector.load %arg5[%c0_169, %c10_170, %c0_171, %c0_172] : memref<1x16x8x16xf32, #tpu.memory_space<vmem>>, vector<1x1x8x16xf32>
    %1343 = vector.shape_cast %1342 : vector<1x1x8x16xf32> to vector<8x16xf32>
    %1344 = vector.shape_cast %1341 : vector<8x16xf32> to vector<1x1x8x16xf32>
    tpu.vector_store %arg5[%c0_169, %c10_170, %c0_171, %c0_172], %1344 {strides = array<i32>} : memref<1x16x8x16xf32, #tpu.memory_space<vmem>>, vector<1x1x8x16xf32>,
    %c11 = arith.constant 11 : index
    %1345 = memref.load %arg4[%c11] : memref<16xf32, #tpu.memory_space<smem>>
    %1346 = vector.broadcast %1345 : f32 to vector<8x16xf32>
    %c11_173 = arith.constant 11 : index
    %1347 = memref.load %arg3[%c11_173] : memref<432xf32, #tpu.memory_space<smem>>
    %1348 = vector.broadcast %1347 : f32 to vector<8x16xf32>
    %1349 = arith.mulf %1348, %27 : vector<8x16xf32>
    %1350 = arith.addf %1346, %1349 : vector<8x16xf32>
    %c27 = arith.constant 27 : index
    %1351 = memref.load %arg3[%c27] : memref<432xf32, #tpu.memory_space<smem>>
    %1352 = vector.broadcast %1351 : f32 to vector<8x16xf32>
    %1353 = arith.mulf %1352, %29 : vector<8x16xf32>
    %1354 = arith.addf %1350, %1353 : vector<8x16xf32>
    %c43 = arith.constant 43 : index
    %1355 = memref.load %arg3[%c43] : memref<432xf32, #tpu.memory_space<smem>>
    %1356 = vector.broadcast %1355 : f32 to vector<8x16xf32>
    %1357 = arith.mulf %1356, %31 : vector<8x16xf32>
    %1358 = arith.addf %1354, %1357 : vector<8x16xf32>
    %c59 = arith.constant 59 : index
    %1359 = memref.load %arg3[%c59] : memref<432xf32, #tpu.memory_space<smem>>
    %1360 = vector.broadcast %1359 : f32 to vector<8x16xf32>
    %1361 = arith.mulf %1360, %33 : vector<8x16xf32>
    %1362 = arith.addf %1358, %1361 : vector<8x16xf32>
    %c75 = arith.constant 75 : index
    %1363 = memref.load %arg3[%c75] : memref<432xf32, #tpu.memory_space<smem>>
    %1364 = vector.broadcast %1363 : f32 to vector<8x16xf32>
    %1365 = arith.mulf %1364, %35 : vector<8x16xf32>
    %1366 = arith.addf %1362, %1365 : vector<8x16xf32>
    %c91 = arith.constant 91 : index
    %1367 = memref.load %arg3[%c91] : memref<432xf32, #tpu.memory_space<smem>>
    %1368 = vector.broadcast %1367 : f32 to vector<8x16xf32>
    %1369 = arith.mulf %1368, %37 : vector<8x16xf32>
    %1370 = arith.addf %1366, %1369 : vector<8x16xf32>
    %c107 = arith.constant 107 : index
    %1371 = memref.load %arg3[%c107] : memref<432xf32, #tpu.memory_space<smem>>
    %1372 = vector.broadcast %1371 : f32 to vector<8x16xf32>
    %1373 = arith.mulf %1372, %39 : vector<8x16xf32>
    %1374 = arith.addf %1370, %1373 : vector<8x16xf32>
    %c123 = arith.constant 123 : index
    %1375 = memref.load %arg3[%c123] : memref<432xf32, #tpu.memory_space<smem>>
    %1376 = vector.broadcast %1375 : f32 to vector<8x16xf32>
    %1377 = arith.mulf %1376, %41 : vector<8x16xf32>
    %1378 = arith.addf %1374, %1377 : vector<8x16xf32>
    %c139 = arith.constant 139 : index
    %1379 = memref.load %arg3[%c139] : memref<432xf32, #tpu.memory_space<smem>>
    %1380 = vector.broadcast %1379 : f32 to vector<8x16xf32>
    %1381 = arith.mulf %1380, %43 : vector<8x16xf32>
    %1382 = arith.addf %1378, %1381 : vector<8x16xf32>
    %c155 = arith.constant 155 : index
    %1383 = memref.load %arg3[%c155] : memref<432xf32, #tpu.memory_space<smem>>
    %1384 = vector.broadcast %1383 : f32 to vector<8x16xf32>
    %1385 = arith.mulf %1384, %45 : vector<8x16xf32>
    %1386 = arith.addf %1382, %1385 : vector<8x16xf32>
    %c171 = arith.constant 171 : index
    %1387 = memref.load %arg3[%c171] : memref<432xf32, #tpu.memory_space<smem>>
    %1388 = vector.broadcast %1387 : f32 to vector<8x16xf32>
    %1389 = arith.mulf %1388, %47 : vector<8x16xf32>
    %1390 = arith.addf %1386, %1389 : vector<8x16xf32>
    %c187 = arith.constant 187 : index
    %1391 = memref.load %arg3[%c187] : memref<432xf32, #tpu.memory_space<smem>>
    %1392 = vector.broadcast %1391 : f32 to vector<8x16xf32>
    %1393 = arith.mulf %1392, %49 : vector<8x16xf32>
    %1394 = arith.addf %1390, %1393 : vector<8x16xf32>
    %c203 = arith.constant 203 : index
    %1395 = memref.load %arg3[%c203] : memref<432xf32, #tpu.memory_space<smem>>
    %1396 = vector.broadcast %1395 : f32 to vector<8x16xf32>
    %1397 = arith.mulf %1396, %51 : vector<8x16xf32>
    %1398 = arith.addf %1394, %1397 : vector<8x16xf32>
    %c219 = arith.constant 219 : index
    %1399 = memref.load %arg3[%c219] : memref<432xf32, #tpu.memory_space<smem>>
    %1400 = vector.broadcast %1399 : f32 to vector<8x16xf32>
    %1401 = arith.mulf %1400, %53 : vector<8x16xf32>
    %1402 = arith.addf %1398, %1401 : vector<8x16xf32>
    %c235 = arith.constant 235 : index
    %1403 = memref.load %arg3[%c235] : memref<432xf32, #tpu.memory_space<smem>>
    %1404 = vector.broadcast %1403 : f32 to vector<8x16xf32>
    %1405 = arith.mulf %1404, %55 : vector<8x16xf32>
    %1406 = arith.addf %1402, %1405 : vector<8x16xf32>
    %c251 = arith.constant 251 : index
    %1407 = memref.load %arg3[%c251] : memref<432xf32, #tpu.memory_space<smem>>
    %1408 = vector.broadcast %1407 : f32 to vector<8x16xf32>
    %1409 = arith.mulf %1408, %57 : vector<8x16xf32>
    %1410 = arith.addf %1406, %1409 : vector<8x16xf32>
    %c267 = arith.constant 267 : index
    %1411 = memref.load %arg3[%c267] : memref<432xf32, #tpu.memory_space<smem>>
    %1412 = vector.broadcast %1411 : f32 to vector<8x16xf32>
    %1413 = arith.mulf %1412, %59 : vector<8x16xf32>
    %1414 = arith.addf %1410, %1413 : vector<8x16xf32>
    %c283 = arith.constant 283 : index
    %1415 = memref.load %arg3[%c283] : memref<432xf32, #tpu.memory_space<smem>>
    %1416 = vector.broadcast %1415 : f32 to vector<8x16xf32>
    %1417 = arith.mulf %1416, %61 : vector<8x16xf32>
    %1418 = arith.addf %1414, %1417 : vector<8x16xf32>
    %c299 = arith.constant 299 : index
    %1419 = memref.load %arg3[%c299] : memref<432xf32, #tpu.memory_space<smem>>
    %1420 = vector.broadcast %1419 : f32 to vector<8x16xf32>
    %1421 = arith.mulf %1420, %63 : vector<8x16xf32>
    %1422 = arith.addf %1418, %1421 : vector<8x16xf32>
    %c315 = arith.constant 315 : index
    %1423 = memref.load %arg3[%c315] : memref<432xf32, #tpu.memory_space<smem>>
    %1424 = vector.broadcast %1423 : f32 to vector<8x16xf32>
    %1425 = arith.mulf %1424, %65 : vector<8x16xf32>
    %1426 = arith.addf %1422, %1425 : vector<8x16xf32>
    %c331 = arith.constant 331 : index
    %1427 = memref.load %arg3[%c331] : memref<432xf32, #tpu.memory_space<smem>>
    %1428 = vector.broadcast %1427 : f32 to vector<8x16xf32>
    %1429 = arith.mulf %1428, %67 : vector<8x16xf32>
    %1430 = arith.addf %1426, %1429 : vector<8x16xf32>
    %c347 = arith.constant 347 : index
    %1431 = memref.load %arg3[%c347] : memref<432xf32, #tpu.memory_space<smem>>
    %1432 = vector.broadcast %1431 : f32 to vector<8x16xf32>
    %1433 = arith.mulf %1432, %69 : vector<8x16xf32>
    %1434 = arith.addf %1430, %1433 : vector<8x16xf32>
    %c363 = arith.constant 363 : index
    %1435 = memref.load %arg3[%c363] : memref<432xf32, #tpu.memory_space<smem>>
    %1436 = vector.broadcast %1435 : f32 to vector<8x16xf32>
    %1437 = arith.mulf %1436, %71 : vector<8x16xf32>
    %1438 = arith.addf %1434, %1437 : vector<8x16xf32>
    %c379 = arith.constant 379 : index
    %1439 = memref.load %arg3[%c379] : memref<432xf32, #tpu.memory_space<smem>>
    %1440 = vector.broadcast %1439 : f32 to vector<8x16xf32>
    %1441 = arith.mulf %1440, %73 : vector<8x16xf32>
    %1442 = arith.addf %1438, %1441 : vector<8x16xf32>
    %c395 = arith.constant 395 : index
    %1443 = memref.load %arg3[%c395] : memref<432xf32, #tpu.memory_space<smem>>
    %1444 = vector.broadcast %1443 : f32 to vector<8x16xf32>
    %1445 = arith.mulf %1444, %75 : vector<8x16xf32>
    %1446 = arith.addf %1442, %1445 : vector<8x16xf32>
    %c411 = arith.constant 411 : index
    %1447 = memref.load %arg3[%c411] : memref<432xf32, #tpu.memory_space<smem>>
    %1448 = vector.broadcast %1447 : f32 to vector<8x16xf32>
    %1449 = arith.mulf %1448, %77 : vector<8x16xf32>
    %1450 = arith.addf %1446, %1449 : vector<8x16xf32>
    %c427 = arith.constant 427 : index
    %1451 = memref.load %arg3[%c427] : memref<432xf32, #tpu.memory_space<smem>>
    %1452 = vector.broadcast %1451 : f32 to vector<8x16xf32>
    %1453 = arith.mulf %1452, %79 : vector<8x16xf32>
    %1454 = arith.addf %1450, %1453 : vector<8x16xf32>
    %cst_174 = arith.constant 0.000000e+00 : f32
    %1455 = vector.broadcast %cst_174 : f32 to vector<8x16xf32>
    %1456 = arith.maximumf %1454, %1455 : vector<8x16xf32>
    %c0_175 = arith.constant 0 : index
    %c11_176 = arith.constant 11 : index
    %c0_177 = arith.constant 0 : index
    %c0_178 = arith.constant 0 : index
    %1457 = vector.load %arg5[%c0_175, %c11_176, %c0_177, %c0_178] : memref<1x16x8x16xf32, #tpu.memory_space<vmem>>, vector<1x1x8x16xf32>
    %1458 = vector.shape_cast %1457 : vector<1x1x8x16xf32> to vector<8x16xf32>
    %1459 = vector.shape_cast %1456 : vector<8x16xf32> to vector<1x1x8x16xf32>
    tpu.vector_store %arg5[%c0_175, %c11_176, %c0_177, %c0_178], %1459 {strides = array<i32>} : memref<1x16x8x16xf32, #tpu.memory_space<vmem>>, vector<1x1x8x16xf32>,
    %c12 = arith.constant 12 : index
    %1460 = memref.load %arg4[%c12] : memref<16xf32, #tpu.memory_space<smem>>
    %1461 = vector.broadcast %1460 : f32 to vector<8x16xf32>
    %c12_179 = arith.constant 12 : index
    %1462 = memref.load %arg3[%c12_179] : memref<432xf32, #tpu.memory_space<smem>>
    %1463 = vector.broadcast %1462 : f32 to vector<8x16xf32>
    %1464 = arith.mulf %1463, %27 : vector<8x16xf32>
    %1465 = arith.addf %1461, %1464 : vector<8x16xf32>
    %c28 = arith.constant 28 : index
    %1466 = memref.load %arg3[%c28] : memref<432xf32, #tpu.memory_space<smem>>
    %1467 = vector.broadcast %1466 : f32 to vector<8x16xf32>
    %1468 = arith.mulf %1467, %29 : vector<8x16xf32>
    %1469 = arith.addf %1465, %1468 : vector<8x16xf32>
    %c44 = arith.constant 44 : index
    %1470 = memref.load %arg3[%c44] : memref<432xf32, #tpu.memory_space<smem>>
    %1471 = vector.broadcast %1470 : f32 to vector<8x16xf32>
    %1472 = arith.mulf %1471, %31 : vector<8x16xf32>
    %1473 = arith.addf %1469, %1472 : vector<8x16xf32>
    %c60 = arith.constant 60 : index
    %1474 = memref.load %arg3[%c60] : memref<432xf32, #tpu.memory_space<smem>>
    %1475 = vector.broadcast %1474 : f32 to vector<8x16xf32>
    %1476 = arith.mulf %1475, %33 : vector<8x16xf32>
    %1477 = arith.addf %1473, %1476 : vector<8x16xf32>
    %c76 = arith.constant 76 : index
    %1478 = memref.load %arg3[%c76] : memref<432xf32, #tpu.memory_space<smem>>
    %1479 = vector.broadcast %1478 : f32 to vector<8x16xf32>
    %1480 = arith.mulf %1479, %35 : vector<8x16xf32>
    %1481 = arith.addf %1477, %1480 : vector<8x16xf32>
    %c92 = arith.constant 92 : index
    %1482 = memref.load %arg3[%c92] : memref<432xf32, #tpu.memory_space<smem>>
    %1483 = vector.broadcast %1482 : f32 to vector<8x16xf32>
    %1484 = arith.mulf %1483, %37 : vector<8x16xf32>
    %1485 = arith.addf %1481, %1484 : vector<8x16xf32>
    %c108 = arith.constant 108 : index
    %1486 = memref.load %arg3[%c108] : memref<432xf32, #tpu.memory_space<smem>>
    %1487 = vector.broadcast %1486 : f32 to vector<8x16xf32>
    %1488 = arith.mulf %1487, %39 : vector<8x16xf32>
    %1489 = arith.addf %1485, %1488 : vector<8x16xf32>
    %c124 = arith.constant 124 : index
    %1490 = memref.load %arg3[%c124] : memref<432xf32, #tpu.memory_space<smem>>
    %1491 = vector.broadcast %1490 : f32 to vector<8x16xf32>
    %1492 = arith.mulf %1491, %41 : vector<8x16xf32>
    %1493 = arith.addf %1489, %1492 : vector<8x16xf32>
    %c140 = arith.constant 140 : index
    %1494 = memref.load %arg3[%c140] : memref<432xf32, #tpu.memory_space<smem>>
    %1495 = vector.broadcast %1494 : f32 to vector<8x16xf32>
    %1496 = arith.mulf %1495, %43 : vector<8x16xf32>
    %1497 = arith.addf %1493, %1496 : vector<8x16xf32>
    %c156 = arith.constant 156 : index
    %1498 = memref.load %arg3[%c156] : memref<432xf32, #tpu.memory_space<smem>>
    %1499 = vector.broadcast %1498 : f32 to vector<8x16xf32>
    %1500 = arith.mulf %1499, %45 : vector<8x16xf32>
    %1501 = arith.addf %1497, %1500 : vector<8x16xf32>
    %c172 = arith.constant 172 : index
    %1502 = memref.load %arg3[%c172] : memref<432xf32, #tpu.memory_space<smem>>
    %1503 = vector.broadcast %1502 : f32 to vector<8x16xf32>
    %1504 = arith.mulf %1503, %47 : vector<8x16xf32>
    %1505 = arith.addf %1501, %1504 : vector<8x16xf32>
    %c188 = arith.constant 188 : index
    %1506 = memref.load %arg3[%c188] : memref<432xf32, #tpu.memory_space<smem>>
    %1507 = vector.broadcast %1506 : f32 to vector<8x16xf32>
    %1508 = arith.mulf %1507, %49 : vector<8x16xf32>
    %1509 = arith.addf %1505, %1508 : vector<8x16xf32>
    %c204 = arith.constant 204 : index
    %1510 = memref.load %arg3[%c204] : memref<432xf32, #tpu.memory_space<smem>>
    %1511 = vector.broadcast %1510 : f32 to vector<8x16xf32>
    %1512 = arith.mulf %1511, %51 : vector<8x16xf32>
    %1513 = arith.addf %1509, %1512 : vector<8x16xf32>
    %c220 = arith.constant 220 : index
    %1514 = memref.load %arg3[%c220] : memref<432xf32, #tpu.memory_space<smem>>
    %1515 = vector.broadcast %1514 : f32 to vector<8x16xf32>
    %1516 = arith.mulf %1515, %53 : vector<8x16xf32>
    %1517 = arith.addf %1513, %1516 : vector<8x16xf32>
    %c236 = arith.constant 236 : index
    %1518 = memref.load %arg3[%c236] : memref<432xf32, #tpu.memory_space<smem>>
    %1519 = vector.broadcast %1518 : f32 to vector<8x16xf32>
    %1520 = arith.mulf %1519, %55 : vector<8x16xf32>
    %1521 = arith.addf %1517, %1520 : vector<8x16xf32>
    %c252 = arith.constant 252 : index
    %1522 = memref.load %arg3[%c252] : memref<432xf32, #tpu.memory_space<smem>>
    %1523 = vector.broadcast %1522 : f32 to vector<8x16xf32>
    %1524 = arith.mulf %1523, %57 : vector<8x16xf32>
    %1525 = arith.addf %1521, %1524 : vector<8x16xf32>
    %c268 = arith.constant 268 : index
    %1526 = memref.load %arg3[%c268] : memref<432xf32, #tpu.memory_space<smem>>
    %1527 = vector.broadcast %1526 : f32 to vector<8x16xf32>
    %1528 = arith.mulf %1527, %59 : vector<8x16xf32>
    %1529 = arith.addf %1525, %1528 : vector<8x16xf32>
    %c284 = arith.constant 284 : index
    %1530 = memref.load %arg3[%c284] : memref<432xf32, #tpu.memory_space<smem>>
    %1531 = vector.broadcast %1530 : f32 to vector<8x16xf32>
    %1532 = arith.mulf %1531, %61 : vector<8x16xf32>
    %1533 = arith.addf %1529, %1532 : vector<8x16xf32>
    %c300 = arith.constant 300 : index
    %1534 = memref.load %arg3[%c300] : memref<432xf32, #tpu.memory_space<smem>>
    %1535 = vector.broadcast %1534 : f32 to vector<8x16xf32>
    %1536 = arith.mulf %1535, %63 : vector<8x16xf32>
    %1537 = arith.addf %1533, %1536 : vector<8x16xf32>
    %c316 = arith.constant 316 : index
    %1538 = memref.load %arg3[%c316] : memref<432xf32, #tpu.memory_space<smem>>
    %1539 = vector.broadcast %1538 : f32 to vector<8x16xf32>
    %1540 = arith.mulf %1539, %65 : vector<8x16xf32>
    %1541 = arith.addf %1537, %1540 : vector<8x16xf32>
    %c332 = arith.constant 332 : index
    %1542 = memref.load %arg3[%c332] : memref<432xf32, #tpu.memory_space<smem>>
    %1543 = vector.broadcast %1542 : f32 to vector<8x16xf32>
    %1544 = arith.mulf %1543, %67 : vector<8x16xf32>
    %1545 = arith.addf %1541, %1544 : vector<8x16xf32>
    %c348 = arith.constant 348 : index
    %1546 = memref.load %arg3[%c348] : memref<432xf32, #tpu.memory_space<smem>>
    %1547 = vector.broadcast %1546 : f32 to vector<8x16xf32>
    %1548 = arith.mulf %1547, %69 : vector<8x16xf32>
    %1549 = arith.addf %1545, %1548 : vector<8x16xf32>
    %c364 = arith.constant 364 : index
    %1550 = memref.load %arg3[%c364] : memref<432xf32, #tpu.memory_space<smem>>
    %1551 = vector.broadcast %1550 : f32 to vector<8x16xf32>
    %1552 = arith.mulf %1551, %71 : vector<8x16xf32>
    %1553 = arith.addf %1549, %1552 : vector<8x16xf32>
    %c380 = arith.constant 380 : index
    %1554 = memref.load %arg3[%c380] : memref<432xf32, #tpu.memory_space<smem>>
    %1555 = vector.broadcast %1554 : f32 to vector<8x16xf32>
    %1556 = arith.mulf %1555, %73 : vector<8x16xf32>
    %1557 = arith.addf %1553, %1556 : vector<8x16xf32>
    %c396 = arith.constant 396 : index
    %1558 = memref.load %arg3[%c396] : memref<432xf32, #tpu.memory_space<smem>>
    %1559 = vector.broadcast %1558 : f32 to vector<8x16xf32>
    %1560 = arith.mulf %1559, %75 : vector<8x16xf32>
    %1561 = arith.addf %1557, %1560 : vector<8x16xf32>
    %c412 = arith.constant 412 : index
    %1562 = memref.load %arg3[%c412] : memref<432xf32, #tpu.memory_space<smem>>
    %1563 = vector.broadcast %1562 : f32 to vector<8x16xf32>
    %1564 = arith.mulf %1563, %77 : vector<8x16xf32>
    %1565 = arith.addf %1561, %1564 : vector<8x16xf32>
    %c428 = arith.constant 428 : index
    %1566 = memref.load %arg3[%c428] : memref<432xf32, #tpu.memory_space<smem>>
    %1567 = vector.broadcast %1566 : f32 to vector<8x16xf32>
    %1568 = arith.mulf %1567, %79 : vector<8x16xf32>
    %1569 = arith.addf %1565, %1568 : vector<8x16xf32>
    %cst_180 = arith.constant 0.000000e+00 : f32
    %1570 = vector.broadcast %cst_180 : f32 to vector<8x16xf32>
    %1571 = arith.maximumf %1569, %1570 : vector<8x16xf32>
    %c0_181 = arith.constant 0 : index
    %c12_182 = arith.constant 12 : index
    %c0_183 = arith.constant 0 : index
    %c0_184 = arith.constant 0 : index
    %1572 = vector.load %arg5[%c0_181, %c12_182, %c0_183, %c0_184] : memref<1x16x8x16xf32, #tpu.memory_space<vmem>>, vector<1x1x8x16xf32>
    %1573 = vector.shape_cast %1572 : vector<1x1x8x16xf32> to vector<8x16xf32>
    %1574 = vector.shape_cast %1571 : vector<8x16xf32> to vector<1x1x8x16xf32>
    tpu.vector_store %arg5[%c0_181, %c12_182, %c0_183, %c0_184], %1574 {strides = array<i32>} : memref<1x16x8x16xf32, #tpu.memory_space<vmem>>, vector<1x1x8x16xf32>,
    %c13 = arith.constant 13 : index
    %1575 = memref.load %arg4[%c13] : memref<16xf32, #tpu.memory_space<smem>>
    %1576 = vector.broadcast %1575 : f32 to vector<8x16xf32>
    %c13_185 = arith.constant 13 : index
    %1577 = memref.load %arg3[%c13_185] : memref<432xf32, #tpu.memory_space<smem>>
    %1578 = vector.broadcast %1577 : f32 to vector<8x16xf32>
    %1579 = arith.mulf %1578, %27 : vector<8x16xf32>
    %1580 = arith.addf %1576, %1579 : vector<8x16xf32>
    %c29 = arith.constant 29 : index
    %1581 = memref.load %arg3[%c29] : memref<432xf32, #tpu.memory_space<smem>>
    %1582 = vector.broadcast %1581 : f32 to vector<8x16xf32>
    %1583 = arith.mulf %1582, %29 : vector<8x16xf32>
    %1584 = arith.addf %1580, %1583 : vector<8x16xf32>
    %c45 = arith.constant 45 : index
    %1585 = memref.load %arg3[%c45] : memref<432xf32, #tpu.memory_space<smem>>
    %1586 = vector.broadcast %1585 : f32 to vector<8x16xf32>
    %1587 = arith.mulf %1586, %31 : vector<8x16xf32>
    %1588 = arith.addf %1584, %1587 : vector<8x16xf32>
    %c61 = arith.constant 61 : index
    %1589 = memref.load %arg3[%c61] : memref<432xf32, #tpu.memory_space<smem>>
    %1590 = vector.broadcast %1589 : f32 to vector<8x16xf32>
    %1591 = arith.mulf %1590, %33 : vector<8x16xf32>
    %1592 = arith.addf %1588, %1591 : vector<8x16xf32>
    %c77 = arith.constant 77 : index
    %1593 = memref.load %arg3[%c77] : memref<432xf32, #tpu.memory_space<smem>>
    %1594 = vector.broadcast %1593 : f32 to vector<8x16xf32>
    %1595 = arith.mulf %1594, %35 : vector<8x16xf32>
    %1596 = arith.addf %1592, %1595 : vector<8x16xf32>
    %c93 = arith.constant 93 : index
    %1597 = memref.load %arg3[%c93] : memref<432xf32, #tpu.memory_space<smem>>
    %1598 = vector.broadcast %1597 : f32 to vector<8x16xf32>
    %1599 = arith.mulf %1598, %37 : vector<8x16xf32>
    %1600 = arith.addf %1596, %1599 : vector<8x16xf32>
    %c109 = arith.constant 109 : index
    %1601 = memref.load %arg3[%c109] : memref<432xf32, #tpu.memory_space<smem>>
    %1602 = vector.broadcast %1601 : f32 to vector<8x16xf32>
    %1603 = arith.mulf %1602, %39 : vector<8x16xf32>
    %1604 = arith.addf %1600, %1603 : vector<8x16xf32>
    %c125 = arith.constant 125 : index
    %1605 = memref.load %arg3[%c125] : memref<432xf32, #tpu.memory_space<smem>>
    %1606 = vector.broadcast %1605 : f32 to vector<8x16xf32>
    %1607 = arith.mulf %1606, %41 : vector<8x16xf32>
    %1608 = arith.addf %1604, %1607 : vector<8x16xf32>
    %c141 = arith.constant 141 : index
    %1609 = memref.load %arg3[%c141] : memref<432xf32, #tpu.memory_space<smem>>
    %1610 = vector.broadcast %1609 : f32 to vector<8x16xf32>
    %1611 = arith.mulf %1610, %43 : vector<8x16xf32>
    %1612 = arith.addf %1608, %1611 : vector<8x16xf32>
    %c157 = arith.constant 157 : index
    %1613 = memref.load %arg3[%c157] : memref<432xf32, #tpu.memory_space<smem>>
    %1614 = vector.broadcast %1613 : f32 to vector<8x16xf32>
    %1615 = arith.mulf %1614, %45 : vector<8x16xf32>
    %1616 = arith.addf %1612, %1615 : vector<8x16xf32>
    %c173 = arith.constant 173 : index
    %1617 = memref.load %arg3[%c173] : memref<432xf32, #tpu.memory_space<smem>>
    %1618 = vector.broadcast %1617 : f32 to vector<8x16xf32>
    %1619 = arith.mulf %1618, %47 : vector<8x16xf32>
    %1620 = arith.addf %1616, %1619 : vector<8x16xf32>
    %c189 = arith.constant 189 : index
    %1621 = memref.load %arg3[%c189] : memref<432xf32, #tpu.memory_space<smem>>
    %1622 = vector.broadcast %1621 : f32 to vector<8x16xf32>
    %1623 = arith.mulf %1622, %49 : vector<8x16xf32>
    %1624 = arith.addf %1620, %1623 : vector<8x16xf32>
    %c205 = arith.constant 205 : index
    %1625 = memref.load %arg3[%c205] : memref<432xf32, #tpu.memory_space<smem>>
    %1626 = vector.broadcast %1625 : f32 to vector<8x16xf32>
    %1627 = arith.mulf %1626, %51 : vector<8x16xf32>
    %1628 = arith.addf %1624, %1627 : vector<8x16xf32>
    %c221 = arith.constant 221 : index
    %1629 = memref.load %arg3[%c221] : memref<432xf32, #tpu.memory_space<smem>>
    %1630 = vector.broadcast %1629 : f32 to vector<8x16xf32>
    %1631 = arith.mulf %1630, %53 : vector<8x16xf32>
    %1632 = arith.addf %1628, %1631 : vector<8x16xf32>
    %c237 = arith.constant 237 : index
    %1633 = memref.load %arg3[%c237] : memref<432xf32, #tpu.memory_space<smem>>
    %1634 = vector.broadcast %1633 : f32 to vector<8x16xf32>
    %1635 = arith.mulf %1634, %55 : vector<8x16xf32>
    %1636 = arith.addf %1632, %1635 : vector<8x16xf32>
    %c253 = arith.constant 253 : index
    %1637 = memref.load %arg3[%c253] : memref<432xf32, #tpu.memory_space<smem>>
    %1638 = vector.broadcast %1637 : f32 to vector<8x16xf32>
    %1639 = arith.mulf %1638, %57 : vector<8x16xf32>
    %1640 = arith.addf %1636, %1639 : vector<8x16xf32>
    %c269 = arith.constant 269 : index
    %1641 = memref.load %arg3[%c269] : memref<432xf32, #tpu.memory_space<smem>>
    %1642 = vector.broadcast %1641 : f32 to vector<8x16xf32>
    %1643 = arith.mulf %1642, %59 : vector<8x16xf32>
    %1644 = arith.addf %1640, %1643 : vector<8x16xf32>
    %c285 = arith.constant 285 : index
    %1645 = memref.load %arg3[%c285] : memref<432xf32, #tpu.memory_space<smem>>
    %1646 = vector.broadcast %1645 : f32 to vector<8x16xf32>
    %1647 = arith.mulf %1646, %61 : vector<8x16xf32>
    %1648 = arith.addf %1644, %1647 : vector<8x16xf32>
    %c301 = arith.constant 301 : index
    %1649 = memref.load %arg3[%c301] : memref<432xf32, #tpu.memory_space<smem>>
    %1650 = vector.broadcast %1649 : f32 to vector<8x16xf32>
    %1651 = arith.mulf %1650, %63 : vector<8x16xf32>
    %1652 = arith.addf %1648, %1651 : vector<8x16xf32>
    %c317 = arith.constant 317 : index
    %1653 = memref.load %arg3[%c317] : memref<432xf32, #tpu.memory_space<smem>>
    %1654 = vector.broadcast %1653 : f32 to vector<8x16xf32>
    %1655 = arith.mulf %1654, %65 : vector<8x16xf32>
    %1656 = arith.addf %1652, %1655 : vector<8x16xf32>
    %c333 = arith.constant 333 : index
    %1657 = memref.load %arg3[%c333] : memref<432xf32, #tpu.memory_space<smem>>
    %1658 = vector.broadcast %1657 : f32 to vector<8x16xf32>
    %1659 = arith.mulf %1658, %67 : vector<8x16xf32>
    %1660 = arith.addf %1656, %1659 : vector<8x16xf32>
    %c349 = arith.constant 349 : index
    %1661 = memref.load %arg3[%c349] : memref<432xf32, #tpu.memory_space<smem>>
    %1662 = vector.broadcast %1661 : f32 to vector<8x16xf32>
    %1663 = arith.mulf %1662, %69 : vector<8x16xf32>
    %1664 = arith.addf %1660, %1663 : vector<8x16xf32>
    %c365 = arith.constant 365 : index
    %1665 = memref.load %arg3[%c365] : memref<432xf32, #tpu.memory_space<smem>>
    %1666 = vector.broadcast %1665 : f32 to vector<8x16xf32>
    %1667 = arith.mulf %1666, %71 : vector<8x16xf32>
    %1668 = arith.addf %1664, %1667 : vector<8x16xf32>
    %c381 = arith.constant 381 : index
    %1669 = memref.load %arg3[%c381] : memref<432xf32, #tpu.memory_space<smem>>
    %1670 = vector.broadcast %1669 : f32 to vector<8x16xf32>
    %1671 = arith.mulf %1670, %73 : vector<8x16xf32>
    %1672 = arith.addf %1668, %1671 : vector<8x16xf32>
    %c397 = arith.constant 397 : index
    %1673 = memref.load %arg3[%c397] : memref<432xf32, #tpu.memory_space<smem>>
    %1674 = vector.broadcast %1673 : f32 to vector<8x16xf32>
    %1675 = arith.mulf %1674, %75 : vector<8x16xf32>
    %1676 = arith.addf %1672, %1675 : vector<8x16xf32>
    %c413 = arith.constant 413 : index
    %1677 = memref.load %arg3[%c413] : memref<432xf32, #tpu.memory_space<smem>>
    %1678 = vector.broadcast %1677 : f32 to vector<8x16xf32>
    %1679 = arith.mulf %1678, %77 : vector<8x16xf32>
    %1680 = arith.addf %1676, %1679 : vector<8x16xf32>
    %c429 = arith.constant 429 : index
    %1681 = memref.load %arg3[%c429] : memref<432xf32, #tpu.memory_space<smem>>
    %1682 = vector.broadcast %1681 : f32 to vector<8x16xf32>
    %1683 = arith.mulf %1682, %79 : vector<8x16xf32>
    %1684 = arith.addf %1680, %1683 : vector<8x16xf32>
    %cst_186 = arith.constant 0.000000e+00 : f32
    %1685 = vector.broadcast %cst_186 : f32 to vector<8x16xf32>
    %1686 = arith.maximumf %1684, %1685 : vector<8x16xf32>
    %c0_187 = arith.constant 0 : index
    %c13_188 = arith.constant 13 : index
    %c0_189 = arith.constant 0 : index
    %c0_190 = arith.constant 0 : index
    %1687 = vector.load %arg5[%c0_187, %c13_188, %c0_189, %c0_190] : memref<1x16x8x16xf32, #tpu.memory_space<vmem>>, vector<1x1x8x16xf32>
    %1688 = vector.shape_cast %1687 : vector<1x1x8x16xf32> to vector<8x16xf32>
    %1689 = vector.shape_cast %1686 : vector<8x16xf32> to vector<1x1x8x16xf32>
    tpu.vector_store %arg5[%c0_187, %c13_188, %c0_189, %c0_190], %1689 {strides = array<i32>} : memref<1x16x8x16xf32, #tpu.memory_space<vmem>>, vector<1x1x8x16xf32>,
    %c14 = arith.constant 14 : index
    %1690 = memref.load %arg4[%c14] : memref<16xf32, #tpu.memory_space<smem>>
    %1691 = vector.broadcast %1690 : f32 to vector<8x16xf32>
    %c14_191 = arith.constant 14 : index
    %1692 = memref.load %arg3[%c14_191] : memref<432xf32, #tpu.memory_space<smem>>
    %1693 = vector.broadcast %1692 : f32 to vector<8x16xf32>
    %1694 = arith.mulf %1693, %27 : vector<8x16xf32>
    %1695 = arith.addf %1691, %1694 : vector<8x16xf32>
    %c30 = arith.constant 30 : index
    %1696 = memref.load %arg3[%c30] : memref<432xf32, #tpu.memory_space<smem>>
    %1697 = vector.broadcast %1696 : f32 to vector<8x16xf32>
    %1698 = arith.mulf %1697, %29 : vector<8x16xf32>
    %1699 = arith.addf %1695, %1698 : vector<8x16xf32>
    %c46 = arith.constant 46 : index
    %1700 = memref.load %arg3[%c46] : memref<432xf32, #tpu.memory_space<smem>>
    %1701 = vector.broadcast %1700 : f32 to vector<8x16xf32>
    %1702 = arith.mulf %1701, %31 : vector<8x16xf32>
    %1703 = arith.addf %1699, %1702 : vector<8x16xf32>
    %c62 = arith.constant 62 : index
    %1704 = memref.load %arg3[%c62] : memref<432xf32, #tpu.memory_space<smem>>
    %1705 = vector.broadcast %1704 : f32 to vector<8x16xf32>
    %1706 = arith.mulf %1705, %33 : vector<8x16xf32>
    %1707 = arith.addf %1703, %1706 : vector<8x16xf32>
    %c78 = arith.constant 78 : index
    %1708 = memref.load %arg3[%c78] : memref<432xf32, #tpu.memory_space<smem>>
    %1709 = vector.broadcast %1708 : f32 to vector<8x16xf32>
    %1710 = arith.mulf %1709, %35 : vector<8x16xf32>
    %1711 = arith.addf %1707, %1710 : vector<8x16xf32>
    %c94 = arith.constant 94 : index
    %1712 = memref.load %arg3[%c94] : memref<432xf32, #tpu.memory_space<smem>>
    %1713 = vector.broadcast %1712 : f32 to vector<8x16xf32>
    %1714 = arith.mulf %1713, %37 : vector<8x16xf32>
    %1715 = arith.addf %1711, %1714 : vector<8x16xf32>
    %c110 = arith.constant 110 : index
    %1716 = memref.load %arg3[%c110] : memref<432xf32, #tpu.memory_space<smem>>
    %1717 = vector.broadcast %1716 : f32 to vector<8x16xf32>
    %1718 = arith.mulf %1717, %39 : vector<8x16xf32>
    %1719 = arith.addf %1715, %1718 : vector<8x16xf32>
    %c126 = arith.constant 126 : index
    %1720 = memref.load %arg3[%c126] : memref<432xf32, #tpu.memory_space<smem>>
    %1721 = vector.broadcast %1720 : f32 to vector<8x16xf32>
    %1722 = arith.mulf %1721, %41 : vector<8x16xf32>
    %1723 = arith.addf %1719, %1722 : vector<8x16xf32>
    %c142 = arith.constant 142 : index
    %1724 = memref.load %arg3[%c142] : memref<432xf32, #tpu.memory_space<smem>>
    %1725 = vector.broadcast %1724 : f32 to vector<8x16xf32>
    %1726 = arith.mulf %1725, %43 : vector<8x16xf32>
    %1727 = arith.addf %1723, %1726 : vector<8x16xf32>
    %c158 = arith.constant 158 : index
    %1728 = memref.load %arg3[%c158] : memref<432xf32, #tpu.memory_space<smem>>
    %1729 = vector.broadcast %1728 : f32 to vector<8x16xf32>
    %1730 = arith.mulf %1729, %45 : vector<8x16xf32>
    %1731 = arith.addf %1727, %1730 : vector<8x16xf32>
    %c174 = arith.constant 174 : index
    %1732 = memref.load %arg3[%c174] : memref<432xf32, #tpu.memory_space<smem>>
    %1733 = vector.broadcast %1732 : f32 to vector<8x16xf32>
    %1734 = arith.mulf %1733, %47 : vector<8x16xf32>
    %1735 = arith.addf %1731, %1734 : vector<8x16xf32>
    %c190 = arith.constant 190 : index
    %1736 = memref.load %arg3[%c190] : memref<432xf32, #tpu.memory_space<smem>>
    %1737 = vector.broadcast %1736 : f32 to vector<8x16xf32>
    %1738 = arith.mulf %1737, %49 : vector<8x16xf32>
    %1739 = arith.addf %1735, %1738 : vector<8x16xf32>
    %c206 = arith.constant 206 : index
    %1740 = memref.load %arg3[%c206] : memref<432xf32, #tpu.memory_space<smem>>
    %1741 = vector.broadcast %1740 : f32 to vector<8x16xf32>
    %1742 = arith.mulf %1741, %51 : vector<8x16xf32>
    %1743 = arith.addf %1739, %1742 : vector<8x16xf32>
    %c222 = arith.constant 222 : index
    %1744 = memref.load %arg3[%c222] : memref<432xf32, #tpu.memory_space<smem>>
    %1745 = vector.broadcast %1744 : f32 to vector<8x16xf32>
    %1746 = arith.mulf %1745, %53 : vector<8x16xf32>
    %1747 = arith.addf %1743, %1746 : vector<8x16xf32>
    %c238 = arith.constant 238 : index
    %1748 = memref.load %arg3[%c238] : memref<432xf32, #tpu.memory_space<smem>>
    %1749 = vector.broadcast %1748 : f32 to vector<8x16xf32>
    %1750 = arith.mulf %1749, %55 : vector<8x16xf32>
    %1751 = arith.addf %1747, %1750 : vector<8x16xf32>
    %c254 = arith.constant 254 : index
    %1752 = memref.load %arg3[%c254] : memref<432xf32, #tpu.memory_space<smem>>
    %1753 = vector.broadcast %1752 : f32 to vector<8x16xf32>
    %1754 = arith.mulf %1753, %57 : vector<8x16xf32>
    %1755 = arith.addf %1751, %1754 : vector<8x16xf32>
    %c270 = arith.constant 270 : index
    %1756 = memref.load %arg3[%c270] : memref<432xf32, #tpu.memory_space<smem>>
    %1757 = vector.broadcast %1756 : f32 to vector<8x16xf32>
    %1758 = arith.mulf %1757, %59 : vector<8x16xf32>
    %1759 = arith.addf %1755, %1758 : vector<8x16xf32>
    %c286 = arith.constant 286 : index
    %1760 = memref.load %arg3[%c286] : memref<432xf32, #tpu.memory_space<smem>>
    %1761 = vector.broadcast %1760 : f32 to vector<8x16xf32>
    %1762 = arith.mulf %1761, %61 : vector<8x16xf32>
    %1763 = arith.addf %1759, %1762 : vector<8x16xf32>
    %c302 = arith.constant 302 : index
    %1764 = memref.load %arg3[%c302] : memref<432xf32, #tpu.memory_space<smem>>
    %1765 = vector.broadcast %1764 : f32 to vector<8x16xf32>
    %1766 = arith.mulf %1765, %63 : vector<8x16xf32>
    %1767 = arith.addf %1763, %1766 : vector<8x16xf32>
    %c318 = arith.constant 318 : index
    %1768 = memref.load %arg3[%c318] : memref<432xf32, #tpu.memory_space<smem>>
    %1769 = vector.broadcast %1768 : f32 to vector<8x16xf32>
    %1770 = arith.mulf %1769, %65 : vector<8x16xf32>
    %1771 = arith.addf %1767, %1770 : vector<8x16xf32>
    %c334 = arith.constant 334 : index
    %1772 = memref.load %arg3[%c334] : memref<432xf32, #tpu.memory_space<smem>>
    %1773 = vector.broadcast %1772 : f32 to vector<8x16xf32>
    %1774 = arith.mulf %1773, %67 : vector<8x16xf32>
    %1775 = arith.addf %1771, %1774 : vector<8x16xf32>
    %c350 = arith.constant 350 : index
    %1776 = memref.load %arg3[%c350] : memref<432xf32, #tpu.memory_space<smem>>
    %1777 = vector.broadcast %1776 : f32 to vector<8x16xf32>
    %1778 = arith.mulf %1777, %69 : vector<8x16xf32>
    %1779 = arith.addf %1775, %1778 : vector<8x16xf32>
    %c366 = arith.constant 366 : index
    %1780 = memref.load %arg3[%c366] : memref<432xf32, #tpu.memory_space<smem>>
    %1781 = vector.broadcast %1780 : f32 to vector<8x16xf32>
    %1782 = arith.mulf %1781, %71 : vector<8x16xf32>
    %1783 = arith.addf %1779, %1782 : vector<8x16xf32>
    %c382 = arith.constant 382 : index
    %1784 = memref.load %arg3[%c382] : memref<432xf32, #tpu.memory_space<smem>>
    %1785 = vector.broadcast %1784 : f32 to vector<8x16xf32>
    %1786 = arith.mulf %1785, %73 : vector<8x16xf32>
    %1787 = arith.addf %1783, %1786 : vector<8x16xf32>
    %c398 = arith.constant 398 : index
    %1788 = memref.load %arg3[%c398] : memref<432xf32, #tpu.memory_space<smem>>
    %1789 = vector.broadcast %1788 : f32 to vector<8x16xf32>
    %1790 = arith.mulf %1789, %75 : vector<8x16xf32>
    %1791 = arith.addf %1787, %1790 : vector<8x16xf32>
    %c414 = arith.constant 414 : index
    %1792 = memref.load %arg3[%c414] : memref<432xf32, #tpu.memory_space<smem>>
    %1793 = vector.broadcast %1792 : f32 to vector<8x16xf32>
    %1794 = arith.mulf %1793, %77 : vector<8x16xf32>
    %1795 = arith.addf %1791, %1794 : vector<8x16xf32>
    %c430 = arith.constant 430 : index
    %1796 = memref.load %arg3[%c430] : memref<432xf32, #tpu.memory_space<smem>>
    %1797 = vector.broadcast %1796 : f32 to vector<8x16xf32>
    %1798 = arith.mulf %1797, %79 : vector<8x16xf32>
    %1799 = arith.addf %1795, %1798 : vector<8x16xf32>
    %cst_192 = arith.constant 0.000000e+00 : f32
    %1800 = vector.broadcast %cst_192 : f32 to vector<8x16xf32>
    %1801 = arith.maximumf %1799, %1800 : vector<8x16xf32>
    %c0_193 = arith.constant 0 : index
    %c14_194 = arith.constant 14 : index
    %c0_195 = arith.constant 0 : index
    %c0_196 = arith.constant 0 : index
    %1802 = vector.load %arg5[%c0_193, %c14_194, %c0_195, %c0_196] : memref<1x16x8x16xf32, #tpu.memory_space<vmem>>, vector<1x1x8x16xf32>
    %1803 = vector.shape_cast %1802 : vector<1x1x8x16xf32> to vector<8x16xf32>
    %1804 = vector.shape_cast %1801 : vector<8x16xf32> to vector<1x1x8x16xf32>
    tpu.vector_store %arg5[%c0_193, %c14_194, %c0_195, %c0_196], %1804 {strides = array<i32>} : memref<1x16x8x16xf32, #tpu.memory_space<vmem>>, vector<1x1x8x16xf32>,
    %c15 = arith.constant 15 : index
    %1805 = memref.load %arg4[%c15] : memref<16xf32, #tpu.memory_space<smem>>
    %1806 = vector.broadcast %1805 : f32 to vector<8x16xf32>
    %c15_197 = arith.constant 15 : index
    %1807 = memref.load %arg3[%c15_197] : memref<432xf32, #tpu.memory_space<smem>>
    %1808 = vector.broadcast %1807 : f32 to vector<8x16xf32>
    %1809 = arith.mulf %1808, %27 : vector<8x16xf32>
    %1810 = arith.addf %1806, %1809 : vector<8x16xf32>
    %c31 = arith.constant 31 : index
    %1811 = memref.load %arg3[%c31] : memref<432xf32, #tpu.memory_space<smem>>
    %1812 = vector.broadcast %1811 : f32 to vector<8x16xf32>
    %1813 = arith.mulf %1812, %29 : vector<8x16xf32>
    %1814 = arith.addf %1810, %1813 : vector<8x16xf32>
    %c47 = arith.constant 47 : index
    %1815 = memref.load %arg3[%c47] : memref<432xf32, #tpu.memory_space<smem>>
    %1816 = vector.broadcast %1815 : f32 to vector<8x16xf32>
    %1817 = arith.mulf %1816, %31 : vector<8x16xf32>
    %1818 = arith.addf %1814, %1817 : vector<8x16xf32>
    %c63 = arith.constant 63 : index
    %1819 = memref.load %arg3[%c63] : memref<432xf32, #tpu.memory_space<smem>>
    %1820 = vector.broadcast %1819 : f32 to vector<8x16xf32>
    %1821 = arith.mulf %1820, %33 : vector<8x16xf32>
    %1822 = arith.addf %1818, %1821 : vector<8x16xf32>
    %c79 = arith.constant 79 : index
    %1823 = memref.load %arg3[%c79] : memref<432xf32, #tpu.memory_space<smem>>
    %1824 = vector.broadcast %1823 : f32 to vector<8x16xf32>
    %1825 = arith.mulf %1824, %35 : vector<8x16xf32>
    %1826 = arith.addf %1822, %1825 : vector<8x16xf32>
    %c95 = arith.constant 95 : index
    %1827 = memref.load %arg3[%c95] : memref<432xf32, #tpu.memory_space<smem>>
    %1828 = vector.broadcast %1827 : f32 to vector<8x16xf32>
    %1829 = arith.mulf %1828, %37 : vector<8x16xf32>
    %1830 = arith.addf %1826, %1829 : vector<8x16xf32>
    %c111 = arith.constant 111 : index
    %1831 = memref.load %arg3[%c111] : memref<432xf32, #tpu.memory_space<smem>>
    %1832 = vector.broadcast %1831 : f32 to vector<8x16xf32>
    %1833 = arith.mulf %1832, %39 : vector<8x16xf32>
    %1834 = arith.addf %1830, %1833 : vector<8x16xf32>
    %c127 = arith.constant 127 : index
    %1835 = memref.load %arg3[%c127] : memref<432xf32, #tpu.memory_space<smem>>
    %1836 = vector.broadcast %1835 : f32 to vector<8x16xf32>
    %1837 = arith.mulf %1836, %41 : vector<8x16xf32>
    %1838 = arith.addf %1834, %1837 : vector<8x16xf32>
    %c143 = arith.constant 143 : index
    %1839 = memref.load %arg3[%c143] : memref<432xf32, #tpu.memory_space<smem>>
    %1840 = vector.broadcast %1839 : f32 to vector<8x16xf32>
    %1841 = arith.mulf %1840, %43 : vector<8x16xf32>
    %1842 = arith.addf %1838, %1841 : vector<8x16xf32>
    %c159 = arith.constant 159 : index
    %1843 = memref.load %arg3[%c159] : memref<432xf32, #tpu.memory_space<smem>>
    %1844 = vector.broadcast %1843 : f32 to vector<8x16xf32>
    %1845 = arith.mulf %1844, %45 : vector<8x16xf32>
    %1846 = arith.addf %1842, %1845 : vector<8x16xf32>
    %c175 = arith.constant 175 : index
    %1847 = memref.load %arg3[%c175] : memref<432xf32, #tpu.memory_space<smem>>
    %1848 = vector.broadcast %1847 : f32 to vector<8x16xf32>
    %1849 = arith.mulf %1848, %47 : vector<8x16xf32>
    %1850 = arith.addf %1846, %1849 : vector<8x16xf32>
    %c191 = arith.constant 191 : index
    %1851 = memref.load %arg3[%c191] : memref<432xf32, #tpu.memory_space<smem>>
    %1852 = vector.broadcast %1851 : f32 to vector<8x16xf32>
    %1853 = arith.mulf %1852, %49 : vector<8x16xf32>
    %1854 = arith.addf %1850, %1853 : vector<8x16xf32>
    %c207 = arith.constant 207 : index
    %1855 = memref.load %arg3[%c207] : memref<432xf32, #tpu.memory_space<smem>>
    %1856 = vector.broadcast %1855 : f32 to vector<8x16xf32>
    %1857 = arith.mulf %1856, %51 : vector<8x16xf32>
    %1858 = arith.addf %1854, %1857 : vector<8x16xf32>
    %c223 = arith.constant 223 : index
    %1859 = memref.load %arg3[%c223] : memref<432xf32, #tpu.memory_space<smem>>
    %1860 = vector.broadcast %1859 : f32 to vector<8x16xf32>
    %1861 = arith.mulf %1860, %53 : vector<8x16xf32>
    %1862 = arith.addf %1858, %1861 : vector<8x16xf32>
    %c239 = arith.constant 239 : index
    %1863 = memref.load %arg3[%c239] : memref<432xf32, #tpu.memory_space<smem>>
    %1864 = vector.broadcast %1863 : f32 to vector<8x16xf32>
    %1865 = arith.mulf %1864, %55 : vector<8x16xf32>
    %1866 = arith.addf %1862, %1865 : vector<8x16xf32>
    %c255 = arith.constant 255 : index
    %1867 = memref.load %arg3[%c255] : memref<432xf32, #tpu.memory_space<smem>>
    %1868 = vector.broadcast %1867 : f32 to vector<8x16xf32>
    %1869 = arith.mulf %1868, %57 : vector<8x16xf32>
    %1870 = arith.addf %1866, %1869 : vector<8x16xf32>
    %c271 = arith.constant 271 : index
    %1871 = memref.load %arg3[%c271] : memref<432xf32, #tpu.memory_space<smem>>
    %1872 = vector.broadcast %1871 : f32 to vector<8x16xf32>
    %1873 = arith.mulf %1872, %59 : vector<8x16xf32>
    %1874 = arith.addf %1870, %1873 : vector<8x16xf32>
    %c287 = arith.constant 287 : index
    %1875 = memref.load %arg3[%c287] : memref<432xf32, #tpu.memory_space<smem>>
    %1876 = vector.broadcast %1875 : f32 to vector<8x16xf32>
    %1877 = arith.mulf %1876, %61 : vector<8x16xf32>
    %1878 = arith.addf %1874, %1877 : vector<8x16xf32>
    %c303 = arith.constant 303 : index
    %1879 = memref.load %arg3[%c303] : memref<432xf32, #tpu.memory_space<smem>>
    %1880 = vector.broadcast %1879 : f32 to vector<8x16xf32>
    %1881 = arith.mulf %1880, %63 : vector<8x16xf32>
    %1882 = arith.addf %1878, %1881 : vector<8x16xf32>
    %c319 = arith.constant 319 : index
    %1883 = memref.load %arg3[%c319] : memref<432xf32, #tpu.memory_space<smem>>
    %1884 = vector.broadcast %1883 : f32 to vector<8x16xf32>
    %1885 = arith.mulf %1884, %65 : vector<8x16xf32>
    %1886 = arith.addf %1882, %1885 : vector<8x16xf32>
    %c335 = arith.constant 335 : index
    %1887 = memref.load %arg3[%c335] : memref<432xf32, #tpu.memory_space<smem>>
    %1888 = vector.broadcast %1887 : f32 to vector<8x16xf32>
    %1889 = arith.mulf %1888, %67 : vector<8x16xf32>
    %1890 = arith.addf %1886, %1889 : vector<8x16xf32>
    %c351 = arith.constant 351 : index
    %1891 = memref.load %arg3[%c351] : memref<432xf32, #tpu.memory_space<smem>>
    %1892 = vector.broadcast %1891 : f32 to vector<8x16xf32>
    %1893 = arith.mulf %1892, %69 : vector<8x16xf32>
    %1894 = arith.addf %1890, %1893 : vector<8x16xf32>
    %c367 = arith.constant 367 : index
    %1895 = memref.load %arg3[%c367] : memref<432xf32, #tpu.memory_space<smem>>
    %1896 = vector.broadcast %1895 : f32 to vector<8x16xf32>
    %1897 = arith.mulf %1896, %71 : vector<8x16xf32>
    %1898 = arith.addf %1894, %1897 : vector<8x16xf32>
    %c383 = arith.constant 383 : index
    %1899 = memref.load %arg3[%c383] : memref<432xf32, #tpu.memory_space<smem>>
    %1900 = vector.broadcast %1899 : f32 to vector<8x16xf32>
    %1901 = arith.mulf %1900, %73 : vector<8x16xf32>
    %1902 = arith.addf %1898, %1901 : vector<8x16xf32>
    %c399 = arith.constant 399 : index
    %1903 = memref.load %arg3[%c399] : memref<432xf32, #tpu.memory_space<smem>>
    %1904 = vector.broadcast %1903 : f32 to vector<8x16xf32>
    %1905 = arith.mulf %1904, %75 : vector<8x16xf32>
    %1906 = arith.addf %1902, %1905 : vector<8x16xf32>
    %c415 = arith.constant 415 : index
    %1907 = memref.load %arg3[%c415] : memref<432xf32, #tpu.memory_space<smem>>
    %1908 = vector.broadcast %1907 : f32 to vector<8x16xf32>
    %1909 = arith.mulf %1908, %77 : vector<8x16xf32>
    %1910 = arith.addf %1906, %1909 : vector<8x16xf32>
    %c431 = arith.constant 431 : index
    %1911 = memref.load %arg3[%c431] : memref<432xf32, #tpu.memory_space<smem>>
    %1912 = vector.broadcast %1911 : f32 to vector<8x16xf32>
    %1913 = arith.mulf %1912, %79 : vector<8x16xf32>
    %1914 = arith.addf %1910, %1913 : vector<8x16xf32>
    %cst_198 = arith.constant 0.000000e+00 : f32
    %1915 = vector.broadcast %cst_198 : f32 to vector<8x16xf32>
    %1916 = arith.maximumf %1914, %1915 : vector<8x16xf32>
    %c0_199 = arith.constant 0 : index
    %c15_200 = arith.constant 15 : index
    %c0_201 = arith.constant 0 : index
    %c0_202 = arith.constant 0 : index
    %1917 = vector.load %arg5[%c0_199, %c15_200, %c0_201, %c0_202] : memref<1x16x8x16xf32, #tpu.memory_space<vmem>>, vector<1x1x8x16xf32>
    %1918 = vector.shape_cast %1917 : vector<1x1x8x16xf32> to vector<8x16xf32>
    %1919 = vector.shape_cast %1916 : vector<8x16xf32> to vector<1x1x8x16xf32>
    tpu.vector_store %arg5[%c0_199, %c15_200, %c0_201, %c0_202], %1919 {strides = array<i32>} : memref<1x16x8x16xf32, #tpu.memory_space<vmem>>, vector<1x1x8x16xf32>,
    return
  }
  func.func @transform_0(%arg0: i32, %arg1: i32) -> (i32, i32, i32, i32) {
    %c0_i32 = arith.constant 0 : i32
    %c0_i32_0 = arith.constant 0 : i32
    %c0_i32_1 = arith.constant 0 : i32
    %c0_i32_2 = arith.constant 0 : i32
    return %arg0, %c0_i32, %c0_i32_0, %c0_i32_1 : i32, i32, i32, i32
  }
  func.func @transform_1(%arg0: i32, %arg1: i32) -> i32 {
    %c0_i32 = arith.constant 0 : i32
    %c0_i32_0 = arith.constant 0 : i32
    return %c0_i32 : i32
  }
  func.func @transform_2(%arg0: i32, %arg1: i32) -> i32 {
    %c0_i32 = arith.constant 0 : i32
    %c0_i32_0 = arith.constant 0 : i32
    return %c0_i32 : i32
  }
  func.func @transform_3(%arg0: i32, %arg1: i32) -> (i32, i32, i32, i32) {
    %c0_i32 = arith.constant 0 : i32
    %c0_i32_0 = arith.constant 0 : i32
    %c0_i32_1 = arith.constant 0 : i32
    return %arg0, %c0_i32, %arg1, %c0_i32_0 : i32, i32, i32, i32
  }
}

</mosaic_0001>

<llo_original>
// kernel: tpu_custom_call.1
$region0: #{tpu_custom_call.1}
  #allocation0 [shape = 'u32[]', space=smem, size = 0x4, offset = 0x4, fixed_abs, tag = 'smem constant byte address 0x4 - core index']
  #allocation1 [shape = 'u32[72,128]{1,0:T(1,128)}', space=vmem, size = 0x9000, scoped, tag = 'internal scratch']
  #allocation2 [shape = 'f32[3,10,18]{2,1,0:T(8,128)}', space=vmem, size = 0x6000, scoped, tag = 'scratch operand']
  %s0 = inlined_call_operand.hbm [shape: f32[2,3,16,16], index: 0, kind: input, shape index: {}]
  %s1 = inlined_call_operand.hbm [shape: f32[432], index: 1, kind: input, shape index: {}]
  %s2 = inlined_call_operand.vmem [shape: f32[16], index: 2, kind: input, shape index: {}]
  %s3 = inlined_call_operand.hbm [shape: f32[2,16,16,16], index: 3, kind: output, shape index: {}]
  %s4 = sld [smem:[#allocation0]]
  $region57: #{tpu_custom_call.1} parent=0
    _
  %s6 = ssub.s32 1, %s4
  %s7 = scalar_select 0, %s6, %s4
  $region1: #{tpu_custom_call.1} parent=0
    #allocation3 [shape = 'u8[49152]{0}', space=vmem, size = 0xc000, scoped, tag = 'input window, operand 0']
    #allocation4 [shape = 's32[2]{0}', space=sflag, size = 0x8, scoped, tag = 'scoped memory for tpu_custom_call.1']
    #allocation5 [shape = 's32[2]{0}', space=sflag, size = 0x8, scoped, tag = 'scoped memory for tpu_custom_call.1']
    #allocation6 [shape = 's32[2]{0}', space=sflag, size = 0x8, scoped, tag = 'scoped memory for tpu_custom_call.1']
    #allocation7 [shape = 's32[2]{0}', space=sflag, size = 0x8, scoped, tag = 'scoped memory for tpu_custom_call.1']
    #allocation8 [shape = 'u8[2048]{0}', space=smem, size = 0x800, scoped, tag = 'input window, operand 1, single buffered']
    #allocation9 [shape = 'u8[512]{0}', space=smem, size = 0x200, scoped, tag = 'input window, operand 2, single buffered']
    #allocation10 [shape = 'u8[131072]{0}', space=vmem, size = 0x20000, scoped, tag = 'output window, operand 0']
    %8 = vsyncpa [#allocation4], 0
    %s9 = scalar_lea.sflag [#allocation4], 1
    %10 = vsyncpa %s9, 0
    %11 = vsyncpa [#allocation6], 0
    %12 = vsyncpa [#allocation7], 0
    %13 = vsyncpa [#allocation5], 0
    %s14 = scalar_lea.sflag [#allocation5], 1
    %15 = vsyncpa %s14, 0
    loop: start=0, step=1, limit=6
    $region2: #{tpu_custom_call.1} parent=1 // loop_pre_header
      _
    $region3: #{tpu_custom_call.1} parent=1 // loop_header
      %s17 = sphi 0, %s21
      %p18 = scmp.ge.s32.totalorder %s17, 6
      %s24 = sphi 0, %s36
      %s25 = sphi 0, %s32
      %s26 = sphi 0, %s24
      %s27 = sphi 0, %s25
      %s28 = sphi 0, %s26
      %s29 = sphi 0, %s27
      %s39 = sphi 0, %s41
      %s42 = sphi 0, %s39
      %s43 = sphi 0, %s42
      %s59 = sphi 0, %s43
      %s63 = sphi 0, %s63
      %s65 = sphi 0, %s63
      %s66 = sphi 0, %s65
      %s80 = sphi 0, %s66
      %s84 = sphi 0, %s84
      %s86 = sphi 0, %s84
      %s87 = sphi 0, %s86
      %s101 = sphi 0, %s87
      %s109 = sphi 0, %s111
      %s112 = sphi 0, %s109
      %s113 = sphi 0, %s112
      %s129 = sphi 0, %s113
    $region4: #{tpu_custom_call.1} parent=1 // loop_header_branch
      %20 = sbr.rel (%p18) target = $region8
    $region5: #{tpu_custom_call.1} parent=1 // loop_body
      %s22 = ssub.s32 %s17, 1
      %s23 = ssub.s32 %s17, 2
      %s30 = sadd.s32 1, %s25
      %p31 = scmp.ge.s32.totalorder %s30, 2
      %s32 = scalar_select %p31, 0, %s30
      %s33 = sadd.s32 1, %s24
      %s34 = scalar_select %p31, %s33, %s24
      %p35 = scmp.ge.s32.totalorder %s34, 2
      %s36 = scalar_select %p35, 0, %s34
      %s37 = ssub.s32 %s24, %s36
      %p38 = scmp.eq.s32.totalorder %s37, 0
      %s40 = sadd.s32 %s39, 1
      %s41 = scalar_select %p38, %s39, %s40
      %p44 = pneg %p38
      %p45 = scmp.eq.s32.totalorder %s17, 3
      %p46 = por %p44, %p45
      %p47 = scmp.ne.s32.totalorder %s39, %s42
      %p48 = scmp.eq.s32.totalorder %s17, 0
      %p49 = por %p47, %p48
      %p50 = scmp.ne.s32.totalorder %s39, %s42
      %p51 = scmp.eq.s32.totalorder %s22, 3
      %p52 = por %p50, %p51
      %p53 = scmp.ne.s32.totalorder %s42, %s43
      %p54 = scmp.eq.s32.totalorder %s22, 0
      %p55 = por %p53, %p54
      %p56 = scmp.ne.s32.totalorder %s42, %s43
      %p57 = scmp.eq.s32.totalorder %s23, 3
      %p58 = por %p56, %p57
      %p60 = scmp.ne.s32.totalorder %s43, %s59
      %p61 = scmp.eq.s32.totalorder %s23, 0
      %p62 = por %p60, %p61
      %s64 = sadd.s32 %s63, 1
      %p67 = scmp.eq.s32.totalorder %s17, 3
      %p68 = scmp.ne.s32.totalorder %s63, %s65
      %p69 = scmp.eq.s32.totalorder %s17, 0
      %p70 = por %p68, %p69
      %p71 = scmp.ne.s32.totalorder %s63, %s65
      %p72 = scmp.eq.s32.totalorder %s22, 3
      %p73 = por %p71, %p72
      %p74 = scmp.ne.s32.totalorder %s65, %s66
      %p75 = scmp.eq.s32.totalorder %s22, 0
      %p76 = por %p74, %p75
      %p77 = scmp.ne.s32.totalorder %s65, %s66
      %p78 = scmp.eq.s32.totalorder %s23, 3
      %p79 = por %p77, %p78
      %p81 = scmp.ne.s32.totalorder %s66, %s80
      %p82 = scmp.eq.s32.totalorder %s23, 0
      %p83 = por %p81, %p82
      %s85 = sadd.s32 %s84, 1
      %p88 = scmp.eq.s32.totalorder %s17, 3
      %p89 = scmp.ne.s32.totalorder %s84, %s86
      %p90 = scmp.eq.s32.totalorder %s17, 0
      %p91 = por %p89, %p90
      %p92 = scmp.ne.s32.totalorder %s84, %s86
      %p93 = scmp.eq.s32.totalorder %s22, 3
      %p94 = por %p92, %p93
      %p95 = scmp.ne.s32.totalorder %s86, %s87
      %p96 = scmp.eq.s32.totalorder %s22, 0
      %p97 = por %p95, %p96
      %p98 = scmp.ne.s32.totalorder %s86, %s87
      %p99 = scmp.eq.s32.totalorder %s23, 3
      %p100 = por %p98, %p99
      %p102 = scmp.ne.s32.totalorder %s87, %s101
      %p103 = scmp.eq.s32.totalorder %s23, 0
      %p104 = por %p102, %p103
      %s105 = ssub.s32 %s24, %s36
      %s106 = ssub.s32 %s25, %s32
      %s107 = sor.u32 %s105, %s106
      %p108 = scmp.eq.s32.totalorder %s107, 0
      %s110 = sadd.s32 %s109, 1
      %s111 = scalar_select %p108, %s109, %s110
      %p114 = pneg %p108
      %p115 = scmp.eq.s32.totalorder %s17, 3
      %p116 = por %p114, %p115
      %p117 = scmp.ne.s32.totalorder %s109, %s112
      %p118 = scmp.eq.s32.totalorder %s17, 0
      %p119 = por %p117, %p118
      %p120 = scmp.ne.s32.totalorder %s109, %s112
      %p121 = scmp.eq.s32.totalorder %s22, 3
      %p122 = por %p120, %p121
      %p123 = scmp.ne.s32.totalorder %s112, %s113
      %p124 = scmp.eq.s32.totalorder %s22, 0
      %p125 = por %p123, %p124
      %p126 = scmp.ne.s32.totalorder %s112, %s113
      %p127 = scmp.eq.s32.totalorder %s23, 3
      %p128 = por %p126, %p127
      %p130 = scmp.ne.s32.totalorder %s113, %s129
      %p131 = scmp.eq.s32.totalorder %s23, 0
      %p132 = por %p130, %p131
      %p133 = scmp.le.s32.totalorder 1, %s17
      %p134 = scmp.lt.s32.totalorder %s17, 5
      %p135 = pnand %p133, %p134
      %p136 = pneg %p135
      // Predicated region
      $region9: #{tpu_custom_call.1} parent=5 // pred_check
        _
      $region10: #{tpu_custom_call.1} parent=5 // pred_check_branch
        %138 = sbr.rel (%p135) target = $region12
      $region11: #{tpu_custom_call.1} parent=5 // pred_region
        %s139 = ssub.s32 %s17, 1
        // Predicated region
        $region13: #{tpu_custom_call.1} parent=11 // pred_check
          %p140 = pneg %p76
        $region14: #{tpu_custom_call.1} parent=11 // pred_check_branch
          %142 = sbr.rel (%p140) target = $region16
        $region15: #{tpu_custom_call.1} parent=11 // pred_region
          %144 = vsyncadd [#allocation6], 0
          %s146 = sshll.u32 %s1, 4
          %s147 = int_to_ptr.hbm [resolvable:$true] %s146
          %149 = dma.hbm_to_smem %s147, 64, [#allocation8], [#allocation6]
        $region16: #{tpu_custom_call.1} parent=11 // pred_fallthru
          _
        // Predicated region
        $region17: #{tpu_custom_call.1} parent=11 // pred_check
          %p150 = pneg %p97
        $region18: #{tpu_custom_call.1} parent=11 // pred_check_branch
          %152 = sbr.rel (%p150) target = $region20
        $region19: #{tpu_custom_call.1} parent=11 // pred_region
          %154 = vsyncadd [#allocation7], 0
          %s156 = sshll.u32 %s2, 4
          %s157 = int_to_ptr.vmem [resolvable:$true] %s156
          %159 = dma.vmem_to_smem %s157, 16, [#allocation9], [#allocation7]
        $region20: #{tpu_custom_call.1} parent=11 // pred_fallthru
          _
      $region12: #{tpu_custom_call.1} parent=5 // pred_fallthru
        _
      %p160 = scmp.lt.s32.totalorder %s17, 4
      // Predicated region
      $region21: #{tpu_custom_call.1} parent=5 // pred_check
        %p161 = pneg %p160
      $region22: #{tpu_custom_call.1} parent=5 // pred_check_branch
        %163 = sbr.rel (%p161) target = $region24
      $region23: #{tpu_custom_call.1} parent=5 // pred_region
        // Predicated region
        $region25: #{tpu_custom_call.1} parent=23 // pred_check
          %p164 = pneg %p49
        $region26: #{tpu_custom_call.1} parent=23 // pred_check_branch
          %166 = sbr.rel (%p164) target = $region28
        $region27: #{tpu_custom_call.1} parent=23 // pred_region
          %s167 = sand.u32 %s39, 1
          %s168 = scalar_lea.sflag [#allocation4], %s167
          %s169 = sand.u32 %s39, 1
          %s170 = smul.addr %s169, 48
          %s171 = scalar_lea.vmem [#allocation3], %s170
          %173 = vsyncadd %s168, 0
          %s174 = smul.addr %s24, 6
          %s175 = smul.addr %s174, 8
          %s176 = scalar_lea.hbm %s0, %s175
          %s177 = sshll.u32 %s176, 4
          %s178 = int_to_ptr.hbm [resolvable:$true] %s177
          %s179 = sshll.u32 %s171, 4
          %s180 = int_to_ptr.vmem [resolvable:$true] %s179
          %185 = dma.hbm_to_vmem [thread:$0]  %s178, 768, %s180, %s168, 128, 128, 8
        $region28: #{tpu_custom_call.1} parent=23 // pred_fallthru
          _
      $region24: #{tpu_custom_call.1} parent=5 // pred_fallthru
        _
      %p186 = scmp.le.s32.totalorder 1, %s17
      %p187 = scmp.lt.s32.totalorder %s17, 5
      %p188 = pnand %p186, %p187
      %p189 = pneg %p188
      // Predicated region
      $region29: #{tpu_custom_call.1} parent=5 // pred_check
        _
      $region30: #{tpu_custom_call.1} parent=5 // pred_check_branch
        %191 = sbr.rel (%p188) target = $region32
      $region31: #{tpu_custom_call.1} parent=5 // pred_region
        %s192 = ssub.s32 %s17, 1
        %s193 = sand.u32 %s42, 1
        %s194 = scalar_lea.sflag [#allocation4], %s193
        %s195 = sand.u32 %s42, 1
        %s196 = smul.addr %s195, 48
        %s197 = scalar_lea.vmem [#allocation3], %s196
        // Predicated region
        $region33: #{tpu_custom_call.1} parent=31 // pred_check
          %p198 = pneg %p55
        $region34: #{tpu_custom_call.1} parent=31 // pred_check_branch
          %200 = sbr.rel (%p198) target = $region36
        $region35: #{tpu_custom_call.1} parent=31 // pred_region
          %202 = dma.done %s194, 768
        $region36: #{tpu_custom_call.1} parent=31 // pred_fallthru
          _
        // Predicated region
        $region37: #{tpu_custom_call.1} parent=31 // pred_check
          %p203 = pneg %p76
        $region38: #{tpu_custom_call.1} parent=31 // pred_check_branch
          %205 = sbr.rel (%p203) target = $region40
        $region39: #{tpu_custom_call.1} parent=31 // pred_region
          %207 = dma.done [#allocation6], 64
        $region40: #{tpu_custom_call.1} parent=31 // pred_fallthru
          _
        // Predicated region
        $region41: #{tpu_custom_call.1} parent=31 // pred_check
          %p208 = pneg %p97
        $region42: #{tpu_custom_call.1} parent=31 // pred_check_branch
          %210 = sbr.rel (%p208) target = $region44
        $region43: #{tpu_custom_call.1} parent=31 // pred_region
          %212 = dma.done [#allocation7], 16
        $region44: #{tpu_custom_call.1} parent=31 // pred_fallthru
          _
        %213 = sfence
        %s214 = sand.u32 %s42, 1
        %s215 = scalar_lea.sflag [#allocation4], %s214
        %s216 = sand.u32 %s42, 1
        %s217 = smul.addr %s216, 48
        %s218 = scalar_lea.vmem [#allocation3], %s217
        %p219 = pneg %p55
        %p220 = pneg %p52
        %p221 = pneg %p76
        %p222 = pneg %p73
        %p223 = pneg %p97
        %p224 = pneg %p94
        %p225 = pneg %p125
        %p226 = pneg %p122
        %s227 = sand.u32 %s112, 1
        %s228 = scalar_lea.sflag [#allocation5], %s227
        %s229 = sand.u32 %s112, 1
        %s230 = smul.addr %s229, 128
        %s231 = scalar_lea.vmem [#allocation10], %s230
        %s232 = smul.u32 %s27, 8
        %vm233 = vcmask 146432
        %234 = vst.msk [vmem:[#allocation2] sm:$0xff] %vm233, 0.0
        %vm235 = vcmask 140288
        %236 = vst.msk [vmem:[#allocation2 + $0x8] sm:$0x3] %vm235, 0.0
        %237 = vst.msk [vmem:[#allocation2 + $0x10] sm:$0xff] %vm233, 0.0
        %238 = vst.msk [vmem:[#allocation2 + $0x18] sm:$0x3] %vm235, 0.0
        %239 = vst.msk [vmem:[#allocation2 + $0x20] sm:$0xff] %vm233, 0.0
        %240 = vst.msk [vmem:[#allocation2 + $0x28] sm:$0x3] %vm235, 0.0
        %s241 = scalar_lea.vmem %s197, %s232 [#allocation3]
        %v242 = vld [vmem:[%s241] sm:$0xff]
        %v243 = vld [vmem:[%s241 + $0x10] sm:$0xff]
        %v244 = vld [vmem:[%s241 + $0x20] sm:$0xff]
        %248 = vrot.lane.b32.xlu0 %v242, 1
        %v249 = vpop.permute.xlu0 %248
        %250 = vrot.lane.b32.xlu0 %v243, 1
        %v251 = vpop.permute.xlu0 %250
        %252 = vrot.lane.b32.xlu0 %v244, 1
        %v253 = vpop.permute.xlu0 %252
        %vm257 = vcmask 138248
        %258 = vst.msk [vmem:[#allocation2 + $0x1] sm:$0xff] %vm257, %v249
        %259 = vst.msk [vmem:[#allocation2 + $0x11] sm:$0xff] %vm257, %v251
        %260 = vst.msk [vmem:[#allocation2 + $0x21] sm:$0xff] %vm257, %v253
        %s261 = ssub.s32 %s232, 1
        %p262 = scmp.gt.s32.totalorder %s261, 0
        %s263 = scalar_select %p262, %s261, 0
        %s264 = scalar_lea.vmem %s197, %s263 [#allocation3]
        %v265 = vld [vmem:[%s264] sm:$0x1]
        %v266 = vld [vmem:[%s264 + $0x10] sm:$0x1]
        %v267 = vld [vmem:[%s264 + $0x20] sm:$0x1]
        %p268 = scmp.gt.s32.totalorder %s27, 0
        %s269 = scalar_select %p268, 1, 0
        %v270 = vstv %s269
        %vm271 = vcmp.eq.s32.totalorder %v270, 1
        %v272 = vsel %vm271, %v265, 0.0
        %v273 = vsel %vm271, %v266, 0.0
        %v274 = vsel %vm271, %v267, 0.0
        %278 = vrot.lane.b32.xlu0 %v272, 1
        %v279 = vpop.permute.xlu0 %278
        %280 = vrot.lane.b32.xlu0 %v273, 1
        %v281 = vpop.permute.xlu0 %280
        %282 = vrot.lane.b32.xlu0 %v274, 1
        %v283 = vpop.permute.xlu0 %282
        %vm287 = vcmask 131080
        %288 = vst.msk [vmem:[#allocation2] sm:$0x1] %vm287, %v279
        %289 = vst.msk [vmem:[#allocation2 + $0x10] sm:$0x1] %vm287, %v281
        %290 = vst.msk [vmem:[#allocation2 + $0x20] sm:$0x1] %vm287, %v283
        %s291 = sadd.s32 %s232, 8
        %p292 = scmp.lt.s32.totalorder %s291, 15
        %s293 = scalar_select %p292, %s291, 15
        %s294 = scalar_lea.vmem %s197, %s293 [#allocation3]
        %v295 = vld [vmem:[%s294] sm:$0x1]
        %v296 = vld [vmem:[%s294 + $0x10] sm:$0x1]
        %v297 = vld [vmem:[%s294 + $0x20] sm:$0x1]
        %p298 = scmp.lt.s32.totalorder %s27, 1
        %s299 = scalar_select %p298, 1, 0
        %v300 = vstv %s299
        %vm301 = vcmp.eq.s32.totalorder %v300, 1
        %v302 = vsel %vm301, %v295, 0.0
        %v303 = vsel %vm301, %v296, 0.0
        %v304 = vsel %vm301, %v297, 0.0
        %308 = vrot.lane.b32.xlu0 %v302, 1
        %v309 = vpop.permute.xlu0 %308
        %310 = vrot.lane.b32.xlu0 %v303, 1
        %v311 = vpop.permute.xlu0 %310
        %312 = vrot.lane.b32.xlu0 %v304, 1
        %v313 = vpop.permute.xlu0 %312
        %317 = vst.msk [vmem:[#allocation2 + $0x9] sm:$0x1] %vm287, %v309
        %318 = vst.msk [vmem:[#allocation2 + $0x19] sm:$0x1] %vm287, %v311
        %319 = vst.msk [vmem:[#allocation2 + $0x29] sm:$0x1] %vm287, %v313
        %v320 = vld [vmem:[#allocation2] sm:$0xff]
        %s321 = scalar_lea.vmem [#allocation2], 16
        %v322 = vld [vmem:[%s321] sm:$0xff]
        %s323 = scalar_lea.vmem [#allocation2], 32
        %v324 = vld [vmem:[%s323] sm:$0xff]
        %v325 = vld [vmem:[#allocation2 + $0x1] sm:$0xff]
        %v326 = vld [vmem:[%s321 + $0x1] sm:$0xff]
        %v327 = vld [vmem:[%s323 + $0x1] sm:$0xff]
        %v328 = vld [vmem:[#allocation2 + $0x2] sm:$0xff]
        %v329 = vld [vmem:[%s321 + $0x2] sm:$0xff]
        %v330 = vld [vmem:[%s323 + $0x2] sm:$0xff]
        %s331 = sld [smem:[#allocation9]]
        %v332 = vstv %s331
        %s333 = sld [smem:[#allocation8]]
        %v334 = vstv %s333
        %v335 = vmul.f32 %v334, %v320
        %v336 = vadd.f32 %v332, %v335
        %s337 = sld [smem:[#allocation8 + $0x10]]
        %v338 = vstv %s337
        %v339 = vmul.f32 %v338, %v322
        %v340 = vadd.f32 %v336, %v339
        %s341 = sld [smem:[#allocation8 + $0x20]]
        %v342 = vstv %s341
        %v343 = vmul.f32 %v342, %v324
        %v344 = vadd.f32 %v340, %v343
        %s345 = sld [smem:[#allocation8 + $0x30]]
        %v346 = vstv %s345
        %v347 = vmul.f32 %v346, %v320
        %349 = vrot.lane.b32.xlu0 %v347, 127
        %v350 = vpop.permute.xlu0 %349
        %v352 = vadd.f32 %v344, %v350
        %s353 = sld [smem:[#allocation8 + $0x40]]
        %v354 = vstv %s353
        %v355 = vmul.f32 %v354, %v322
        %357 = vrot.lane.b32.xlu0 %v355, 127
        %v358 = vpop.permute.xlu0 %357
        %v360 = vadd.f32 %v352, %v358
        %s361 = sld [smem:[#allocation8 + $0x50]]
        %v362 = vstv %s361
        %v363 = vmul.f32 %v362, %v324
        %365 = vrot.lane.b32.xlu0 %v363, 127
        %v366 = vpop.permute.xlu0 %365
        %v368 = vadd.f32 %v360, %v366
        %s369 = sld [smem:[#allocation8 + $0x60]]
        %v370 = vstv %s369
        %v371 = vmul.f32 %v370, %v320
        %373 = vrot.lane.b32.xlu0 %v371, 126
        %v374 = vpop.permute.xlu0 %373
        %v376 = vadd.f32 %v368, %v374
        %s377 = sld [smem:[#allocation8 + $0x70]]
        %v378 = vstv %s377
        %v379 = vmul.f32 %v378, %v322
        %381 = vrot.lane.b32.xlu0 %v379, 126
        %v382 = vpop.permute.xlu0 %381
        %v384 = vadd.f32 %v376, %v382
        %s385 = sld [smem:[#allocation8 + $0x80]]
        %v386 = vstv %s385
        %v387 = vmul.f32 %v386, %v324
        %389 = vrot.lane.b32.xlu0 %v387, 126
        %v390 = vpop.permute.xlu0 %389
        %v392 = vadd.f32 %v384, %v390
        %s393 = sld [smem:[#allocation8 + $0x90]]
        %v394 = vstv %s393
        %v395 = vmul.f32 %v394, %v325
        %v396 = vadd.f32 %v392, %v395
        %s397 = sld [smem:[#allocation8 + $0xa0]]
        %v398 = vstv %s397
        %v399 = vmul.f32 %v398, %v326
        %v400 = vadd.f32 %v396, %v399
        %s401 = sld [smem:[#allocation8 + $0xb0]]
        %v402 = vstv %s401
        %v403 = vmul.f32 %v402, %v327
        %v404 = vadd.f32 %v400, %v403
        %s405 = sld [smem:[#allocation8 + $0xc0]]
        %v406 = vstv %s405
        %v407 = vmul.f32 %v406, %v325
        %409 = vrot.lane.b32.xlu0 %v407, 127
        %v410 = vpop.permute.xlu0 %409
        %v412 = vadd.f32 %v404, %v410
        %s413 = sld [smem:[#allocation8 + $0xd0]]
        %v414 = vstv %s413
        %v415 = vmul.f32 %v414, %v326
        %417 = vrot.lane.b32.xlu0 %v415, 127
        %v418 = vpop.permute.xlu0 %417
        %v420 = vadd.f32 %v412, %v418
        %s421 = sld [smem:[#allocation8 + $0xe0]]
        %v422 = vstv %s421
        %v423 = vmul.f32 %v422, %v327
        %425 = vrot.lane.b32.xlu0 %v423, 127
        %v426 = vpop.permute.xlu0 %425
        %v428 = vadd.f32 %v420, %v426
        %s429 = sld [smem:[#allocation8 + $0xf0]]
        %v430 = vstv %s429
        %v431 = vmul.f32 %v430, %v325
        %433 = vrot.lane.b32.xlu0 %v431, 126
        %v434 = vpop.permute.xlu0 %433
        %v436 = vadd.f32 %v428, %v434
        %s437 = sld [smem:[#allocation8 + $0x100]]
        %v438 = vstv %s437
        %v439 = vmul.f32 %v438, %v326
        %441 = vrot.lane.b32.xlu0 %v439, 126
        %v442 = vpop.permute.xlu0 %441
        %v444 = vadd.f32 %v436, %v442
        %s445 = sld [smem:[#allocation8 + $0x110]]
        %v446 = vstv %s445
        %v447 = vmul.f32 %v446, %v327
        %449 = vrot.lane.b32.xlu0 %v447, 126
        %v450 = vpop.permute.xlu0 %449
        %v452 = vadd.f32 %v444, %v450
        %s453 = sld [smem:[#allocation8 + $0x120]]
        %v454 = vstv %s453
        %v455 = vmul.f32 %v454, %v328
        %v456 = vadd.f32 %v452, %v455
        %s457 = sld [smem:[#allocation8 + $0x130]]
        %v458 = vstv %s457
        %v459 = vmul.f32 %v458, %v329
        %v460 = vadd.f32 %v456, %v459
        %s461 = sld [smem:[#allocation8 + $0x140]]
        %v462 = vstv %s461
        %v463 = vmul.f32 %v462, %v330
        %v464 = vadd.f32 %v460, %v463
        %s465 = sld [smem:[#allocation8 + $0x150]]
        %v466 = vstv %s465
        %v467 = vmul.f32 %v466, %v328
        %469 = vrot.lane.b32.xlu0 %v467, 127
        %v470 = vpop.permute.xlu0 %469
        %v472 = vadd.f32 %v464, %v470
        %s473 = sld [smem:[#allocation8 + $0x160]]
        %v474 = vstv %s473
        %v475 = vmul.f32 %v474, %v329
        %477 = vrot.lane.b32.xlu0 %v475, 127
        %v478 = vpop.permute.xlu0 %477
        %v480 = vadd.f32 %v472, %v478
        %s481 = sld [smem:[#allocation8 + $0x170]]
        %v482 = vstv %s481
        %v483 = vmul.f32 %v482, %v330
        %485 = vrot.lane.b32.xlu0 %v483, 127
        %v486 = vpop.permute.xlu0 %485
        %v488 = vadd.f32 %v480, %v486
        %s489 = sld [smem:[#allocation8 + $0x180]]
        %v490 = vstv %s489
        %v491 = vmul.f32 %v490, %v328
        %493 = vrot.lane.b32.xlu0 %v491, 126
        %v494 = vpop.permute.xlu0 %493
        %v496 = vadd.f32 %v488, %v494
        %s497 = sld [smem:[#allocation8 + $0x190]]
        %v498 = vstv %s497
        %v499 = vmul.f32 %v498, %v329
        %501 = vrot.lane.b32.xlu0 %v499, 126
        %v502 = vpop.permute.xlu0 %501
        %v504 = vadd.f32 %v496, %v502
        %s505 = sld [smem:[#allocation8 + $0x1a0]]
        %v506 = vstv %s505
        %v507 = vmul.f32 %v506, %v330
        %509 = vrot.lane.b32.xlu0 %v507, 126
        %v510 = vpop.permute.xlu0 %509
        %v512 = vadd.f32 %v504, %v510
        %v513 = vmax.f32 %v512, 0.0
        %vm514 = vcmask 130048
        %515 = vst.msk [vmem:[%s231] sm:$0xff] %vm514, %v513
        %s516 = sld [smem:[#allocation9 + $0x1]]
        %v517 = vstv %s516
        %s518 = sld [smem:[#allocation8 + $0x1]]
        %v519 = vstv %s518
        %v520 = vmul.f32 %v519, %v320
        %v521 = vadd.f32 %v517, %v520
        %s522 = sld [smem:[#allocation8 + $0x11]]
        %v523 = vstv %s522
        %v524 = vmul.f32 %v523, %v322
        %v525 = vadd.f32 %v521, %v524
        %s526 = sld [smem:[#allocation8 + $0x21]]
        %v527 = vstv %s526
        %v528 = vmul.f32 %v527, %v324
        %v529 = vadd.f32 %v525, %v528
        %s530 = sld [smem:[#allocation8 + $0x31]]
        %v531 = vstv %s530
        %v532 = vmul.f32 %v531, %v320
        %534 = vrot.lane.b32.xlu0 %v532, 127
        %v535 = vpop.permute.xlu0 %534
        %v537 = vadd.f32 %v529, %v535
        %s538 = sld [smem:[#allocation8 + $0x41]]
        %v539 = vstv %s538
        %v540 = vmul.f32 %v539, %v322
        %542 = vrot.lane.b32.xlu0 %v540, 127
        %v543 = vpop.permute.xlu0 %542
        %v545 = vadd.f32 %v537, %v543
        %s546 = sld [smem:[#allocation8 + $0x51]]
        %v547 = vstv %s546
        %v548 = vmul.f32 %v547, %v324
        %550 = vrot.lane.b32.xlu0 %v548, 127
        %v551 = vpop.permute.xlu0 %550
        %v553 = vadd.f32 %v545, %v551
        %s554 = sld [smem:[#allocation8 + $0x61]]
        %v555 = vstv %s554
        %v556 = vmul.f32 %v555, %v320
        %558 = vrot.lane.b32.xlu0 %v556, 126
        %v559 = vpop.permute.xlu0 %558
        %v561 = vadd.f32 %v553, %v559
        %s562 = sld [smem:[#allocation8 + $0x71]]
        %v563 = vstv %s562
        %v564 = vmul.f32 %v563, %v322
        %566 = vrot.lane.b32.xlu0 %v564, 126
        %v567 = vpop.permute.xlu0 %566
        %v569 = vadd.f32 %v561, %v567
        %s570 = sld [smem:[#allocation8 + $0x81]]
        %v571 = vstv %s570
        %v572 = vmul.f32 %v571, %v324
        %574 = vrot.lane.b32.xlu0 %v572, 126
        %v575 = vpop.permute.xlu0 %574
        %v577 = vadd.f32 %v569, %v575
        %s578 = sld [smem:[#allocation8 + $0x91]]
        %v579 = vstv %s578
        %v580 = vmul.f32 %v579, %v325
        %v581 = vadd.f32 %v577, %v580
        %s582 = sld [smem:[#allocation8 + $0xa1]]
        %v583 = vstv %s582
        %v584 = vmul.f32 %v583, %v326
        %v585 = vadd.f32 %v581, %v584
        %s586 = sld [smem:[#allocation8 + $0xb1]]
        %v587 = vstv %s586
        %v588 = vmul.f32 %v587, %v327
        %v589 = vadd.f32 %v585, %v588
        %s590 = sld [smem:[#allocation8 + $0xc1]]
        %v591 = vstv %s590
        %v592 = vmul.f32 %v591, %v325
        %594 = vrot.lane.b32.xlu0 %v592, 127
        %v595 = vpop.permute.xlu0 %594
        %v597 = vadd.f32 %v589, %v595
        %s598 = sld [smem:[#allocation8 + $0xd1]]
        %v599 = vstv %s598
        %v600 = vmul.f32 %v599, %v326
        %602 = vrot.lane.b32.xlu0 %v600, 127
        %v603 = vpop.permute.xlu0 %602
        %v605 = vadd.f32 %v597, %v603
        %s606 = sld [smem:[#allocation8 + $0xe1]]
        %v607 = vstv %s606
        %v608 = vmul.f32 %v607, %v327
        %610 = vrot.lane.b32.xlu0 %v608, 127
        %v611 = vpop.permute.xlu0 %610
        %v613 = vadd.f32 %v605, %v611
        %s614 = sld [smem:[#allocation8 + $0xf1]]
        %v615 = vstv %s614
        %v616 = vmul.f32 %v615, %v325
        %618 = vrot.lane.b32.xlu0 %v616, 126
        %v619 = vpop.permute.xlu0 %618
        %v621 = vadd.f32 %v613, %v619
        %s622 = sld [smem:[#allocation8 + $0x101]]
        %v623 = vstv %s622
        %v624 = vmul.f32 %v623, %v326
        %626 = vrot.lane.b32.xlu0 %v624, 126
        %v627 = vpop.permute.xlu0 %626
        %v629 = vadd.f32 %v621, %v627
        %s630 = sld [smem:[#allocation8 + $0x111]]
        %v631 = vstv %s630
        %v632 = vmul.f32 %v631, %v327
        %634 = vrot.lane.b32.xlu0 %v632, 126
        %v635 = vpop.permute.xlu0 %634
        %v637 = vadd.f32 %v629, %v635
        %s638 = sld [smem:[#allocation8 + $0x121]]
        %v639 = vstv %s638
        %v640 = vmul.f32 %v639, %v328
        %v641 = vadd.f32 %v637, %v640
        %s642 = sld [smem:[#allocation8 + $0x131]]
        %v643 = vstv %s642
        %v644 = vmul.f32 %v643, %v329
        %v645 = vadd.f32 %v641, %v644
        %s646 = sld [smem:[#allocation8 + $0x141]]
        %v647 = vstv %s646
        %v648 = vmul.f32 %v647, %v330
        %v649 = vadd.f32 %v645, %v648
        %s650 = sld [smem:[#allocation8 + $0x151]]
        %v651 = vstv %s650
        %v652 = vmul.f32 %v651, %v328
        %654 = vrot.lane.b32.xlu0 %v652, 127
        %v655 = vpop.permute.xlu0 %654
        %v657 = vadd.f32 %v649, %v655
        %s658 = sld [smem:[#allocation8 + $0x161]]
        %v659 = vstv %s658
        %v660 = vmul.f32 %v659, %v329
        %662 = vrot.lane.b32.xlu0 %v660, 127
        %v663 = vpop.permute.xlu0 %662
        %v665 = vadd.f32 %v657, %v663
        %s666 = sld [smem:[#allocation8 + $0x171]]
        %v667 = vstv %s666
        %v668 = vmul.f32 %v667, %v330
        %670 = vrot.lane.b32.xlu0 %v668, 127
        %v671 = vpop.permute.xlu0 %670
        %v673 = vadd.f32 %v665, %v671
        %s674 = sld [smem:[#allocation8 + $0x181]]
        %v675 = vstv %s674
        %v676 = vmul.f32 %v675, %v328
        %678 = vrot.lane.b32.xlu0 %v676, 126
        %v679 = vpop.permute.xlu0 %678
        %v681 = vadd.f32 %v673, %v679
        %s682 = sld [smem:[#allocation8 + $0x191]]
        %v683 = vstv %s682
        %v684 = vmul.f32 %v683, %v329
        %686 = vrot.lane.b32.xlu0 %v684, 126
        %v687 = vpop.permute.xlu0 %686
        %v689 = vadd.f32 %v681, %v687
        %s690 = sld [smem:[#allocation8 + $0x1a1]]
        %v691 = vstv %s690
        %v692 = vmul.f32 %v691, %v330
        %694 = vrot.lane.b32.xlu0 %v692, 126
        %v695 = vpop.permute.xlu0 %694
        %v697 = vadd.f32 %v689, %v695
        %v698 = vmax.f32 %v697, 0.0
        %s699 = scalar_lea.vmem %s231, 8 [#allocation10]
        %700 = vst.msk [vmem:[%s699] sm:$0xff] %vm514, %v698
        %s701 = sld [smem:[#allocation9 + $0x2]]
        %v702 = vstv %s701
        %s703 = sld [smem:[#allocation8 + $0x2]]
        %v704 = vstv %s703
        %v705 = vmul.f32 %v704, %v320
        %v706 = vadd.f32 %v702, %v705
        %s707 = sld [smem:[#allocation8 + $0x12]]
        %v708 = vstv %s707
        %v709 = vmul.f32 %v708, %v322
        %v710 = vadd.f32 %v706, %v709
        %s711 = sld [smem:[#allocation8 + $0x22]]
        %v712 = vstv %s711
        %v713 = vmul.f32 %v712, %v324
        %v714 = vadd.f32 %v710, %v713
        %s715 = sld [smem:[#allocation8 + $0x32]]
        %v716 = vstv %s715
        %v717 = vmul.f32 %v716, %v320
        %719 = vrot.lane.b32.xlu0 %v717, 127
        %v720 = vpop.permute.xlu0 %719
        %v722 = vadd.f32 %v714, %v720
        %s723 = sld [smem:[#allocation8 + $0x42]]
        %v724 = vstv %s723
        %v725 = vmul.f32 %v724, %v322
        %727 = vrot.lane.b32.xlu0 %v725, 127
        %v728 = vpop.permute.xlu0 %727
        %v730 = vadd.f32 %v722, %v728
        %s731 = sld [smem:[#allocation8 + $0x52]]
        %v732 = vstv %s731
        %v733 = vmul.f32 %v732, %v324
        %735 = vrot.lane.b32.xlu0 %v733, 127
        %v736 = vpop.permute.xlu0 %735
        %v738 = vadd.f32 %v730, %v736
        %s739 = sld [smem:[#allocation8 + $0x62]]
        %v740 = vstv %s739
        %v741 = vmul.f32 %v740, %v320
        %743 = vrot.lane.b32.xlu0 %v741, 126
        %v744 = vpop.permute.xlu0 %743
        %v746 = vadd.f32 %v738, %v744
        %s747 = sld [smem:[#allocation8 + $0x72]]
        %v748 = vstv %s747
        %v749 = vmul.f32 %v748, %v322
        %751 = vrot.lane.b32.xlu0 %v749, 126
        %v752 = vpop.permute.xlu0 %751
        %v754 = vadd.f32 %v746, %v752
        %s755 = sld [smem:[#allocation8 + $0x82]]
        %v756 = vstv %s755
        %v757 = vmul.f32 %v756, %v324
        %759 = vrot.lane.b32.xlu0 %v757, 126
        %v760 = vpop.permute.xlu0 %759
        %v762 = vadd.f32 %v754, %v760
        %s763 = sld [smem:[#allocation8 + $0x92]]
        %v764 = vstv %s763
        %v765 = vmul.f32 %v764, %v325
        %v766 = vadd.f32 %v762, %v765
        %s767 = sld [smem:[#allocation8 + $0xa2]]
        %v768 = vstv %s767
        %v769 = vmul.f32 %v768, %v326
        %v770 = vadd.f32 %v766, %v769
        %s771 = sld [smem:[#allocation8 + $0xb2]]
        %v772 = vstv %s771
        %v773 = vmul.f32 %v772, %v327
        %v774 = vadd.f32 %v770, %v773
        %s775 = sld [smem:[#allocation8 + $0xc2]]
        %v776 = vstv %s775
        %v777 = vmul.f32 %v776, %v325
        %779 = vrot.lane.b32.xlu0 %v777, 127
        %v780 = vpop.permute.xlu0 %779
        %v782 = vadd.f32 %v774, %v780
        %s783 = sld [smem:[#allocation8 + $0xd2]]
        %v784 = vstv %s783
        %v785 = vmul.f32 %v784, %v326
        %787 = vrot.lane.b32.xlu0 %v785, 127
        %v788 = vpop.permute.xlu0 %787
        %v790 = vadd.f32 %v782, %v788
        %s791 = sld [smem:[#allocation8 + $0xe2]]
        %v792 = vstv %s791
        %v793 = vmul.f32 %v792, %v327
        %795 = vrot.lane.b32.xlu0 %v793, 127
        %v796 = vpop.permute.xlu0 %795
        %v798 = vadd.f32 %v790, %v796
        %s799 = sld [smem:[#allocation8 + $0xf2]]
        %v800 = vstv %s799
        %v801 = vmul.f32 %v800, %v325
        %803 = vrot.lane.b32.xlu0 %v801, 126
        %v804 = vpop.permute.xlu0 %803
        %v806 = vadd.f32 %v798, %v804
        %s807 = sld [smem:[#allocation8 + $0x102]]
        %v808 = vstv %s807
        %v809 = vmul.f32 %v808, %v326
        %811 = vrot.lane.b32.xlu0 %v809, 126
        %v812 = vpop.permute.xlu0 %811
        %v814 = vadd.f32 %v806, %v812
        %s815 = sld [smem:[#allocation8 + $0x112]]
        %v816 = vstv %s815
        %v817 = vmul.f32 %v816, %v327
        %819 = vrot.lane.b32.xlu0 %v817, 126
        %v820 = vpop.permute.xlu0 %819
        %v822 = vadd.f32 %v814, %v820
        %s823 = sld [smem:[#allocation8 + $0x122]]
        %v824 = vstv %s823
        %v825 = vmul.f32 %v824, %v328
        %v826 = vadd.f32 %v822, %v825
        %s827 = sld [smem:[#allocation8 + $0x132]]
        %v828 = vstv %s827
        %v829 = vmul.f32 %v828, %v329
        %v830 = vadd.f32 %v826, %v829
        %s831 = sld [smem:[#allocation8 + $0x142]]
        %v832 = vstv %s831
        %v833 = vmul.f32 %v832, %v330
        %v834 = vadd.f32 %v830, %v833
        %s835 = sld [smem:[#allocation8 + $0x152]]
        %v836 = vstv %s835
        %v837 = vmul.f32 %v836, %v328
        %839 = vrot.lane.b32.xlu0 %v837, 127
        %v840 = vpop.permute.xlu0 %839
        %v842 = vadd.f32 %v834, %v840
        %s843 = sld [smem:[#allocation8 + $0x162]]
        %v844 = vstv %s843
        %v845 = vmul.f32 %v844, %v329
        %847 = vrot.lane.b32.xlu0 %v845, 127
        %v848 = vpop.permute.xlu0 %847
        %v850 = vadd.f32 %v842, %v848
        %s851 = sld [smem:[#allocation8 + $0x172]]
        %v852 = vstv %s851
        %v853 = vmul.f32 %v852, %v330
        %855 = vrot.lane.b32.xlu0 %v853, 127
        %v856 = vpop.permute.xlu0 %855
        %v858 = vadd.f32 %v850, %v856
        %s859 = sld [smem:[#allocation8 + $0x182]]
        %v860 = vstv %s859
        %v861 = vmul.f32 %v860, %v328
        %863 = vrot.lane.b32.xlu0 %v861, 126
        %v864 = vpop.permute.xlu0 %863
        %v866 = vadd.f32 %v858, %v864
        %s867 = sld [smem:[#allocation8 + $0x192]]
        %v868 = vstv %s867
        %v869 = vmul.f32 %v868, %v329
        %871 = vrot.lane.b32.xlu0 %v869, 126
        %v872 = vpop.permute.xlu0 %871
        %v874 = vadd.f32 %v866, %v872
        %s875 = sld [smem:[#allocation8 + $0x1a2]]
        %v876 = vstv %s875
        %v877 = vmul.f32 %v876, %v330
        %879 = vrot.lane.b32.xlu0 %v877, 126
        %v880 = vpop.permute.xlu0 %879
        %v882 = vadd.f32 %v874, %v880
        %v883 = vmax.f32 %v882, 0.0
        %s884 = scalar_lea.vmem %s231, 16 [#allocation10]
        %885 = vst.msk [vmem:[%s884] sm:$0xff] %vm514, %v883
        %s886 = sld [smem:[#allocation9 + $0x3]]
        %v887 = vstv %s886
        %s888 = sld [smem:[#allocation8 + $0x3]]
        %v889 = vstv %s888
        %v890 = vmul.f32 %v889, %v320
        %v891 = vadd.f32 %v887, %v890
        %s892 = sld [smem:[#allocation8 + $0x13]]
        %v893 = vstv %s892
        %v894 = vmul.f32 %v893, %v322
        %v895 = vadd.f32 %v891, %v894
        %s896 = sld [smem:[#allocation8 + $0x23]]
        %v897 = vstv %s896
        %v898 = vmul.f32 %v897, %v324
        %v899 = vadd.f32 %v895, %v898
        %s900 = sld [smem:[#allocation8 + $0x33]]
        %v901 = vstv %s900
        %v902 = vmul.f32 %v901, %v320
        %904 = vrot.lane.b32.xlu0 %v902, 127
        %v905 = vpop.permute.xlu0 %904
        %v907 = vadd.f32 %v899, %v905
        %s908 = sld [smem:[#allocation8 + $0x43]]
        %v909 = vstv %s908
        %v910 = vmul.f32 %v909, %v322
        %912 = vrot.lane.b32.xlu0 %v910, 127
        %v913 = vpop.permute.xlu0 %912
        %v915 = vadd.f32 %v907, %v913
        %s916 = sld [smem:[#allocation8 + $0x53]]
        %v917 = vstv %s916
        %v918 = vmul.f32 %v917, %v324
        %920 = vrot.lane.b32.xlu0 %v918, 127
        %v921 = vpop.permute.xlu0 %920
        %v923 = vadd.f32 %v915, %v921
        %s924 = sld [smem:[#allocation8 + $0x63]]
        %v925 = vstv %s924
        %v926 = vmul.f32 %v925, %v320
        %928 = vrot.lane.b32.xlu0 %v926, 126
        %v929 = vpop.permute.xlu0 %928
        %v931 = vadd.f32 %v923, %v929
        %s932 = sld [smem:[#allocation8 + $0x73]]
        %v933 = vstv %s932
        %v934 = vmul.f32 %v933, %v322
        %936 = vrot.lane.b32.xlu0 %v934, 126
        %v937 = vpop.permute.xlu0 %936
        %v939 = vadd.f32 %v931, %v937
        %s940 = sld [smem:[#allocation8 + $0x83]]
        %v941 = vstv %s940
        %v942 = vmul.f32 %v941, %v324
        %944 = vrot.lane.b32.xlu0 %v942, 126
        %v945 = vpop.permute.xlu0 %944
        %v947 = vadd.f32 %v939, %v945
        %s948 = sld [smem:[#allocation8 + $0x93]]
        %v949 = vstv %s948
        %v950 = vmul.f32 %v949, %v325
        %v951 = vadd.f32 %v947, %v950
        %s952 = sld [smem:[#allocation8 + $0xa3]]
        %v953 = vstv %s952
        %v954 = vmul.f32 %v953, %v326
        %v955 = vadd.f32 %v951, %v954
        %s956 = sld [smem:[#allocation8 + $0xb3]]
        %v957 = vstv %s956
        %v958 = vmul.f32 %v957, %v327
        %v959 = vadd.f32 %v955, %v958
        %s960 = sld [smem:[#allocation8 + $0xc3]]
        %v961 = vstv %s960
        %v962 = vmul.f32 %v961, %v325
        %964 = vrot.lane.b32.xlu0 %v962, 127
        %v965 = vpop.permute.xlu0 %964
        %v967 = vadd.f32 %v959, %v965
        %s968 = sld [smem:[#allocation8 + $0xd3]]
        %v969 = vstv %s968
        %v970 = vmul.f32 %v969, %v326
        %972 = vrot.lane.b32.xlu0 %v970, 127
        %v973 = vpop.permute.xlu0 %972
        %v975 = vadd.f32 %v967, %v973
        %s976 = sld [smem:[#allocation8 + $0xe3]]
        %v977 = vstv %s976
        %v978 = vmul.f32 %v977, %v327
        %980 = vrot.lane.b32.xlu0 %v978, 127
        %v981 = vpop.permute.xlu0 %980
        %v983 = vadd.f32 %v975, %v981
        %s984 = sld [smem:[#allocation8 + $0xf3]]
        %v985 = vstv %s984
        %v986 = vmul.f32 %v985, %v325
        %988 = vrot.lane.b32.xlu0 %v986, 126
        %v989 = vpop.permute.xlu0 %988
        %v991 = vadd.f32 %v983, %v989
        %s992 = sld [smem:[#allocation8 + $0x103]]
        %v993 = vstv %s992
        %v994 = vmul.f32 %v993, %v326
        %996 = vrot.lane.b32.xlu0 %v994, 126
        %v997 = vpop.permute.xlu0 %996
        %v999 = vadd.f32 %v991, %v997
        %s1000 = sld [smem:[#allocation8 + $0x113]]
        %v1001 = vstv %s1000
        %v1002 = vmul.f32 %v1001, %v327
        %1004 = vrot.lane.b32.xlu0 %v1002, 126
        %v1005 = vpop.permute.xlu0 %1004
        %v1007 = vadd.f32 %v999, %v1005
        %s1008 = sld [smem:[#allocation8 + $0x123]]
        %v1009 = vstv %s1008
        %v1010 = vmul.f32 %v1009, %v328
        %v1011 = vadd.f32 %v1007, %v1010
        %s1012 = sld [smem:[#allocation8 + $0x133]]
        %v1013 = vstv %s1012
        %v1014 = vmul.f32 %v1013, %v329
        %v1015 = vadd.f32 %v1011, %v1014
        %s1016 = sld [smem:[#allocation8 + $0x143]]
        %v1017 = vstv %s1016
        %v1018 = vmul.f32 %v1017, %v330
        %v1019 = vadd.f32 %v1015, %v1018
        %s1020 = sld [smem:[#allocation8 + $0x153]]
        %v1021 = vstv %s1020
        %v1022 = vmul.f32 %v1021, %v328
        %1024 = vrot.lane.b32.xlu0 %v1022, 127
        %v1025 = vpop.permute.xlu0 %1024
        %v1027 = vadd.f32 %v1019, %v1025
        %s1028 = sld [smem:[#allocation8 + $0x163]]
        %v1029 = vstv %s1028
        %v1030 = vmul.f32 %v1029, %v329
        %1032 = vrot.lane.b32.xlu0 %v1030, 127
        %v1033 = vpop.permute.xlu0 %1032
        %v1035 = vadd.f32 %v1027, %v1033
        %s1036 = sld [smem:[#allocation8 + $0x173]]
        %v1037 = vstv %s1036
        %v1038 = vmul.f32 %v1037, %v330
        %1040 = vrot.lane.b32.xlu0 %v1038, 127
        %v1041 = vpop.permute.xlu0 %1040
        %v1043 = vadd.f32 %v1035, %v1041
        %s1044 = sld [smem:[#allocation8 + $0x183]]
        %v1045 = vstv %s1044
        %v1046 = vmul.f32 %v1045, %v328
        %1048 = vrot.lane.b32.xlu0 %v1046, 126
        %v1049 = vpop.permute.xlu0 %1048
        %v1051 = vadd.f32 %v1043, %v1049
        %s1052 = sld [smem:[#allocation8 + $0x193]]
        %v1053 = vstv %s1052
        %v1054 = vmul.f32 %v1053, %v329
        %1056 = vrot.lane.b32.xlu0 %v1054, 126
        %v1057 = vpop.permute.xlu0 %1056
        %v1059 = vadd.f32 %v1051, %v1057
        %s1060 = sld [smem:[#allocation8 + $0x1a3]]
        %v1061 = vstv %s1060
        %v1062 = vmul.f32 %v1061, %v330
        %1064 = vrot.lane.b32.xlu0 %v1062, 126
        %v1065 = vpop.permute.xlu0 %1064
        %v1067 = vadd.f32 %v1059, %v1065
        %v1068 = vmax.f32 %v1067, 0.0
        %s1069 = scalar_lea.vmem %s231, 24 [#allocation10]
        %1070 = vst.msk [vmem:[%s1069] sm:$0xff] %vm514, %v1068
        %s1071 = sld [smem:[#allocation9 + $0x4]]
        %v1072 = vstv %s1071
        %s1073 = sld [smem:[#allocation8 + $0x4]]
        %v1074 = vstv %s1073
        %v1075 = vmul.f32 %v1074, %v320
        %v1076 = vadd.f32 %v1072, %v1075
        %s1077 = sld [smem:[#allocation8 + $0x14]]
        %v1078 = vstv %s1077
        %v1079 = vmul.f32 %v1078, %v322
        %v1080 = vadd.f32 %v1076, %v1079
        %s1081 = sld [smem:[#allocation8 + $0x24]]
        %v1082 = vstv %s1081
        %v1083 = vmul.f32 %v1082, %v324
        %v1084 = vadd.f32 %v1080, %v1083
        %s1085 = sld [smem:[#allocation8 + $0x34]]
        %v1086 = vstv %s1085
        %v1087 = vmul.f32 %v1086, %v320
        %1089 = vrot.lane.b32.xlu0 %v1087, 127
        %v1090 = vpop.permute.xlu0 %1089
        %v1092 = vadd.f32 %v1084, %v1090
        %s1093 = sld [smem:[#allocation8 + $0x44]]
        %v1094 = vstv %s1093
        %v1095 = vmul.f32 %v1094, %v322
        %1097 = vrot.lane.b32.xlu0 %v1095, 127
        %v1098 = vpop.permute.xlu0 %1097
        %v1100 = vadd.f32 %v1092, %v1098
        %s1101 = sld [smem:[#allocation8 + $0x54]]
        %v1102 = vstv %s1101
        %v1103 = vmul.f32 %v1102, %v324
        %1105 = vrot.lane.b32.xlu0 %v1103, 127
        %v1106 = vpop.permute.xlu0 %1105
        %v1108 = vadd.f32 %v1100, %v1106
        %s1109 = sld [smem:[#allocation8 + $0x64]]
        %v1110 = vstv %s1109
        %v1111 = vmul.f32 %v1110, %v320
        %1113 = vrot.lane.b32.xlu0 %v1111, 126
        %v1114 = vpop.permute.xlu0 %1113
        %v1116 = vadd.f32 %v1108, %v1114
        %s1117 = sld [smem:[#allocation8 + $0x74]]
        %v1118 = vstv %s1117
        %v1119 = vmul.f32 %v1118, %v322
        %1121 = vrot.lane.b32.xlu0 %v1119, 126
        %v1122 = vpop.permute.xlu0 %1121
        %v1124 = vadd.f32 %v1116, %v1122
        %s1125 = sld [smem:[#allocation8 + $0x84]]
        %v1126 = vstv %s1125
        %v1127 = vmul.f32 %v1126, %v324
        %1129 = vrot.lane.b32.xlu0 %v1127, 126
        %v1130 = vpop.permute.xlu0 %1129
        %v1132 = vadd.f32 %v1124, %v1130
        %s1133 = sld [smem:[#allocation8 + $0x94]]
        %v1134 = vstv %s1133
        %v1135 = vmul.f32 %v1134, %v325
        %v1136 = vadd.f32 %v1132, %v1135
        %s1137 = sld [smem:[#allocation8 + $0xa4]]
        %v1138 = vstv %s1137
        %v1139 = vmul.f32 %v1138, %v326
        %v1140 = vadd.f32 %v1136, %v1139
        %s1141 = sld [smem:[#allocation8 + $0xb4]]
        %v1142 = vstv %s1141
        %v1143 = vmul.f32 %v1142, %v327
        %v1144 = vadd.f32 %v1140, %v1143
        %s1145 = sld [smem:[#allocation8 + $0xc4]]
        %v1146 = vstv %s1145
        %v1147 = vmul.f32 %v1146, %v325
        %1149 = vrot.lane.b32.xlu0 %v1147, 127
        %v1150 = vpop.permute.xlu0 %1149
        %v1152 = vadd.f32 %v1144, %v1150
        %s1153 = sld [smem:[#allocation8 + $0xd4]]
        %v1154 = vstv %s1153
        %v1155 = vmul.f32 %v1154, %v326
        %1157 = vrot.lane.b32.xlu0 %v1155, 127
        %v1158 = vpop.permute.xlu0 %1157
        %v1160 = vadd.f32 %v1152, %v1158
        %s1161 = sld [smem:[#allocation8 + $0xe4]]
        %v1162 = vstv %s1161
        %v1163 = vmul.f32 %v1162, %v327
        %1165 = vrot.lane.b32.xlu0 %v1163, 127
        %v1166 = vpop.permute.xlu0 %1165
        %v1168 = vadd.f32 %v1160, %v1166
        %s1169 = sld [smem:[#allocation8 + $0xf4]]
        %v1170 = vstv %s1169
        %v1171 = vmul.f32 %v1170, %v325
        %1173 = vrot.lane.b32.xlu0 %v1171, 126
        %v1174 = vpop.permute.xlu0 %1173
        %v1176 = vadd.f32 %v1168, %v1174
        %s1177 = sld [smem:[#allocation8 + $0x104]]
        %v1178 = vstv %s1177
        %v1179 = vmul.f32 %v1178, %v326
        %1181 = vrot.lane.b32.xlu0 %v1179, 126
        %v1182 = vpop.permute.xlu0 %1181
        %v1184 = vadd.f32 %v1176, %v1182
        %s1185 = sld [smem:[#allocation8 + $0x114]]
        %v1186 = vstv %s1185
        %v1187 = vmul.f32 %v1186, %v327
        %1189 = vrot.lane.b32.xlu0 %v1187, 126
        %v1190 = vpop.permute.xlu0 %1189
        %v1192 = vadd.f32 %v1184, %v1190
        %s1193 = sld [smem:[#allocation8 + $0x124]]
        %v1194 = vstv %s1193
        %v1195 = vmul.f32 %v1194, %v328
        %v1196 = vadd.f32 %v1192, %v1195
        %s1197 = sld [smem:[#allocation8 + $0x134]]
        %v1198 = vstv %s1197
        %v1199 = vmul.f32 %v1198, %v329
        %v1200 = vadd.f32 %v1196, %v1199
        %s1201 = sld [smem:[#allocation8 + $0x144]]
        %v1202 = vstv %s1201
        %v1203 = vmul.f32 %v1202, %v330
        %v1204 = vadd.f32 %v1200, %v1203
        %s1205 = sld [smem:[#allocation8 + $0x154]]
        %v1206 = vstv %s1205
        %v1207 = vmul.f32 %v1206, %v328
        %1209 = vrot.lane.b32.xlu0 %v1207, 127
        %v1210 = vpop.permute.xlu0 %1209
        %v1212 = vadd.f32 %v1204, %v1210
        %s1213 = sld [smem:[#allocation8 + $0x164]]
        %v1214 = vstv %s1213
        %v1215 = vmul.f32 %v1214, %v329
        %1217 = vrot.lane.b32.xlu0 %v1215, 127
        %v1218 = vpop.permute.xlu0 %1217
        %v1220 = vadd.f32 %v1212, %v1218
        %s1221 = sld [smem:[#allocation8 + $0x174]]
        %v1222 = vstv %s1221
        %v1223 = vmul.f32 %v1222, %v330
        %1225 = vrot.lane.b32.xlu0 %v1223, 127
        %v1226 = vpop.permute.xlu0 %1225
        %v1228 = vadd.f32 %v1220, %v1226
        %s1229 = sld [smem:[#allocation8 + $0x184]]
        %v1230 = vstv %s1229
        %v1231 = vmul.f32 %v1230, %v328
        %1233 = vrot.lane.b32.xlu0 %v1231, 126
        %v1234 = vpop.permute.xlu0 %1233
        %v1236 = vadd.f32 %v1228, %v1234
        %s1237 = sld [smem:[#allocation8 + $0x194]]
        %v1238 = vstv %s1237
        %v1239 = vmul.f32 %v1238, %v329
        %1241 = vrot.lane.b32.xlu0 %v1239, 126
        %v1242 = vpop.permute.xlu0 %1241
        %v1244 = vadd.f32 %v1236, %v1242
        %s1245 = sld [smem:[#allocation8 + $0x1a4]]
        %v1246 = vstv %s1245
        %v1247 = vmul.f32 %v1246, %v330
        %1249 = vrot.lane.b32.xlu0 %v1247, 126
        %v1250 = vpop.permute.xlu0 %1249
        %v1252 = vadd.f32 %v1244, %v1250
        %v1253 = vmax.f32 %v1252, 0.0
        %s1254 = scalar_lea.vmem %s231, 32 [#allocation10]
        %1255 = vst.msk [vmem:[%s1254] sm:$0xff] %vm514, %v1253
        %s1256 = sld [smem:[#allocation9 + $0x5]]
        %v1257 = vstv %s1256
        %s1258 = sld [smem:[#allocation8 + $0x5]]
        %v1259 = vstv %s1258
        %v1260 = vmul.f32 %v1259, %v320
        %v1261 = vadd.f32 %v1257, %v1260
        %s1262 = sld [smem:[#allocation8 + $0x15]]
        %v1263 = vstv %s1262
        %v1264 = vmul.f32 %v1263, %v322
        %v1265 = vadd.f32 %v1261, %v1264
        %s1266 = sld [smem:[#allocation8 + $0x25]]
        %v1267 = vstv %s1266
        %v1268 = vmul.f32 %v1267, %v324
        %v1269 = vadd.f32 %v1265, %v1268
        %s1270 = sld [smem:[#allocation8 + $0x35]]
        %v1271 = vstv %s1270
        %v1272 = vmul.f32 %v1271, %v320
        %1274 = vrot.lane.b32.xlu0 %v1272, 127
        %v1275 = vpop.permute.xlu0 %1274
        %v1277 = vadd.f32 %v1269, %v1275
        %s1278 = sld [smem:[#allocation8 + $0x45]]
        %v1279 = vstv %s1278
        %v1280 = vmul.f32 %v1279, %v322
        %1282 = vrot.lane.b32.xlu0 %v1280, 127
        %v1283 = vpop.permute.xlu0 %1282
        %v1285 = vadd.f32 %v1277, %v1283
        %s1286 = sld [smem:[#allocation8 + $0x55]]
        %v1287 = vstv %s1286
        %v1288 = vmul.f32 %v1287, %v324
        %1290 = vrot.lane.b32.xlu0 %v1288, 127
        %v1291 = vpop.permute.xlu0 %1290
        %v1293 = vadd.f32 %v1285, %v1291
        %s1294 = sld [smem:[#allocation8 + $0x65]]
        %v1295 = vstv %s1294
        %v1296 = vmul.f32 %v1295, %v320
        %1298 = vrot.lane.b32.xlu0 %v1296, 126
        %v1299 = vpop.permute.xlu0 %1298
        %v1301 = vadd.f32 %v1293, %v1299
        %s1302 = sld [smem:[#allocation8 + $0x75]]
        %v1303 = vstv %s1302
        %v1304 = vmul.f32 %v1303, %v322
        %1306 = vrot.lane.b32.xlu0 %v1304, 126
        %v1307 = vpop.permute.xlu0 %1306
        %v1309 = vadd.f32 %v1301, %v1307
        %s1310 = sld [smem:[#allocation8 + $0x85]]
        %v1311 = vstv %s1310
        %v1312 = vmul.f32 %v1311, %v324
        %1314 = vrot.lane.b32.xlu0 %v1312, 126
        %v1315 = vpop.permute.xlu0 %1314
        %v1317 = vadd.f32 %v1309, %v1315
        %s1318 = sld [smem:[#allocation8 + $0x95]]
        %v1319 = vstv %s1318
        %v1320 = vmul.f32 %v1319, %v325
        %v1321 = vadd.f32 %v1317, %v1320
        %s1322 = sld [smem:[#allocation8 + $0xa5]]
        %v1323 = vstv %s1322
        %v1324 = vmul.f32 %v1323, %v326
        %v1325 = vadd.f32 %v1321, %v1324
        %s1326 = sld [smem:[#allocation8 + $0xb5]]
        %v1327 = vstv %s1326
        %v1328 = vmul.f32 %v1327, %v327
        %v1329 = vadd.f32 %v1325, %v1328
        %s1330 = sld [smem:[#allocation8 + $0xc5]]
        %v1331 = vstv %s1330
        %v1332 = vmul.f32 %v1331, %v325
        %1334 = vrot.lane.b32.xlu0 %v1332, 127
        %v1335 = vpop.permute.xlu0 %1334
        %v1337 = vadd.f32 %v1329, %v1335
        %s1338 = sld [smem:[#allocation8 + $0xd5]]
        %v1339 = vstv %s1338
        %v1340 = vmul.f32 %v1339, %v326
        %1342 = vrot.lane.b32.xlu0 %v1340, 127
        %v1343 = vpop.permute.xlu0 %1342
        %v1345 = vadd.f32 %v1337, %v1343
        %s1346 = sld [smem:[#allocation8 + $0xe5]]
        %v1347 = vstv %s1346
        %v1348 = vmul.f32 %v1347, %v327
        %1350 = vrot.lane.b32.xlu0 %v1348, 127
        %v1351 = vpop.permute.xlu0 %1350
        %v1353 = vadd.f32 %v1345, %v1351
        %s1354 = sld [smem:[#allocation8 + $0xf5]]
        %v1355 = vstv %s1354
        %v1356 = vmul.f32 %v1355, %v325
        %1358 = vrot.lane.b32.xlu0 %v1356, 126
        %v1359 = vpop.permute.xlu0 %1358
        %v1361 = vadd.f32 %v1353, %v1359
        %s1362 = sld [smem:[#allocation8 + $0x105]]
        %v1363 = vstv %s1362
        %v1364 = vmul.f32 %v1363, %v326
        %1366 = vrot.lane.b32.xlu0 %v1364, 126
        %v1367 = vpop.permute.xlu0 %1366
        %v1369 = vadd.f32 %v1361, %v1367
        %s1370 = sld [smem:[#allocation8 + $0x115]]
        %v1371 = vstv %s1370
        %v1372 = vmul.f32 %v1371, %v327
        %1374 = vrot.lane.b32.xlu0 %v1372, 126
        %v1375 = vpop.permute.xlu0 %1374
        %v1377 = vadd.f32 %v1369, %v1375
        %s1378 = sld [smem:[#allocation8 + $0x125]]
        %v1379 = vstv %s1378
        %v1380 = vmul.f32 %v1379, %v328
        %v1381 = vadd.f32 %v1377, %v1380
        %s1382 = sld [smem:[#allocation8 + $0x135]]
        %v1383 = vstv %s1382
        %v1384 = vmul.f32 %v1383, %v329
        %v1385 = vadd.f32 %v1381, %v1384
        %s1386 = sld [smem:[#allocation8 + $0x145]]
        %v1387 = vstv %s1386
        %v1388 = vmul.f32 %v1387, %v330
        %v1389 = vadd.f32 %v1385, %v1388
        %s1390 = sld [smem:[#allocation8 + $0x155]]
        %v1391 = vstv %s1390
        %v1392 = vmul.f32 %v1391, %v328
        %1394 = vrot.lane.b32.xlu0 %v1392, 127
        %v1395 = vpop.permute.xlu0 %1394
        %v1397 = vadd.f32 %v1389, %v1395
        %s1398 = sld [smem:[#allocation8 + $0x165]]
        %v1399 = vstv %s1398
        %v1400 = vmul.f32 %v1399, %v329
        %1402 = vrot.lane.b32.xlu0 %v1400, 127
        %v1403 = vpop.permute.xlu0 %1402
        %v1405 = vadd.f32 %v1397, %v1403
        %s1406 = sld [smem:[#allocation8 + $0x175]]
        %v1407 = vstv %s1406
        %v1408 = vmul.f32 %v1407, %v330
        %1410 = vrot.lane.b32.xlu0 %v1408, 127
        %v1411 = vpop.permute.xlu0 %1410
        %v1413 = vadd.f32 %v1405, %v1411
        %s1414 = sld [smem:[#allocation8 + $0x185]]
        %v1415 = vstv %s1414
        %v1416 = vmul.f32 %v1415, %v328
        %1418 = vrot.lane.b32.xlu0 %v1416, 126
        %v1419 = vpop.permute.xlu0 %1418
        %v1421 = vadd.f32 %v1413, %v1419
        %s1422 = sld [smem:[#allocation8 + $0x195]]
        %v1423 = vstv %s1422
        %v1424 = vmul.f32 %v1423, %v329
        %1426 = vrot.lane.b32.xlu0 %v1424, 126
        %v1427 = vpop.permute.xlu0 %1426
        %v1429 = vadd.f32 %v1421, %v1427
        %s1430 = sld [smem:[#allocation8 + $0x1a5]]
        %v1431 = vstv %s1430
        %v1432 = vmul.f32 %v1431, %v330
        %1434 = vrot.lane.b32.xlu0 %v1432, 126
        %v1435 = vpop.permute.xlu0 %1434
        %v1437 = vadd.f32 %v1429, %v1435
        %v1438 = vmax.f32 %v1437, 0.0
        %s1439 = scalar_lea.vmem %s231, 40 [#allocation10]
        %1440 = vst.msk [vmem:[%s1439] sm:$0xff] %vm514, %v1438
        %s1441 = sld [smem:[#allocation9 + $0x6]]
        %v1442 = vstv %s1441
        %s1443 = sld [smem:[#allocation8 + $0x6]]
        %v1444 = vstv %s1443
        %v1445 = vmul.f32 %v1444, %v320
        %v1446 = vadd.f32 %v1442, %v1445
        %s1447 = sld [smem:[#allocation8 + $0x16]]
        %v1448 = vstv %s1447
        %v1449 = vmul.f32 %v1448, %v322
        %v1450 = vadd.f32 %v1446, %v1449
        %s1451 = sld [smem:[#allocation8 + $0x26]]
        %v1452 = vstv %s1451
        %v1453 = vmul.f32 %v1452, %v324
        %v1454 = vadd.f32 %v1450, %v1453
        %s1455 = sld [smem:[#allocation8 + $0x36]]
        %v1456 = vstv %s1455
        %v1457 = vmul.f32 %v1456, %v320
        %1459 = vrot.lane.b32.xlu0 %v1457, 127
        %v1460 = vpop.permute.xlu0 %1459
        %v1462 = vadd.f32 %v1454, %v1460
        %s1463 = sld [smem:[#allocation8 + $0x46]]
        %v1464 = vstv %s1463
        %v1465 = vmul.f32 %v1464, %v322
        %1467 = vrot.lane.b32.xlu0 %v1465, 127
        %v1468 = vpop.permute.xlu0 %1467
        %v1470 = vadd.f32 %v1462, %v1468
        %s1471 = sld [smem:[#allocation8 + $0x56]]
        %v1472 = vstv %s1471
        %v1473 = vmul.f32 %v1472, %v324
        %1475 = vrot.lane.b32.xlu0 %v1473, 127
        %v1476 = vpop.permute.xlu0 %1475
        %v1478 = vadd.f32 %v1470, %v1476
        %s1479 = sld [smem:[#allocation8 + $0x66]]
        %v1480 = vstv %s1479
        %v1481 = vmul.f32 %v1480, %v320
        %1483 = vrot.lane.b32.xlu0 %v1481, 126
        %v1484 = vpop.permute.xlu0 %1483
        %v1486 = vadd.f32 %v1478, %v1484
        %s1487 = sld [smem:[#allocation8 + $0x76]]
        %v1488 = vstv %s1487
        %v1489 = vmul.f32 %v1488, %v322
        %1491 = vrot.lane.b32.xlu0 %v1489, 126
        %v1492 = vpop.permute.xlu0 %1491
        %v1494 = vadd.f32 %v1486, %v1492
        %s1495 = sld [smem:[#allocation8 + $0x86]]
        %v1496 = vstv %s1495
        %v1497 = vmul.f32 %v1496, %v324
        %1499 = vrot.lane.b32.xlu0 %v1497, 126
        %v1500 = vpop.permute.xlu0 %1499
        %v1502 = vadd.f32 %v1494, %v1500
        %s1503 = sld [smem:[#allocation8 + $0x96]]
        %v1504 = vstv %s1503
        %v1505 = vmul.f32 %v1504, %v325
        %v1506 = vadd.f32 %v1502, %v1505
        %s1507 = sld [smem:[#allocation8 + $0xa6]]
        %v1508 = vstv %s1507
        %v1509 = vmul.f32 %v1508, %v326
        %v1510 = vadd.f32 %v1506, %v1509
        %s1511 = sld [smem:[#allocation8 + $0xb6]]
        %v1512 = vstv %s1511
        %v1513 = vmul.f32 %v1512, %v327
        %v1514 = vadd.f32 %v1510, %v1513
        %s1515 = sld [smem:[#allocation8 + $0xc6]]
        %v1516 = vstv %s1515
        %v1517 = vmul.f32 %v1516, %v325
        %1519 = vrot.lane.b32.xlu0 %v1517, 127
        %v1520 = vpop.permute.xlu0 %1519
        %v1522 = vadd.f32 %v1514, %v1520
        %s1523 = sld [smem:[#allocation8 + $0xd6]]
        %v1524 = vstv %s1523
        %v1525 = vmul.f32 %v1524, %v326
        %1527 = vrot.lane.b32.xlu0 %v1525, 127
        %v1528 = vpop.permute.xlu0 %1527
        %v1530 = vadd.f32 %v1522, %v1528
        %s1531 = sld [smem:[#allocation8 + $0xe6]]
        %v1532 = vstv %s1531
        %v1533 = vmul.f32 %v1532, %v327
        %1535 = vrot.lane.b32.xlu0 %v1533, 127
        %v1536 = vpop.permute.xlu0 %1535
        %v1538 = vadd.f32 %v1530, %v1536
        %s1539 = sld [smem:[#allocation8 + $0xf6]]
        %v1540 = vstv %s1539
        %v1541 = vmul.f32 %v1540, %v325
        %1543 = vrot.lane.b32.xlu0 %v1541, 126
        %v1544 = vpop.permute.xlu0 %1543
        %v1546 = vadd.f32 %v1538, %v1544
        %s1547 = sld [smem:[#allocation8 + $0x106]]
        %v1548 = vstv %s1547
        %v1549 = vmul.f32 %v1548, %v326
        %1551 = vrot.lane.b32.xlu0 %v1549, 126
        %v1552 = vpop.permute.xlu0 %1551
        %v1554 = vadd.f32 %v1546, %v1552
        %s1555 = sld [smem:[#allocation8 + $0x116]]
        %v1556 = vstv %s1555
        %v1557 = vmul.f32 %v1556, %v327
        %1559 = vrot.lane.b32.xlu0 %v1557, 126
        %v1560 = vpop.permute.xlu0 %1559
        %v1562 = vadd.f32 %v1554, %v1560
        %s1563 = sld [smem:[#allocation8 + $0x126]]
        %v1564 = vstv %s1563
        %v1565 = vmul.f32 %v1564, %v328
        %v1566 = vadd.f32 %v1562, %v1565
        %s1567 = sld [smem:[#allocation8 + $0x136]]
        %v1568 = vstv %s1567
        %v1569 = vmul.f32 %v1568, %v329
        %v1570 = vadd.f32 %v1566, %v1569
        %s1571 = sld [smem:[#allocation8 + $0x146]]
        %v1572 = vstv %s1571
        %v1573 = vmul.f32 %v1572, %v330
        %v1574 = vadd.f32 %v1570, %v1573
        %s1575 = sld [smem:[#allocation8 + $0x156]]
        %v1576 = vstv %s1575
        %v1577 = vmul.f32 %v1576, %v328
        %1579 = vrot.lane.b32.xlu0 %v1577, 127
        %v1580 = vpop.permute.xlu0 %1579
        %v1582 = vadd.f32 %v1574, %v1580
        %s1583 = sld [smem:[#allocation8 + $0x166]]
        %v1584 = vstv %s1583
        %v1585 = vmul.f32 %v1584, %v329
        %1587 = vrot.lane.b32.xlu0 %v1585, 127
        %v1588 = vpop.permute.xlu0 %1587
        %v1590 = vadd.f32 %v1582, %v1588
        %s1591 = sld [smem:[#allocation8 + $0x176]]
        %v1592 = vstv %s1591
        %v1593 = vmul.f32 %v1592, %v330
        %1595 = vrot.lane.b32.xlu0 %v1593, 127
        %v1596 = vpop.permute.xlu0 %1595
        %v1598 = vadd.f32 %v1590, %v1596
        %s1599 = sld [smem:[#allocation8 + $0x186]]
        %v1600 = vstv %s1599
        %v1601 = vmul.f32 %v1600, %v328
        %1603 = vrot.lane.b32.xlu0 %v1601, 126
        %v1604 = vpop.permute.xlu0 %1603
        %v1606 = vadd.f32 %v1598, %v1604
        %s1607 = sld [smem:[#allocation8 + $0x196]]
        %v1608 = vstv %s1607
        %v1609 = vmul.f32 %v1608, %v329
        %1611 = vrot.lane.b32.xlu0 %v1609, 126
        %v1612 = vpop.permute.xlu0 %1611
        %v1614 = vadd.f32 %v1606, %v1612
        %s1615 = sld [smem:[#allocation8 + $0x1a6]]
        %v1616 = vstv %s1615
        %v1617 = vmul.f32 %v1616, %v330
        %1619 = vrot.lane.b32.xlu0 %v1617, 126
        %v1620 = vpop.permute.xlu0 %1619
        %v1622 = vadd.f32 %v1614, %v1620
        %v1623 = vmax.f32 %v1622, 0.0
        %s1624 = scalar_lea.vmem %s231, 48 [#allocation10]
        %1625 = vst.msk [vmem:[%s1624] sm:$0xff] %vm514, %v1623
        %s1626 = sld [smem:[#allocation9 + $0x7]]
        %v1627 = vstv %s1626
        %s1628 = sld [smem:[#allocation8 + $0x7]]
        %v1629 = vstv %s1628
        %v1630 = vmul.f32 %v1629, %v320
        %v1631 = vadd.f32 %v1627, %v1630
        %s1632 = sld [smem:[#allocation8 + $0x17]]
        %v1633 = vstv %s1632
        %v1634 = vmul.f32 %v1633, %v322
        %v1635 = vadd.f32 %v1631, %v1634
        %s1636 = sld [smem:[#allocation8 + $0x27]]
        %v1637 = vstv %s1636
        %v1638 = vmul.f32 %v1637, %v324
        %v1639 = vadd.f32 %v1635, %v1638
        %s1640 = sld [smem:[#allocation8 + $0x37]]
        %v1641 = vstv %s1640
        %v1642 = vmul.f32 %v1641, %v320
        %1644 = vrot.lane.b32.xlu0 %v1642, 127
        %v1645 = vpop.permute.xlu0 %1644
        %v1647 = vadd.f32 %v1639, %v1645
        %s1648 = sld [smem:[#allocation8 + $0x47]]
        %v1649 = vstv %s1648
        %v1650 = vmul.f32 %v1649, %v322
        %1652 = vrot.lane.b32.xlu0 %v1650, 127
        %v1653 = vpop.permute.xlu0 %1652
        %v1655 = vadd.f32 %v1647, %v1653
        %s1656 = sld [smem:[#allocation8 + $0x57]]
        %v1657 = vstv %s1656
        %v1658 = vmul.f32 %v1657, %v324
        %1660 = vrot.lane.b32.xlu0 %v1658, 127
        %v1661 = vpop.permute.xlu0 %1660
        %v1663 = vadd.f32 %v1655, %v1661
        %s1664 = sld [smem:[#allocation8 + $0x67]]
        %v1665 = vstv %s1664
        %v1666 = vmul.f32 %v1665, %v320
        %1668 = vrot.lane.b32.xlu0 %v1666, 126
        %v1669 = vpop.permute.xlu0 %1668
        %v1671 = vadd.f32 %v1663, %v1669
        %s1672 = sld [smem:[#allocation8 + $0x77]]
        %v1673 = vstv %s1672
        %v1674 = vmul.f32 %v1673, %v322
        %1676 = vrot.lane.b32.xlu0 %v1674, 126
        %v1677 = vpop.permute.xlu0 %1676
        %v1679 = vadd.f32 %v1671, %v1677
        %s1680 = sld [smem:[#allocation8 + $0x87]]
        %v1681 = vstv %s1680
        %v1682 = vmul.f32 %v1681, %v324
        %1684 = vrot.lane.b32.xlu0 %v1682, 126
        %v1685 = vpop.permute.xlu0 %1684
        %v1687 = vadd.f32 %v1679, %v1685
        %s1688 = sld [smem:[#allocation8 + $0x97]]
        %v1689 = vstv %s1688
        %v1690 = vmul.f32 %v1689, %v325
        %v1691 = vadd.f32 %v1687, %v1690
        %s1692 = sld [smem:[#allocation8 + $0xa7]]
        %v1693 = vstv %s1692
        %v1694 = vmul.f32 %v1693, %v326
        %v1695 = vadd.f32 %v1691, %v1694
        %s1696 = sld [smem:[#allocation8 + $0xb7]]
        %v1697 = vstv %s1696
        %v1698 = vmul.f32 %v1697, %v327
        %v1699 = vadd.f32 %v1695, %v1698
        %s1700 = sld [smem:[#allocation8 + $0xc7]]
        %v1701 = vstv %s1700
        %v1702 = vmul.f32 %v1701, %v325
        %1704 = vrot.lane.b32.xlu0 %v1702, 127
        %v1705 = vpop.permute.xlu0 %1704
        %v1707 = vadd.f32 %v1699, %v1705
        %s1708 = sld [smem:[#allocation8 + $0xd7]]
        %v1709 = vstv %s1708
        %v1710 = vmul.f32 %v1709, %v326
        %1712 = vrot.lane.b32.xlu0 %v1710, 127
        %v1713 = vpop.permute.xlu0 %1712
        %v1715 = vadd.f32 %v1707, %v1713
        %s1716 = sld [smem:[#allocation8 + $0xe7]]
        %v1717 = vstv %s1716
        %v1718 = vmul.f32 %v1717, %v327
        %1720 = vrot.lane.b32.xlu0 %v1718, 127
        %v1721 = vpop.permute.xlu0 %1720
        %v1723 = vadd.f32 %v1715, %v1721
        %s1724 = sld [smem:[#allocation8 + $0xf7]]
        %v1725 = vstv %s1724
        %v1726 = vmul.f32 %v1725, %v325
        %1728 = vrot.lane.b32.xlu0 %v1726, 126
        %v1729 = vpop.permute.xlu0 %1728
        %v1731 = vadd.f32 %v1723, %v1729
        %s1732 = sld [smem:[#allocation8 + $0x107]]
        %v1733 = vstv %s1732
        %v1734 = vmul.f32 %v1733, %v326
        %1736 = vrot.lane.b32.xlu0 %v1734, 126
        %v1737 = vpop.permute.xlu0 %1736
        %v1739 = vadd.f32 %v1731, %v1737
        %s1740 = sld [smem:[#allocation8 + $0x117]]
        %v1741 = vstv %s1740
        %v1742 = vmul.f32 %v1741, %v327
        %1744 = vrot.lane.b32.xlu0 %v1742, 126
        %v1745 = vpop.permute.xlu0 %1744
        %v1747 = vadd.f32 %v1739, %v1745
        %s1748 = sld [smem:[#allocation8 + $0x127]]
        %v1749 = vstv %s1748
        %v1750 = vmul.f32 %v1749, %v328
        %v1751 = vadd.f32 %v1747, %v1750
        %s1752 = sld [smem:[#allocation8 + $0x137]]
        %v1753 = vstv %s1752
        %v1754 = vmul.f32 %v1753, %v329
        %v1755 = vadd.f32 %v1751, %v1754
        %s1756 = sld [smem:[#allocation8 + $0x147]]
        %v1757 = vstv %s1756
        %v1758 = vmul.f32 %v1757, %v330
        %v1759 = vadd.f32 %v1755, %v1758
        %s1760 = sld [smem:[#allocation8 + $0x157]]
        %v1761 = vstv %s1760
        %v1762 = vmul.f32 %v1761, %v328
        %1764 = vrot.lane.b32.xlu0 %v1762, 127
        %v1765 = vpop.permute.xlu0 %1764
        %v1767 = vadd.f32 %v1759, %v1765
        %s1768 = sld [smem:[#allocation8 + $0x167]]
        %v1769 = vstv %s1768
        %v1770 = vmul.f32 %v1769, %v329
        %1772 = vrot.lane.b32.xlu0 %v1770, 127
        %v1773 = vpop.permute.xlu0 %1772
        %v1775 = vadd.f32 %v1767, %v1773
        %s1776 = sld [smem:[#allocation8 + $0x177]]
        %v1777 = vstv %s1776
        %v1778 = vmul.f32 %v1777, %v330
        %1780 = vrot.lane.b32.xlu0 %v1778, 127
        %v1781 = vpop.permute.xlu0 %1780
        %v1783 = vadd.f32 %v1775, %v1781
        %s1784 = sld [smem:[#allocation8 + $0x187]]
        %v1785 = vstv %s1784
        %v1786 = vmul.f32 %v1785, %v328
        %1788 = vrot.lane.b32.xlu0 %v1786, 126
        %v1789 = vpop.permute.xlu0 %1788
        %v1791 = vadd.f32 %v1783, %v1789
        %s1792 = sld [smem:[#allocation8 + $0x197]]
        %v1793 = vstv %s1792
        %v1794 = vmul.f32 %v1793, %v329
        %1796 = vrot.lane.b32.xlu0 %v1794, 126
        %v1797 = vpop.permute.xlu0 %1796
        %v1799 = vadd.f32 %v1791, %v1797
        %s1800 = sld [smem:[#allocation8 + $0x1a7]]
        %v1801 = vstv %s1800
        %v1802 = vmul.f32 %v1801, %v330
        %1804 = vrot.lane.b32.xlu0 %v1802, 126
        %v1805 = vpop.permute.xlu0 %1804
        %v1807 = vadd.f32 %v1799, %v1805
        %v1808 = vmax.f32 %v1807, 0.0
        %s1809 = scalar_lea.vmem %s231, 56 [#allocation10]
        %1810 = vst.msk [vmem:[%s1809] sm:$0xff] %vm514, %v1808
        %s1811 = sld [smem:[#allocation9 + $0x8]]
        %v1812 = vstv %s1811
        %s1813 = sld [smem:[#allocation8 + $0x8]]
        %v1814 = vstv %s1813
        %v1815 = vmul.f32 %v1814, %v320
        %v1816 = vadd.f32 %v1812, %v1815
        %s1817 = sld [smem:[#allocation8 + $0x18]]
        %v1818 = vstv %s1817
        %v1819 = vmul.f32 %v1818, %v322
        %v1820 = vadd.f32 %v1816, %v1819
        %s1821 = sld [smem:[#allocation8 + $0x28]]
        %v1822 = vstv %s1821
        %v1823 = vmul.f32 %v1822, %v324
        %v1824 = vadd.f32 %v1820, %v1823
        %s1825 = sld [smem:[#allocation8 + $0x38]]
        %v1826 = vstv %s1825
        %v1827 = vmul.f32 %v1826, %v320
        %1829 = vrot.lane.b32.xlu0 %v1827, 127
        %v1830 = vpop.permute.xlu0 %1829
        %v1832 = vadd.f32 %v1824, %v1830
        %s1833 = sld [smem:[#allocation8 + $0x48]]
        %v1834 = vstv %s1833
        %v1835 = vmul.f32 %v1834, %v322
        %1837 = vrot.lane.b32.xlu0 %v1835, 127
        %v1838 = vpop.permute.xlu0 %1837
        %v1840 = vadd.f32 %v1832, %v1838
        %s1841 = sld [smem:[#allocation8 + $0x58]]
        %v1842 = vstv %s1841
        %v1843 = vmul.f32 %v1842, %v324
        %1845 = vrot.lane.b32.xlu0 %v1843, 127
        %v1846 = vpop.permute.xlu0 %1845
        %v1848 = vadd.f32 %v1840, %v1846
        %s1849 = sld [smem:[#allocation8 + $0x68]]
        %v1850 = vstv %s1849
        %v1851 = vmul.f32 %v1850, %v320
        %1853 = vrot.lane.b32.xlu0 %v1851, 126
        %v1854 = vpop.permute.xlu0 %1853
        %v1856 = vadd.f32 %v1848, %v1854
        %s1857 = sld [smem:[#allocation8 + $0x78]]
        %v1858 = vstv %s1857
        %v1859 = vmul.f32 %v1858, %v322
        %1861 = vrot.lane.b32.xlu0 %v1859, 126
        %v1862 = vpop.permute.xlu0 %1861
        %v1864 = vadd.f32 %v1856, %v1862
        %s1865 = sld [smem:[#allocation8 + $0x88]]
        %v1866 = vstv %s1865
        %v1867 = vmul.f32 %v1866, %v324
        %1869 = vrot.lane.b32.xlu0 %v1867, 126
        %v1870 = vpop.permute.xlu0 %1869
        %v1872 = vadd.f32 %v1864, %v1870
        %s1873 = sld [smem:[#allocation8 + $0x98]]
        %v1874 = vstv %s1873
        %v1875 = vmul.f32 %v1874, %v325
        %v1876 = vadd.f32 %v1872, %v1875
        %s1877 = sld [smem:[#allocation8 + $0xa8]]
        %v1878 = vstv %s1877
        %v1879 = vmul.f32 %v1878, %v326
        %v1880 = vadd.f32 %v1876, %v1879
        %s1881 = sld [smem:[#allocation8 + $0xb8]]
        %v1882 = vstv %s1881
        %v1883 = vmul.f32 %v1882, %v327
        %v1884 = vadd.f32 %v1880, %v1883
        %s1885 = sld [smem:[#allocation8 + $0xc8]]
        %v1886 = vstv %s1885
        %v1887 = vmul.f32 %v1886, %v325
        %1889 = vrot.lane.b32.xlu0 %v1887, 127
        %v1890 = vpop.permute.xlu0 %1889
        %v1892 = vadd.f32 %v1884, %v1890
        %s1893 = sld [smem:[#allocation8 + $0xd8]]
        %v1894 = vstv %s1893
        %v1895 = vmul.f32 %v1894, %v326
        %1897 = vrot.lane.b32.xlu0 %v1895, 127
        %v1898 = vpop.permute.xlu0 %1897
        %v1900 = vadd.f32 %v1892, %v1898
        %s1901 = sld [smem:[#allocation8 + $0xe8]]
        %v1902 = vstv %s1901
        %v1903 = vmul.f32 %v1902, %v327
        %1905 = vrot.lane.b32.xlu0 %v1903, 127
        %v1906 = vpop.permute.xlu0 %1905
        %v1908 = vadd.f32 %v1900, %v1906
        %s1909 = sld [smem:[#allocation8 + $0xf8]]
        %v1910 = vstv %s1909
        %v1911 = vmul.f32 %v1910, %v325
        %1913 = vrot.lane.b32.xlu0 %v1911, 126
        %v1914 = vpop.permute.xlu0 %1913
        %v1916 = vadd.f32 %v1908, %v1914
        %s1917 = sld [smem:[#allocation8 + $0x108]]
        %v1918 = vstv %s1917
        %v1919 = vmul.f32 %v1918, %v326
        %1921 = vrot.lane.b32.xlu0 %v1919, 126
        %v1922 = vpop.permute.xlu0 %1921
        %v1924 = vadd.f32 %v1916, %v1922
        %s1925 = sld [smem:[#allocation8 + $0x118]]
        %v1926 = vstv %s1925
        %v1927 = vmul.f32 %v1926, %v327
        %1929 = vrot.lane.b32.xlu0 %v1927, 126
        %v1930 = vpop.permute.xlu0 %1929
        %v1932 = vadd.f32 %v1924, %v1930
        %s1933 = sld [smem:[#allocation8 + $0x128]]
        %v1934 = vstv %s1933
        %v1935 = vmul.f32 %v1934, %v328
        %v1936 = vadd.f32 %v1932, %v1935
        %s1937 = sld [smem:[#allocation8 + $0x138]]
        %v1938 = vstv %s1937
        %v1939 = vmul.f32 %v1938, %v329
        %v1940 = vadd.f32 %v1936, %v1939
        %s1941 = sld [smem:[#allocation8 + $0x148]]
        %v1942 = vstv %s1941
        %v1943 = vmul.f32 %v1942, %v330
        %v1944 = vadd.f32 %v1940, %v1943
        %s1945 = sld [smem:[#allocation8 + $0x158]]
        %v1946 = vstv %s1945
        %v1947 = vmul.f32 %v1946, %v328
        %1949 = vrot.lane.b32.xlu0 %v1947, 127
        %v1950 = vpop.permute.xlu0 %1949
        %v1952 = vadd.f32 %v1944, %v1950
        %s1953 = sld [smem:[#allocation8 + $0x168]]
        %v1954 = vstv %s1953
        %v1955 = vmul.f32 %v1954, %v329
        %1957 = vrot.lane.b32.xlu0 %v1955, 127
        %v1958 = vpop.permute.xlu0 %1957
        %v1960 = vadd.f32 %v1952, %v1958
        %s1961 = sld [smem:[#allocation8 + $0x178]]
        %v1962 = vstv %s1961
        %v1963 = vmul.f32 %v1962, %v330
        %1965 = vrot.lane.b32.xlu0 %v1963, 127
        %v1966 = vpop.permute.xlu0 %1965
        %v1968 = vadd.f32 %v1960, %v1966
        %s1969 = sld [smem:[#allocation8 + $0x188]]
        %v1970 = vstv %s1969
        %v1971 = vmul.f32 %v1970, %v328
        %1973 = vrot.lane.b32.xlu0 %v1971, 126
        %v1974 = vpop.permute.xlu0 %1973
        %v1976 = vadd.f32 %v1968, %v1974
        %s1977 = sld [smem:[#allocation8 + $0x198]]
        %v1978 = vstv %s1977
        %v1979 = vmul.f32 %v1978, %v329
        %1981 = vrot.lane.b32.xlu0 %v1979, 126
        %v1982 = vpop.permute.xlu0 %1981
        %v1984 = vadd.f32 %v1976, %v1982
        %s1985 = sld [smem:[#allocation8 + $0x1a8]]
        %v1986 = vstv %s1985
        %v1987 = vmul.f32 %v1986, %v330
        %1989 = vrot.lane.b32.xlu0 %v1987, 126
        %v1990 = vpop.permute.xlu0 %1989
        %v1992 = vadd.f32 %v1984, %v1990
        %v1993 = vmax.f32 %v1992, 0.0
        %s1994 = scalar_lea.vmem %s231, 64 [#allocation10]
        %1995 = vst.msk [vmem:[%s1994] sm:$0xff] %vm514, %v1993
        %s1996 = sld [smem:[#allocation9 + $0x9]]
        %v1997 = vstv %s1996
        %s1998 = sld [smem:[#allocation8 + $0x9]]
        %v1999 = vstv %s1998
        %v2000 = vmul.f32 %v1999, %v320
        %v2001 = vadd.f32 %v1997, %v2000
        %s2002 = sld [smem:[#allocation8 + $0x19]]
        %v2003 = vstv %s2002
        %v2004 = vmul.f32 %v2003, %v322
        %v2005 = vadd.f32 %v2001, %v2004
        %s2006 = sld [smem:[#allocation8 + $0x29]]
        %v2007 = vstv %s2006
        %v2008 = vmul.f32 %v2007, %v324
        %v2009 = vadd.f32 %v2005, %v2008
        %s2010 = sld [smem:[#allocation8 + $0x39]]
        %v2011 = vstv %s2010
        %v2012 = vmul.f32 %v2011, %v320
        %2014 = vrot.lane.b32.xlu0 %v2012, 127
        %v2015 = vpop.permute.xlu0 %2014
        %v2017 = vadd.f32 %v2009, %v2015
        %s2018 = sld [smem:[#allocation8 + $0x49]]
        %v2019 = vstv %s2018
        %v2020 = vmul.f32 %v2019, %v322
        %2022 = vrot.lane.b32.xlu0 %v2020, 127
        %v2023 = vpop.permute.xlu0 %2022
        %v2025 = vadd.f32 %v2017, %v2023
        %s2026 = sld [smem:[#allocation8 + $0x59]]
        %v2027 = vstv %s2026
        %v2028 = vmul.f32 %v2027, %v324
        %2030 = vrot.lane.b32.xlu0 %v2028, 127
        %v2031 = vpop.permute.xlu0 %2030
        %v2033 = vadd.f32 %v2025, %v2031
        %s2034 = sld [smem:[#allocation8 + $0x69]]
        %v2035 = vstv %s2034
        %v2036 = vmul.f32 %v2035, %v320
        %2038 = vrot.lane.b32.xlu0 %v2036, 126
        %v2039 = vpop.permute.xlu0 %2038
        %v2041 = vadd.f32 %v2033, %v2039
        %s2042 = sld [smem:[#allocation8 + $0x79]]
        %v2043 = vstv %s2042
        %v2044 = vmul.f32 %v2043, %v322
        %2046 = vrot.lane.b32.xlu0 %v2044, 126
        %v2047 = vpop.permute.xlu0 %2046
        %v2049 = vadd.f32 %v2041, %v2047
        %s2050 = sld [smem:[#allocation8 + $0x89]]
        %v2051 = vstv %s2050
        %v2052 = vmul.f32 %v2051, %v324
        %2054 = vrot.lane.b32.xlu0 %v2052, 126
        %v2055 = vpop.permute.xlu0 %2054
        %v2057 = vadd.f32 %v2049, %v2055
        %s2058 = sld [smem:[#allocation8 + $0x99]]
        %v2059 = vstv %s2058
        %v2060 = vmul.f32 %v2059, %v325
        %v2061 = vadd.f32 %v2057, %v2060
        %s2062 = sld [smem:[#allocation8 + $0xa9]]
        %v2063 = vstv %s2062
        %v2064 = vmul.f32 %v2063, %v326
        %v2065 = vadd.f32 %v2061, %v2064
        %s2066 = sld [smem:[#allocation8 + $0xb9]]
        %v2067 = vstv %s2066
        %v2068 = vmul.f32 %v2067, %v327
        %v2069 = vadd.f32 %v2065, %v2068
        %s2070 = sld [smem:[#allocation8 + $0xc9]]
        %v2071 = vstv %s2070
        %v2072 = vmul.f32 %v2071, %v325
        %2074 = vrot.lane.b32.xlu0 %v2072, 127
        %v2075 = vpop.permute.xlu0 %2074
        %v2077 = vadd.f32 %v2069, %v2075
        %s2078 = sld [smem:[#allocation8 + $0xd9]]
        %v2079 = vstv %s2078
        %v2080 = vmul.f32 %v2079, %v326
        %2082 = vrot.lane.b32.xlu0 %v2080, 127
        %v2083 = vpop.permute.xlu0 %2082
        %v2085 = vadd.f32 %v2077, %v2083
        %s2086 = sld [smem:[#allocation8 + $0xe9]]
        %v2087 = vstv %s2086
        %v2088 = vmul.f32 %v2087, %v327
        %2090 = vrot.lane.b32.xlu0 %v2088, 127
        %v2091 = vpop.permute.xlu0 %2090
        %v2093 = vadd.f32 %v2085, %v2091
        %s2094 = sld [smem:[#allocation8 + $0xf9]]
        %v2095 = vstv %s2094
        %v2096 = vmul.f32 %v2095, %v325
        %2098 = vrot.lane.b32.xlu0 %v2096, 126
        %v2099 = vpop.permute.xlu0 %2098
        %v2101 = vadd.f32 %v2093, %v2099
        %s2102 = sld [smem:[#allocation8 + $0x109]]
        %v2103 = vstv %s2102
        %v2104 = vmul.f32 %v2103, %v326
        %2106 = vrot.lane.b32.xlu0 %v2104, 126
        %v2107 = vpop.permute.xlu0 %2106
        %v2109 = vadd.f32 %v2101, %v2107
        %s2110 = sld [smem:[#allocation8 + $0x119]]
        %v2111 = vstv %s2110
        %v2112 = vmul.f32 %v2111, %v327
        %2114 = vrot.lane.b32.xlu0 %v2112, 126
        %v2115 = vpop.permute.xlu0 %2114
        %v2117 = vadd.f32 %v2109, %v2115
        %s2118 = sld [smem:[#allocation8 + $0x129]]
        %v2119 = vstv %s2118
        %v2120 = vmul.f32 %v2119, %v328
        %v2121 = vadd.f32 %v2117, %v2120
        %s2122 = sld [smem:[#allocation8 + $0x139]]
        %v2123 = vstv %s2122
        %v2124 = vmul.f32 %v2123, %v329
        %v2125 = vadd.f32 %v2121, %v2124
        %s2126 = sld [smem:[#allocation8 + $0x149]]
        %v2127 = vstv %s2126
        %v2128 = vmul.f32 %v2127, %v330
        %v2129 = vadd.f32 %v2125, %v2128
        %s2130 = sld [smem:[#allocation8 + $0x159]]
        %v2131 = vstv %s2130
        %v2132 = vmul.f32 %v2131, %v328
        %2134 = vrot.lane.b32.xlu0 %v2132, 127
        %v2135 = vpop.permute.xlu0 %2134
        %v2137 = vadd.f32 %v2129, %v2135
        %s2138 = sld [smem:[#allocation8 + $0x169]]
        %v2139 = vstv %s2138
        %v2140 = vmul.f32 %v2139, %v329
        %2142 = vrot.lane.b32.xlu0 %v2140, 127
        %v2143 = vpop.permute.xlu0 %2142
        %v2145 = vadd.f32 %v2137, %v2143
        %s2146 = sld [smem:[#allocation8 + $0x179]]
        %v2147 = vstv %s2146
        %v2148 = vmul.f32 %v2147, %v330
        %2150 = vrot.lane.b32.xlu0 %v2148, 127
        %v2151 = vpop.permute.xlu0 %2150
        %v2153 = vadd.f32 %v2145, %v2151
        %s2154 = sld [smem:[#allocation8 + $0x189]]
        %v2155 = vstv %s2154
        %v2156 = vmul.f32 %v2155, %v328
        %2158 = vrot.lane.b32.xlu0 %v2156, 126
        %v2159 = vpop.permute.xlu0 %2158
        %v2161 = vadd.f32 %v2153, %v2159
        %s2162 = sld [smem:[#allocation8 + $0x199]]
        %v2163 = vstv %s2162
        %v2164 = vmul.f32 %v2163, %v329
        %2166 = vrot.lane.b32.xlu0 %v2164, 126
        %v2167 = vpop.permute.xlu0 %2166
        %v2169 = vadd.f32 %v2161, %v2167
        %s2170 = sld [smem:[#allocation8 + $0x1a9]]
        %v2171 = vstv %s2170
        %v2172 = vmul.f32 %v2171, %v330
        %2174 = vrot.lane.b32.xlu0 %v2172, 126
        %v2175 = vpop.permute.xlu0 %2174
        %v2177 = vadd.f32 %v2169, %v2175
        %v2178 = vmax.f32 %v2177, 0.0
        %s2179 = scalar_lea.vmem %s231, 72 [#allocation10]
        %2180 = vst.msk [vmem:[%s2179] sm:$0xff] %vm514, %v2178
        %s2181 = sld [smem:[#allocation9 + $0xa]]
        %v2182 = vstv %s2181
        %s2183 = sld [smem:[#allocation8 + $0xa]]
        %v2184 = vstv %s2183
        %v2185 = vmul.f32 %v2184, %v320
        %v2186 = vadd.f32 %v2182, %v2185
        %s2187 = sld [smem:[#allocation8 + $0x1a]]
        %v2188 = vstv %s2187
        %v2189 = vmul.f32 %v2188, %v322
        %v2190 = vadd.f32 %v2186, %v2189
        %s2191 = sld [smem:[#allocation8 + $0x2a]]
        %v2192 = vstv %s2191
        %v2193 = vmul.f32 %v2192, %v324
        %v2194 = vadd.f32 %v2190, %v2193
        %s2195 = sld [smem:[#allocation8 + $0x3a]]
        %v2196 = vstv %s2195
        %v2197 = vmul.f32 %v2196, %v320
        %2199 = vrot.lane.b32.xlu0 %v2197, 127
        %v2200 = vpop.permute.xlu0 %2199
        %v2202 = vadd.f32 %v2194, %v2200
        %s2203 = sld [smem:[#allocation8 + $0x4a]]
        %v2204 = vstv %s2203
        %v2205 = vmul.f32 %v2204, %v322
        %2207 = vrot.lane.b32.xlu0 %v2205, 127
        %v2208 = vpop.permute.xlu0 %2207
        %v2210 = vadd.f32 %v2202, %v2208
        %s2211 = sld [smem:[#allocation8 + $0x5a]]
        %v2212 = vstv %s2211
        %v2213 = vmul.f32 %v2212, %v324
        %2215 = vrot.lane.b32.xlu0 %v2213, 127
        %v2216 = vpop.permute.xlu0 %2215
        %v2218 = vadd.f32 %v2210, %v2216
        %s2219 = sld [smem:[#allocation8 + $0x6a]]
        %v2220 = vstv %s2219
        %v2221 = vmul.f32 %v2220, %v320
        %2223 = vrot.lane.b32.xlu0 %v2221, 126
        %v2224 = vpop.permute.xlu0 %2223
        %v2226 = vadd.f32 %v2218, %v2224
        %s2227 = sld [smem:[#allocation8 + $0x7a]]
        %v2228 = vstv %s2227
        %v2229 = vmul.f32 %v2228, %v322
        %2231 = vrot.lane.b32.xlu0 %v2229, 126
        %v2232 = vpop.permute.xlu0 %2231
        %v2234 = vadd.f32 %v2226, %v2232
        %s2235 = sld [smem:[#allocation8 + $0x8a]]
        %v2236 = vstv %s2235
        %v2237 = vmul.f32 %v2236, %v324
        %2239 = vrot.lane.b32.xlu0 %v2237, 126
        %v2240 = vpop.permute.xlu0 %2239
        %v2242 = vadd.f32 %v2234, %v2240
        %s2243 = sld [smem:[#allocation8 + $0x9a]]
        %v2244 = vstv %s2243
        %v2245 = vmul.f32 %v2244, %v325
        %v2246 = vadd.f32 %v2242, %v2245
        %s2247 = sld [smem:[#allocation8 + $0xaa]]
        %v2248 = vstv %s2247
        %v2249 = vmul.f32 %v2248, %v326
        %v2250 = vadd.f32 %v2246, %v2249
        %s2251 = sld [smem:[#allocation8 + $0xba]]
        %v2252 = vstv %s2251
        %v2253 = vmul.f32 %v2252, %v327
        %v2254 = vadd.f32 %v2250, %v2253
        %s2255 = sld [smem:[#allocation8 + $0xca]]
        %v2256 = vstv %s2255
        %v2257 = vmul.f32 %v2256, %v325
        %2259 = vrot.lane.b32.xlu0 %v2257, 127
        %v2260 = vpop.permute.xlu0 %2259
        %v2262 = vadd.f32 %v2254, %v2260
        %s2263 = sld [smem:[#allocation8 + $0xda]]
        %v2264 = vstv %s2263
        %v2265 = vmul.f32 %v2264, %v326
        %2267 = vrot.lane.b32.xlu0 %v2265, 127
        %v2268 = vpop.permute.xlu0 %2267
        %v2270 = vadd.f32 %v2262, %v2268
        %s2271 = sld [smem:[#allocation8 + $0xea]]
        %v2272 = vstv %s2271
        %v2273 = vmul.f32 %v2272, %v327
        %2275 = vrot.lane.b32.xlu0 %v2273, 127
        %v2276 = vpop.permute.xlu0 %2275
        %v2278 = vadd.f32 %v2270, %v2276
        %s2279 = sld [smem:[#allocation8 + $0xfa]]
        %v2280 = vstv %s2279
        %v2281 = vmul.f32 %v2280, %v325
        %2283 = vrot.lane.b32.xlu0 %v2281, 126
        %v2284 = vpop.permute.xlu0 %2283
        %v2286 = vadd.f32 %v2278, %v2284
        %s2287 = sld [smem:[#allocation8 + $0x10a]]
        %v2288 = vstv %s2287
        %v2289 = vmul.f32 %v2288, %v326
        %2291 = vrot.lane.b32.xlu0 %v2289, 126
        %v2292 = vpop.permute.xlu0 %2291
        %v2294 = vadd.f32 %v2286, %v2292
        %s2295 = sld [smem:[#allocation8 + $0x11a]]
        %v2296 = vstv %s2295
        %v2297 = vmul.f32 %v2296, %v327
        %2299 = vrot.lane.b32.xlu0 %v2297, 126
        %v2300 = vpop.permute.xlu0 %2299
        %v2302 = vadd.f32 %v2294, %v2300
        %s2303 = sld [smem:[#allocation8 + $0x12a]]
        %v2304 = vstv %s2303
        %v2305 = vmul.f32 %v2304, %v328
        %v2306 = vadd.f32 %v2302, %v2305
        %s2307 = sld [smem:[#allocation8 + $0x13a]]
        %v2308 = vstv %s2307
        %v2309 = vmul.f32 %v2308, %v329
        %v2310 = vadd.f32 %v2306, %v2309
        %s2311 = sld [smem:[#allocation8 + $0x14a]]
        %v2312 = vstv %s2311
        %v2313 = vmul.f32 %v2312, %v330
        %v2314 = vadd.f32 %v2310, %v2313
        %s2315 = sld [smem:[#allocation8 + $0x15a]]
        %v2316 = vstv %s2315
        %v2317 = vmul.f32 %v2316, %v328
        %2319 = vrot.lane.b32.xlu0 %v2317, 127
        %v2320 = vpop.permute.xlu0 %2319
        %v2322 = vadd.f32 %v2314, %v2320
        %s2323 = sld [smem:[#allocation8 + $0x16a]]
        %v2324 = vstv %s2323
        %v2325 = vmul.f32 %v2324, %v329
        %2327 = vrot.lane.b32.xlu0 %v2325, 127
        %v2328 = vpop.permute.xlu0 %2327
        %v2330 = vadd.f32 %v2322, %v2328
        %s2331 = sld [smem:[#allocation8 + $0x17a]]
        %v2332 = vstv %s2331
        %v2333 = vmul.f32 %v2332, %v330
        %2335 = vrot.lane.b32.xlu0 %v2333, 127
        %v2336 = vpop.permute.xlu0 %2335
        %v2338 = vadd.f32 %v2330, %v2336
        %s2339 = sld [smem:[#allocation8 + $0x18a]]
        %v2340 = vstv %s2339
        %v2341 = vmul.f32 %v2340, %v328
        %2343 = vrot.lane.b32.xlu0 %v2341, 126
        %v2344 = vpop.permute.xlu0 %2343
        %v2346 = vadd.f32 %v2338, %v2344
        %s2347 = sld [smem:[#allocation8 + $0x19a]]
        %v2348 = vstv %s2347
        %v2349 = vmul.f32 %v2348, %v329
        %2351 = vrot.lane.b32.xlu0 %v2349, 126
        %v2352 = vpop.permute.xlu0 %2351
        %v2354 = vadd.f32 %v2346, %v2352
        %s2355 = sld [smem:[#allocation8 + $0x1aa]]
        %v2356 = vstv %s2355
        %v2357 = vmul.f32 %v2356, %v330
        %2359 = vrot.lane.b32.xlu0 %v2357, 126
        %v2360 = vpop.permute.xlu0 %2359
        %v2362 = vadd.f32 %v2354, %v2360
        %v2363 = vmax.f32 %v2362, 0.0
        %s2364 = scalar_lea.vmem %s231, 80 [#allocation10]
        %2365 = vst.msk [vmem:[%s2364] sm:$0xff] %vm514, %v2363
        %s2366 = sld [smem:[#allocation9 + $0xb]]
        %v2367 = vstv %s2366
        %s2368 = sld [smem:[#allocation8 + $0xb]]
        %v2369 = vstv %s2368
        %v2370 = vmul.f32 %v2369, %v320
        %v2371 = vadd.f32 %v2367, %v2370
        %s2372 = sld [smem:[#allocation8 + $0x1b]]
        %v2373 = vstv %s2372
        %v2374 = vmul.f32 %v2373, %v322
        %v2375 = vadd.f32 %v2371, %v2374
        %s2376 = sld [smem:[#allocation8 + $0x2b]]
        %v2377 = vstv %s2376
        %v2378 = vmul.f32 %v2377, %v324
        %v2379 = vadd.f32 %v2375, %v2378
        %s2380 = sld [smem:[#allocation8 + $0x3b]]
        %v2381 = vstv %s2380
        %v2382 = vmul.f32 %v2381, %v320
        %2384 = vrot.lane.b32.xlu0 %v2382, 127
        %v2385 = vpop.permute.xlu0 %2384
        %v2387 = vadd.f32 %v2379, %v2385
        %s2388 = sld [smem:[#allocation8 + $0x4b]]
        %v2389 = vstv %s2388
        %v2390 = vmul.f32 %v2389, %v322
        %2392 = vrot.lane.b32.xlu0 %v2390, 127
        %v2393 = vpop.permute.xlu0 %2392
        %v2395 = vadd.f32 %v2387, %v2393
        %s2396 = sld [smem:[#allocation8 + $0x5b]]
        %v2397 = vstv %s2396
        %v2398 = vmul.f32 %v2397, %v324
        %2400 = vrot.lane.b32.xlu0 %v2398, 127
        %v2401 = vpop.permute.xlu0 %2400
        %v2403 = vadd.f32 %v2395, %v2401
        %s2404 = sld [smem:[#allocation8 + $0x6b]]
        %v2405 = vstv %s2404
        %v2406 = vmul.f32 %v2405, %v320
        %2408 = vrot.lane.b32.xlu0 %v2406, 126
        %v2409 = vpop.permute.xlu0 %2408
        %v2411 = vadd.f32 %v2403, %v2409
        %s2412 = sld [smem:[#allocation8 + $0x7b]]
        %v2413 = vstv %s2412
        %v2414 = vmul.f32 %v2413, %v322
        %2416 = vrot.lane.b32.xlu0 %v2414, 126
        %v2417 = vpop.permute.xlu0 %2416
        %v2419 = vadd.f32 %v2411, %v2417
        %s2420 = sld [smem:[#allocation8 + $0x8b]]
        %v2421 = vstv %s2420
        %v2422 = vmul.f32 %v2421, %v324
        %2424 = vrot.lane.b32.xlu0 %v2422, 126
        %v2425 = vpop.permute.xlu0 %2424
        %v2427 = vadd.f32 %v2419, %v2425
        %s2428 = sld [smem:[#allocation8 + $0x9b]]
        %v2429 = vstv %s2428
        %v2430 = vmul.f32 %v2429, %v325
        %v2431 = vadd.f32 %v2427, %v2430
        %s2432 = sld [smem:[#allocation8 + $0xab]]
        %v2433 = vstv %s2432
        %v2434 = vmul.f32 %v2433, %v326
        %v2435 = vadd.f32 %v2431, %v2434
        %s2436 = sld [smem:[#allocation8 + $0xbb]]
        %v2437 = vstv %s2436
        %v2438 = vmul.f32 %v2437, %v327
        %v2439 = vadd.f32 %v2435, %v2438
        %s2440 = sld [smem:[#allocation8 + $0xcb]]
        %v2441 = vstv %s2440
        %v2442 = vmul.f32 %v2441, %v325
        %2444 = vrot.lane.b32.xlu0 %v2442, 127
        %v2445 = vpop.permute.xlu0 %2444
        %v2447 = vadd.f32 %v2439, %v2445
        %s2448 = sld [smem:[#allocation8 + $0xdb]]
        %v2449 = vstv %s2448
        %v2450 = vmul.f32 %v2449, %v326
        %2452 = vrot.lane.b32.xlu0 %v2450, 127
        %v2453 = vpop.permute.xlu0 %2452
        %v2455 = vadd.f32 %v2447, %v2453
        %s2456 = sld [smem:[#allocation8 + $0xeb]]
        %v2457 = vstv %s2456
        %v2458 = vmul.f32 %v2457, %v327
        %2460 = vrot.lane.b32.xlu0 %v2458, 127
        %v2461 = vpop.permute.xlu0 %2460
        %v2463 = vadd.f32 %v2455, %v2461
        %s2464 = sld [smem:[#allocation8 + $0xfb]]
        %v2465 = vstv %s2464
        %v2466 = vmul.f32 %v2465, %v325
        %2468 = vrot.lane.b32.xlu0 %v2466, 126
        %v2469 = vpop.permute.xlu0 %2468
        %v2471 = vadd.f32 %v2463, %v2469
        %s2472 = sld [smem:[#allocation8 + $0x10b]]
        %v2473 = vstv %s2472
        %v2474 = vmul.f32 %v2473, %v326
        %2476 = vrot.lane.b32.xlu0 %v2474, 126
        %v2477 = vpop.permute.xlu0 %2476
        %v2479 = vadd.f32 %v2471, %v2477
        %s2480 = sld [smem:[#allocation8 + $0x11b]]
        %v2481 = vstv %s2480
        %v2482 = vmul.f32 %v2481, %v327
        %2484 = vrot.lane.b32.xlu0 %v2482, 126
        %v2485 = vpop.permute.xlu0 %2484
        %v2487 = vadd.f32 %v2479, %v2485
        %s2488 = sld [smem:[#allocation8 + $0x12b]]
        %v2489 = vstv %s2488
        %v2490 = vmul.f32 %v2489, %v328
        %v2491 = vadd.f32 %v2487, %v2490
        %s2492 = sld [smem:[#allocation8 + $0x13b]]
        %v2493 = vstv %s2492
        %v2494 = vmul.f32 %v2493, %v329
        %v2495 = vadd.f32 %v2491, %v2494
        %s2496 = sld [smem:[#allocation8 + $0x14b]]
        %v2497 = vstv %s2496
        %v2498 = vmul.f32 %v2497, %v330
        %v2499 = vadd.f32 %v2495, %v2498
        %s2500 = sld [smem:[#allocation8 + $0x15b]]
        %v2501 = vstv %s2500
        %v2502 = vmul.f32 %v2501, %v328
        %2504 = vrot.lane.b32.xlu0 %v2502, 127
        %v2505 = vpop.permute.xlu0 %2504
        %v2507 = vadd.f32 %v2499, %v2505
        %s2508 = sld [smem:[#allocation8 + $0x16b]]
        %v2509 = vstv %s2508
        %v2510 = vmul.f32 %v2509, %v329
        %2512 = vrot.lane.b32.xlu0 %v2510, 127
        %v2513 = vpop.permute.xlu0 %2512
        %v2515 = vadd.f32 %v2507, %v2513
        %s2516 = sld [smem:[#allocation8 + $0x17b]]
        %v2517 = vstv %s2516
        %v2518 = vmul.f32 %v2517, %v330
        %2520 = vrot.lane.b32.xlu0 %v2518, 127
        %v2521 = vpop.permute.xlu0 %2520
        %v2523 = vadd.f32 %v2515, %v2521
        %s2524 = sld [smem:[#allocation8 + $0x18b]]
        %v2525 = vstv %s2524
        %v2526 = vmul.f32 %v2525, %v328
        %2528 = vrot.lane.b32.xlu0 %v2526, 126
        %v2529 = vpop.permute.xlu0 %2528
        %v2531 = vadd.f32 %v2523, %v2529
        %s2532 = sld [smem:[#allocation8 + $0x19b]]
        %v2533 = vstv %s2532
        %v2534 = vmul.f32 %v2533, %v329
        %2536 = vrot.lane.b32.xlu0 %v2534, 126
        %v2537 = vpop.permute.xlu0 %2536
        %v2539 = vadd.f32 %v2531, %v2537
        %s2540 = sld [smem:[#allocation8 + $0x1ab]]
        %v2541 = vstv %s2540
        %v2542 = vmul.f32 %v2541, %v330
        %2544 = vrot.lane.b32.xlu0 %v2542, 126
        %v2545 = vpop.permute.xlu0 %2544
        %v2547 = vadd.f32 %v2539, %v2545
        %v2548 = vmax.f32 %v2547, 0.0
        %s2549 = scalar_lea.vmem %s231, 88 [#allocation10]
        %2550 = vst.msk [vmem:[%s2549] sm:$0xff] %vm514, %v2548
        %s2551 = sld [smem:[#allocation9 + $0xc]]
        %v2552 = vstv %s2551
        %s2553 = sld [smem:[#allocation8 + $0xc]]
        %v2554 = vstv %s2553
        %v2555 = vmul.f32 %v2554, %v320
        %v2556 = vadd.f32 %v2552, %v2555
        %s2557 = sld [smem:[#allocation8 + $0x1c]]
        %v2558 = vstv %s2557
        %v2559 = vmul.f32 %v2558, %v322
        %v2560 = vadd.f32 %v2556, %v2559
        %s2561 = sld [smem:[#allocation8 + $0x2c]]
        %v2562 = vstv %s2561
        %v2563 = vmul.f32 %v2562, %v324
        %v2564 = vadd.f32 %v2560, %v2563
        %s2565 = sld [smem:[#allocation8 + $0x3c]]
        %v2566 = vstv %s2565
        %v2567 = vmul.f32 %v2566, %v320
        %2569 = vrot.lane.b32.xlu0 %v2567, 127
        %v2570 = vpop.permute.xlu0 %2569
        %v2572 = vadd.f32 %v2564, %v2570
        %s2573 = sld [smem:[#allocation8 + $0x4c]]
        %v2574 = vstv %s2573
        %v2575 = vmul.f32 %v2574, %v322
        %2577 = vrot.lane.b32.xlu0 %v2575, 127
        %v2578 = vpop.permute.xlu0 %2577
        %v2580 = vadd.f32 %v2572, %v2578
        %s2581 = sld [smem:[#allocation8 + $0x5c]]
        %v2582 = vstv %s2581
        %v2583 = vmul.f32 %v2582, %v324
        %2585 = vrot.lane.b32.xlu0 %v2583, 127
        %v2586 = vpop.permute.xlu0 %2585
        %v2588 = vadd.f32 %v2580, %v2586
        %s2589 = sld [smem:[#allocation8 + $0x6c]]
        %v2590 = vstv %s2589
        %v2591 = vmul.f32 %v2590, %v320
        %2593 = vrot.lane.b32.xlu0 %v2591, 126
        %v2594 = vpop.permute.xlu0 %2593
        %v2596 = vadd.f32 %v2588, %v2594
        %s2597 = sld [smem:[#allocation8 + $0x7c]]
        %v2598 = vstv %s2597
        %v2599 = vmul.f32 %v2598, %v322
        %2601 = vrot.lane.b32.xlu0 %v2599, 126
        %v2602 = vpop.permute.xlu0 %2601
        %v2604 = vadd.f32 %v2596, %v2602
        %s2605 = sld [smem:[#allocation8 + $0x8c]]
        %v2606 = vstv %s2605
        %v2607 = vmul.f32 %v2606, %v324
        %2609 = vrot.lane.b32.xlu0 %v2607, 126
        %v2610 = vpop.permute.xlu0 %2609
        %v2612 = vadd.f32 %v2604, %v2610
        %s2613 = sld [smem:[#allocation8 + $0x9c]]
        %v2614 = vstv %s2613
        %v2615 = vmul.f32 %v2614, %v325
        %v2616 = vadd.f32 %v2612, %v2615
        %s2617 = sld [smem:[#allocation8 + $0xac]]
        %v2618 = vstv %s2617
        %v2619 = vmul.f32 %v2618, %v326
        %v2620 = vadd.f32 %v2616, %v2619
        %s2621 = sld [smem:[#allocation8 + $0xbc]]
        %v2622 = vstv %s2621
        %v2623 = vmul.f32 %v2622, %v327
        %v2624 = vadd.f32 %v2620, %v2623
        %s2625 = sld [smem:[#allocation8 + $0xcc]]
        %v2626 = vstv %s2625
        %v2627 = vmul.f32 %v2626, %v325
        %2629 = vrot.lane.b32.xlu0 %v2627, 127
        %v2630 = vpop.permute.xlu0 %2629
        %v2632 = vadd.f32 %v2624, %v2630
        %s2633 = sld [smem:[#allocation8 + $0xdc]]
        %v2634 = vstv %s2633
        %v2635 = vmul.f32 %v2634, %v326
        %2637 = vrot.lane.b32.xlu0 %v2635, 127
        %v2638 = vpop.permute.xlu0 %2637
        %v2640 = vadd.f32 %v2632, %v2638
        %s2641 = sld [smem:[#allocation8 + $0xec]]
        %v2642 = vstv %s2641
        %v2643 = vmul.f32 %v2642, %v327
        %2645 = vrot.lane.b32.xlu0 %v2643, 127
        %v2646 = vpop.permute.xlu0 %2645
        %v2648 = vadd.f32 %v2640, %v2646
        %s2649 = sld [smem:[#allocation8 + $0xfc]]
        %v2650 = vstv %s2649
        %v2651 = vmul.f32 %v2650, %v325
        %2653 = vrot.lane.b32.xlu0 %v2651, 126
        %v2654 = vpop.permute.xlu0 %2653
        %v2656 = vadd.f32 %v2648, %v2654
        %s2657 = sld [smem:[#allocation8 + $0x10c]]
        %v2658 = vstv %s2657
        %v2659 = vmul.f32 %v2658, %v326
        %2661 = vrot.lane.b32.xlu0 %v2659, 126
        %v2662 = vpop.permute.xlu0 %2661
        %v2664 = vadd.f32 %v2656, %v2662
        %s2665 = sld [smem:[#allocation8 + $0x11c]]
        %v2666 = vstv %s2665
        %v2667 = vmul.f32 %v2666, %v327
        %2669 = vrot.lane.b32.xlu0 %v2667, 126
        %v2670 = vpop.permute.xlu0 %2669
        %v2672 = vadd.f32 %v2664, %v2670
        %s2673 = sld [smem:[#allocation8 + $0x12c]]
        %v2674 = vstv %s2673
        %v2675 = vmul.f32 %v2674, %v328
        %v2676 = vadd.f32 %v2672, %v2675
        %s2677 = sld [smem:[#allocation8 + $0x13c]]
        %v2678 = vstv %s2677
        %v2679 = vmul.f32 %v2678, %v329
        %v2680 = vadd.f32 %v2676, %v2679
        %s2681 = sld [smem:[#allocation8 + $0x14c]]
        %v2682 = vstv %s2681
        %v2683 = vmul.f32 %v2682, %v330
        %v2684 = vadd.f32 %v2680, %v2683
        %s2685 = sld [smem:[#allocation8 + $0x15c]]
        %v2686 = vstv %s2685
        %v2687 = vmul.f32 %v2686, %v328
        %2689 = vrot.lane.b32.xlu0 %v2687, 127
        %v2690 = vpop.permute.xlu0 %2689
        %v2692 = vadd.f32 %v2684, %v2690
        %s2693 = sld [smem:[#allocation8 + $0x16c]]
        %v2694 = vstv %s2693
        %v2695 = vmul.f32 %v2694, %v329
        %2697 = vrot.lane.b32.xlu0 %v2695, 127
        %v2698 = vpop.permute.xlu0 %2697
        %v2700 = vadd.f32 %v2692, %v2698
        %s2701 = sld [smem:[#allocation8 + $0x17c]]
        %v2702 = vstv %s2701
        %v2703 = vmul.f32 %v2702, %v330
        %2705 = vrot.lane.b32.xlu0 %v2703, 127
        %v2706 = vpop.permute.xlu0 %2705
        %v2708 = vadd.f32 %v2700, %v2706
        %s2709 = sld [smem:[#allocation8 + $0x18c]]
        %v2710 = vstv %s2709
        %v2711 = vmul.f32 %v2710, %v328
        %2713 = vrot.lane.b32.xlu0 %v2711, 126
        %v2714 = vpop.permute.xlu0 %2713
        %v2716 = vadd.f32 %v2708, %v2714
        %s2717 = sld [smem:[#allocation8 + $0x19c]]
        %v2718 = vstv %s2717
        %v2719 = vmul.f32 %v2718, %v329
        %2721 = vrot.lane.b32.xlu0 %v2719, 126
        %v2722 = vpop.permute.xlu0 %2721
        %v2724 = vadd.f32 %v2716, %v2722
        %s2725 = sld [smem:[#allocation8 + $0x1ac]]
        %v2726 = vstv %s2725
        %v2727 = vmul.f32 %v2726, %v330
        %2729 = vrot.lane.b32.xlu0 %v2727, 126
        %v2730 = vpop.permute.xlu0 %2729
        %v2732 = vadd.f32 %v2724, %v2730
        %v2733 = vmax.f32 %v2732, 0.0
        %s2734 = scalar_lea.vmem %s231, 96 [#allocation10]
        %2735 = vst.msk [vmem:[%s2734] sm:$0xff] %vm514, %v2733
        %s2736 = sld [smem:[#allocation9 + $0xd]]
        %v2737 = vstv %s2736
        %s2738 = sld [smem:[#allocation8 + $0xd]]
        %v2739 = vstv %s2738
        %v2740 = vmul.f32 %v2739, %v320
        %v2741 = vadd.f32 %v2737, %v2740
        %s2742 = sld [smem:[#allocation8 + $0x1d]]
        %v2743 = vstv %s2742
        %v2744 = vmul.f32 %v2743, %v322
        %v2745 = vadd.f32 %v2741, %v2744
        %s2746 = sld [smem:[#allocation8 + $0x2d]]
        %v2747 = vstv %s2746
        %v2748 = vmul.f32 %v2747, %v324
        %v2749 = vadd.f32 %v2745, %v2748
        %s2750 = sld [smem:[#allocation8 + $0x3d]]
        %v2751 = vstv %s2750
        %v2752 = vmul.f32 %v2751, %v320
        %2754 = vrot.lane.b32.xlu0 %v2752, 127
        %v2755 = vpop.permute.xlu0 %2754
        %v2757 = vadd.f32 %v2749, %v2755
        %s2758 = sld [smem:[#allocation8 + $0x4d]]
        %v2759 = vstv %s2758
        %v2760 = vmul.f32 %v2759, %v322
        %2762 = vrot.lane.b32.xlu0 %v2760, 127
        %v2763 = vpop.permute.xlu0 %2762
        %v2765 = vadd.f32 %v2757, %v2763
        %s2766 = sld [smem:[#allocation8 + $0x5d]]
        %v2767 = vstv %s2766
        %v2768 = vmul.f32 %v2767, %v324
        %2770 = vrot.lane.b32.xlu0 %v2768, 127
        %v2771 = vpop.permute.xlu0 %2770
        %v2773 = vadd.f32 %v2765, %v2771
        %s2774 = sld [smem:[#allocation8 + $0x6d]]
        %v2775 = vstv %s2774
        %v2776 = vmul.f32 %v2775, %v320
        %2778 = vrot.lane.b32.xlu0 %v2776, 126
        %v2779 = vpop.permute.xlu0 %2778
        %v2781 = vadd.f32 %v2773, %v2779
        %s2782 = sld [smem:[#allocation8 + $0x7d]]
        %v2783 = vstv %s2782
        %v2784 = vmul.f32 %v2783, %v322
        %2786 = vrot.lane.b32.xlu0 %v2784, 126
        %v2787 = vpop.permute.xlu0 %2786
        %v2789 = vadd.f32 %v2781, %v2787
        %s2790 = sld [smem:[#allocation8 + $0x8d]]
        %v2791 = vstv %s2790
        %v2792 = vmul.f32 %v2791, %v324
        %2794 = vrot.lane.b32.xlu0 %v2792, 126
        %v2795 = vpop.permute.xlu0 %2794
        %v2797 = vadd.f32 %v2789, %v2795
        %s2798 = sld [smem:[#allocation8 + $0x9d]]
        %v2799 = vstv %s2798
        %v2800 = vmul.f32 %v2799, %v325
        %v2801 = vadd.f32 %v2797, %v2800
        %s2802 = sld [smem:[#allocation8 + $0xad]]
        %v2803 = vstv %s2802
        %v2804 = vmul.f32 %v2803, %v326
        %v2805 = vadd.f32 %v2801, %v2804
        %s2806 = sld [smem:[#allocation8 + $0xbd]]
        %v2807 = vstv %s2806
        %v2808 = vmul.f32 %v2807, %v327
        %v2809 = vadd.f32 %v2805, %v2808
        %s2810 = sld [smem:[#allocation8 + $0xcd]]
        %v2811 = vstv %s2810
        %v2812 = vmul.f32 %v2811, %v325
        %2814 = vrot.lane.b32.xlu0 %v2812, 127
        %v2815 = vpop.permute.xlu0 %2814
        %v2817 = vadd.f32 %v2809, %v2815
        %s2818 = sld [smem:[#allocation8 + $0xdd]]
        %v2819 = vstv %s2818
        %v2820 = vmul.f32 %v2819, %v326
        %2822 = vrot.lane.b32.xlu0 %v2820, 127
        %v2823 = vpop.permute.xlu0 %2822
        %v2825 = vadd.f32 %v2817, %v2823
        %s2826 = sld [smem:[#allocation8 + $0xed]]
        %v2827 = vstv %s2826
        %v2828 = vmul.f32 %v2827, %v327
        %2830 = vrot.lane.b32.xlu0 %v2828, 127
        %v2831 = vpop.permute.xlu0 %2830
        %v2833 = vadd.f32 %v2825, %v2831
        %s2834 = sld [smem:[#allocation8 + $0xfd]]
        %v2835 = vstv %s2834
        %v2836 = vmul.f32 %v2835, %v325
        %2838 = vrot.lane.b32.xlu0 %v2836, 126
        %v2839 = vpop.permute.xlu0 %2838
        %v2841 = vadd.f32 %v2833, %v2839
        %s2842 = sld [smem:[#allocation8 + $0x10d]]
        %v2843 = vstv %s2842
        %v2844 = vmul.f32 %v2843, %v326
        %2846 = vrot.lane.b32.xlu0 %v2844, 126
        %v2847 = vpop.permute.xlu0 %2846
        %v2849 = vadd.f32 %v2841, %v2847
        %s2850 = sld [smem:[#allocation8 + $0x11d]]
        %v2851 = vstv %s2850
        %v2852 = vmul.f32 %v2851, %v327
        %2854 = vrot.lane.b32.xlu0 %v2852, 126
        %v2855 = vpop.permute.xlu0 %2854
        %v2857 = vadd.f32 %v2849, %v2855
        %s2858 = sld [smem:[#allocation8 + $0x12d]]
        %v2859 = vstv %s2858
        %v2860 = vmul.f32 %v2859, %v328
        %v2861 = vadd.f32 %v2857, %v2860
        %s2862 = sld [smem:[#allocation8 + $0x13d]]
        %v2863 = vstv %s2862
        %v2864 = vmul.f32 %v2863, %v329
        %v2865 = vadd.f32 %v2861, %v2864
        %s2866 = sld [smem:[#allocation8 + $0x14d]]
        %v2867 = vstv %s2866
        %v2868 = vmul.f32 %v2867, %v330
        %v2869 = vadd.f32 %v2865, %v2868
        %s2870 = sld [smem:[#allocation8 + $0x15d]]
        %v2871 = vstv %s2870
        %v2872 = vmul.f32 %v2871, %v328
        %2874 = vrot.lane.b32.xlu0 %v2872, 127
        %v2875 = vpop.permute.xlu0 %2874
        %v2877 = vadd.f32 %v2869, %v2875
        %s2878 = sld [smem:[#allocation8 + $0x16d]]
        %v2879 = vstv %s2878
        %v2880 = vmul.f32 %v2879, %v329
        %2882 = vrot.lane.b32.xlu0 %v2880, 127
        %v2883 = vpop.permute.xlu0 %2882
        %v2885 = vadd.f32 %v2877, %v2883
        %s2886 = sld [smem:[#allocation8 + $0x17d]]
        %v2887 = vstv %s2886
        %v2888 = vmul.f32 %v2887, %v330
        %2890 = vrot.lane.b32.xlu0 %v2888, 127
        %v2891 = vpop.permute.xlu0 %2890
        %v2893 = vadd.f32 %v2885, %v2891
        %s2894 = sld [smem:[#allocation8 + $0x18d]]
        %v2895 = vstv %s2894
        %v2896 = vmul.f32 %v2895, %v328
        %2898 = vrot.lane.b32.xlu0 %v2896, 126
        %v2899 = vpop.permute.xlu0 %2898
        %v2901 = vadd.f32 %v2893, %v2899
        %s2902 = sld [smem:[#allocation8 + $0x19d]]
        %v2903 = vstv %s2902
        %v2904 = vmul.f32 %v2903, %v329
        %2906 = vrot.lane.b32.xlu0 %v2904, 126
        %v2907 = vpop.permute.xlu0 %2906
        %v2909 = vadd.f32 %v2901, %v2907
        %s2910 = sld [smem:[#allocation8 + $0x1ad]]
        %v2911 = vstv %s2910
        %v2912 = vmul.f32 %v2911, %v330
        %2914 = vrot.lane.b32.xlu0 %v2912, 126
        %v2915 = vpop.permute.xlu0 %2914
        %v2917 = vadd.f32 %v2909, %v2915
        %v2918 = vmax.f32 %v2917, 0.0
        %s2919 = scalar_lea.vmem %s231, 104 [#allocation10]
        %2920 = vst.msk [vmem:[%s2919] sm:$0xff] %vm514, %v2918
        %s2921 = sld [smem:[#allocation9 + $0xe]]
        %v2922 = vstv %s2921
        %s2923 = sld [smem:[#allocation8 + $0xe]]
        %v2924 = vstv %s2923
        %v2925 = vmul.f32 %v2924, %v320
        %v2926 = vadd.f32 %v2922, %v2925
        %s2927 = sld [smem:[#allocation8 + $0x1e]]
        %v2928 = vstv %s2927
        %v2929 = vmul.f32 %v2928, %v322
        %v2930 = vadd.f32 %v2926, %v2929
        %s2931 = sld [smem:[#allocation8 + $0x2e]]
        %v2932 = vstv %s2931
        %v2933 = vmul.f32 %v2932, %v324
        %v2934 = vadd.f32 %v2930, %v2933
        %s2935 = sld [smem:[#allocation8 + $0x3e]]
        %v2936 = vstv %s2935
        %v2937 = vmul.f32 %v2936, %v320
        %2939 = vrot.lane.b32.xlu0 %v2937, 127
        %v2940 = vpop.permute.xlu0 %2939
        %v2942 = vadd.f32 %v2934, %v2940
        %s2943 = sld [smem:[#allocation8 + $0x4e]]
        %v2944 = vstv %s2943
        %v2945 = vmul.f32 %v2944, %v322
        %2947 = vrot.lane.b32.xlu0 %v2945, 127
        %v2948 = vpop.permute.xlu0 %2947
        %v2950 = vadd.f32 %v2942, %v2948
        %s2951 = sld [smem:[#allocation8 + $0x5e]]
        %v2952 = vstv %s2951
        %v2953 = vmul.f32 %v2952, %v324
        %2955 = vrot.lane.b32.xlu0 %v2953, 127
        %v2956 = vpop.permute.xlu0 %2955
        %v2958 = vadd.f32 %v2950, %v2956
        %s2959 = sld [smem:[#allocation8 + $0x6e]]
        %v2960 = vstv %s2959
        %v2961 = vmul.f32 %v2960, %v320
        %2963 = vrot.lane.b32.xlu0 %v2961, 126
        %v2964 = vpop.permute.xlu0 %2963
        %v2966 = vadd.f32 %v2958, %v2964
        %s2967 = sld [smem:[#allocation8 + $0x7e]]
        %v2968 = vstv %s2967
        %v2969 = vmul.f32 %v2968, %v322
        %2971 = vrot.lane.b32.xlu0 %v2969, 126
        %v2972 = vpop.permute.xlu0 %2971
        %v2974 = vadd.f32 %v2966, %v2972
        %s2975 = sld [smem:[#allocation8 + $0x8e]]
        %v2976 = vstv %s2975
        %v2977 = vmul.f32 %v2976, %v324
        %2979 = vrot.lane.b32.xlu0 %v2977, 126
        %v2980 = vpop.permute.xlu0 %2979
        %v2982 = vadd.f32 %v2974, %v2980
        %s2983 = sld [smem:[#allocation8 + $0x9e]]
        %v2984 = vstv %s2983
        %v2985 = vmul.f32 %v2984, %v325
        %v2986 = vadd.f32 %v2982, %v2985
        %s2987 = sld [smem:[#allocation8 + $0xae]]
        %v2988 = vstv %s2987
        %v2989 = vmul.f32 %v2988, %v326
        %v2990 = vadd.f32 %v2986, %v2989
        %s2991 = sld [smem:[#allocation8 + $0xbe]]
        %v2992 = vstv %s2991
        %v2993 = vmul.f32 %v2992, %v327
        %v2994 = vadd.f32 %v2990, %v2993
        %s2995 = sld [smem:[#allocation8 + $0xce]]
        %v2996 = vstv %s2995
        %v2997 = vmul.f32 %v2996, %v325
        %2999 = vrot.lane.b32.xlu0 %v2997, 127
        %v3000 = vpop.permute.xlu0 %2999
        %v3002 = vadd.f32 %v2994, %v3000
        %s3003 = sld [smem:[#allocation8 + $0xde]]
        %v3004 = vstv %s3003
        %v3005 = vmul.f32 %v3004, %v326
        %3007 = vrot.lane.b32.xlu0 %v3005, 127
        %v3008 = vpop.permute.xlu0 %3007
        %v3010 = vadd.f32 %v3002, %v3008
        %s3011 = sld [smem:[#allocation8 + $0xee]]
        %v3012 = vstv %s3011
        %v3013 = vmul.f32 %v3012, %v327
        %3015 = vrot.lane.b32.xlu0 %v3013, 127
        %v3016 = vpop.permute.xlu0 %3015
        %v3018 = vadd.f32 %v3010, %v3016
        %s3019 = sld [smem:[#allocation8 + $0xfe]]
        %v3020 = vstv %s3019
        %v3021 = vmul.f32 %v3020, %v325
        %3023 = vrot.lane.b32.xlu0 %v3021, 126
        %v3024 = vpop.permute.xlu0 %3023
        %v3026 = vadd.f32 %v3018, %v3024
        %s3027 = sld [smem:[#allocation8 + $0x10e]]
        %v3028 = vstv %s3027
        %v3029 = vmul.f32 %v3028, %v326
        %3031 = vrot.lane.b32.xlu0 %v3029, 126
        %v3032 = vpop.permute.xlu0 %3031
        %v3034 = vadd.f32 %v3026, %v3032
        %s3035 = sld [smem:[#allocation8 + $0x11e]]
        %v3036 = vstv %s3035
        %v3037 = vmul.f32 %v3036, %v327
        %3039 = vrot.lane.b32.xlu0 %v3037, 126
        %v3040 = vpop.permute.xlu0 %3039
        %v3042 = vadd.f32 %v3034, %v3040
        %s3043 = sld [smem:[#allocation8 + $0x12e]]
        %v3044 = vstv %s3043
        %v3045 = vmul.f32 %v3044, %v328
        %v3046 = vadd.f32 %v3042, %v3045
        %s3047 = sld [smem:[#allocation8 + $0x13e]]
        %v3048 = vstv %s3047
        %v3049 = vmul.f32 %v3048, %v329
        %v3050 = vadd.f32 %v3046, %v3049
        %s3051 = sld [smem:[#allocation8 + $0x14e]]
        %v3052 = vstv %s3051
        %v3053 = vmul.f32 %v3052, %v330
        %v3054 = vadd.f32 %v3050, %v3053
        %s3055 = sld [smem:[#allocation8 + $0x15e]]
        %v3056 = vstv %s3055
        %v3057 = vmul.f32 %v3056, %v328
        %3059 = vrot.lane.b32.xlu0 %v3057, 127
        %v3060 = vpop.permute.xlu0 %3059
        %v3062 = vadd.f32 %v3054, %v3060
        %s3063 = sld [smem:[#allocation8 + $0x16e]]
        %v3064 = vstv %s3063
        %v3065 = vmul.f32 %v3064, %v329
        %3067 = vrot.lane.b32.xlu0 %v3065, 127
        %v3068 = vpop.permute.xlu0 %3067
        %v3070 = vadd.f32 %v3062, %v3068
        %s3071 = sld [smem:[#allocation8 + $0x17e]]
        %v3072 = vstv %s3071
        %v3073 = vmul.f32 %v3072, %v330
        %3075 = vrot.lane.b32.xlu0 %v3073, 127
        %v3076 = vpop.permute.xlu0 %3075
        %v3078 = vadd.f32 %v3070, %v3076
        %s3079 = sld [smem:[#allocation8 + $0x18e]]
        %v3080 = vstv %s3079
        %v3081 = vmul.f32 %v3080, %v328
        %3083 = vrot.lane.b32.xlu0 %v3081, 126
        %v3084 = vpop.permute.xlu0 %3083
        %v3086 = vadd.f32 %v3078, %v3084
        %s3087 = sld [smem:[#allocation8 + $0x19e]]
        %v3088 = vstv %s3087
        %v3089 = vmul.f32 %v3088, %v329
        %3091 = vrot.lane.b32.xlu0 %v3089, 126
        %v3092 = vpop.permute.xlu0 %3091
        %v3094 = vadd.f32 %v3086, %v3092
        %s3095 = sld [smem:[#allocation8 + $0x1ae]]
        %v3096 = vstv %s3095
        %v3097 = vmul.f32 %v3096, %v330
        %3099 = vrot.lane.b32.xlu0 %v3097, 126
        %v3100 = vpop.permute.xlu0 %3099
        %v3102 = vadd.f32 %v3094, %v3100
        %v3103 = vmax.f32 %v3102, 0.0
        %s3104 = scalar_lea.vmem %s231, 112 [#allocation10]
        %3105 = vst.msk [vmem:[%s3104] sm:$0xff] %vm514, %v3103
        %s3106 = sld [smem:[#allocation9 + $0xf]]
        %v3107 = vstv %s3106
        %s3108 = sld [smem:[#allocation8 + $0xf]]
        %v3109 = vstv %s3108
        %v3110 = vmul.f32 %v3109, %v320
        %v3111 = vadd.f32 %v3107, %v3110
        %s3112 = sld [smem:[#allocation8 + $0x1f]]
        %v3113 = vstv %s3112
        %v3114 = vmul.f32 %v3113, %v322
        %v3115 = vadd.f32 %v3111, %v3114
        %s3116 = sld [smem:[#allocation8 + $0x2f]]
        %v3117 = vstv %s3116
        %v3118 = vmul.f32 %v3117, %v324
        %v3119 = vadd.f32 %v3115, %v3118
        %s3120 = sld [smem:[#allocation8 + $0x3f]]
        %v3121 = vstv %s3120
        %v3122 = vmul.f32 %v3121, %v320
        %3124 = vrot.lane.b32.xlu0 %v3122, 127
        %v3125 = vpop.permute.xlu0 %3124
        %v3127 = vadd.f32 %v3119, %v3125
        %s3128 = sld [smem:[#allocation8 + $0x4f]]
        %v3129 = vstv %s3128
        %v3130 = vmul.f32 %v3129, %v322
        %3132 = vrot.lane.b32.xlu0 %v3130, 127
        %v3133 = vpop.permute.xlu0 %3132
        %v3135 = vadd.f32 %v3127, %v3133
        %s3136 = sld [smem:[#allocation8 + $0x5f]]
        %v3137 = vstv %s3136
        %v3138 = vmul.f32 %v3137, %v324
        %3140 = vrot.lane.b32.xlu0 %v3138, 127
        %v3141 = vpop.permute.xlu0 %3140
        %v3143 = vadd.f32 %v3135, %v3141
        %s3144 = sld [smem:[#allocation8 + $0x6f]]
        %v3145 = vstv %s3144
        %v3146 = vmul.f32 %v3145, %v320
        %3148 = vrot.lane.b32.xlu0 %v3146, 126
        %v3149 = vpop.permute.xlu0 %3148
        %v3151 = vadd.f32 %v3143, %v3149
        %s3152 = sld [smem:[#allocation8 + $0x7f]]
        %v3153 = vstv %s3152
        %v3154 = vmul.f32 %v3153, %v322
        %3156 = vrot.lane.b32.xlu0 %v3154, 126
        %v3157 = vpop.permute.xlu0 %3156
        %v3159 = vadd.f32 %v3151, %v3157
        %s3160 = sld [smem:[#allocation8 + $0x8f]]
        %v3161 = vstv %s3160
        %v3162 = vmul.f32 %v3161, %v324
        %3164 = vrot.lane.b32.xlu0 %v3162, 126
        %v3165 = vpop.permute.xlu0 %3164
        %v3167 = vadd.f32 %v3159, %v3165
        %s3168 = sld [smem:[#allocation8 + $0x9f]]
        %v3169 = vstv %s3168
        %v3170 = vmul.f32 %v3169, %v325
        %v3171 = vadd.f32 %v3167, %v3170
        %s3172 = sld [smem:[#allocation8 + $0xaf]]
        %v3173 = vstv %s3172
        %v3174 = vmul.f32 %v3173, %v326
        %v3175 = vadd.f32 %v3171, %v3174
        %s3176 = sld [smem:[#allocation8 + $0xbf]]
        %v3177 = vstv %s3176
        %v3178 = vmul.f32 %v3177, %v327
        %v3179 = vadd.f32 %v3175, %v3178
        %s3180 = sld [smem:[#allocation8 + $0xcf]]
        %v3181 = vstv %s3180
        %v3182 = vmul.f32 %v3181, %v325
        %3184 = vrot.lane.b32.xlu0 %v3182, 127
        %v3185 = vpop.permute.xlu0 %3184
        %v3187 = vadd.f32 %v3179, %v3185
        %s3188 = sld [smem:[#allocation8 + $0xdf]]
        %v3189 = vstv %s3188
        %v3190 = vmul.f32 %v3189, %v326
        %3192 = vrot.lane.b32.xlu0 %v3190, 127
        %v3193 = vpop.permute.xlu0 %3192
        %v3195 = vadd.f32 %v3187, %v3193
        %s3196 = sld [smem:[#allocation8 + $0xef]]
        %v3197 = vstv %s3196
        %v3198 = vmul.f32 %v3197, %v327
        %3200 = vrot.lane.b32.xlu0 %v3198, 127
        %v3201 = vpop.permute.xlu0 %3200
        %v3203 = vadd.f32 %v3195, %v3201
        %s3204 = sld [smem:[#allocation8 + $0xff]]
        %v3205 = vstv %s3204
        %v3206 = vmul.f32 %v3205, %v325
        %3208 = vrot.lane.b32.xlu0 %v3206, 126
        %v3209 = vpop.permute.xlu0 %3208
        %v3211 = vadd.f32 %v3203, %v3209
        %s3212 = sld [smem:[#allocation8 + $0x10f]]
        %v3213 = vstv %s3212
        %v3214 = vmul.f32 %v3213, %v326
        %3216 = vrot.lane.b32.xlu0 %v3214, 126
        %v3217 = vpop.permute.xlu0 %3216
        %v3219 = vadd.f32 %v3211, %v3217
        %s3220 = sld [smem:[#allocation8 + $0x11f]]
        %v3221 = vstv %s3220
        %v3222 = vmul.f32 %v3221, %v327
        %3224 = vrot.lane.b32.xlu0 %v3222, 126
        %v3225 = vpop.permute.xlu0 %3224
        %v3227 = vadd.f32 %v3219, %v3225
        %s3228 = sld [smem:[#allocation8 + $0x12f]]
        %v3229 = vstv %s3228
        %v3230 = vmul.f32 %v3229, %v328
        %v3231 = vadd.f32 %v3227, %v3230
        %s3232 = sld [smem:[#allocation8 + $0x13f]]
        %v3233 = vstv %s3232
        %v3234 = vmul.f32 %v3233, %v329
        %v3235 = vadd.f32 %v3231, %v3234
        %s3236 = sld [smem:[#allocation8 + $0x14f]]
        %v3237 = vstv %s3236
        %v3238 = vmul.f32 %v3237, %v330
        %v3239 = vadd.f32 %v3235, %v3238
        %s3240 = sld [smem:[#allocation8 + $0x15f]]
        %v3241 = vstv %s3240
        %v3242 = vmul.f32 %v3241, %v328
        %3244 = vrot.lane.b32.xlu0 %v3242, 127
        %v3245 = vpop.permute.xlu0 %3244
        %v3247 = vadd.f32 %v3239, %v3245
        %s3248 = sld [smem:[#allocation8 + $0x16f]]
        %v3249 = vstv %s3248
        %v3250 = vmul.f32 %v3249, %v329
        %3252 = vrot.lane.b32.xlu0 %v3250, 127
        %v3253 = vpop.permute.xlu0 %3252
        %v3255 = vadd.f32 %v3247, %v3253
        %s3256 = sld [smem:[#allocation8 + $0x17f]]
        %v3257 = vstv %s3256
        %v3258 = vmul.f32 %v3257, %v330
        %3260 = vrot.lane.b32.xlu0 %v3258, 127
        %v3261 = vpop.permute.xlu0 %3260
        %v3263 = vadd.f32 %v3255, %v3261
        %s3264 = sld [smem:[#allocation8 + $0x18f]]
        %v3265 = vstv %s3264
        %v3266 = vmul.f32 %v3265, %v328
        %3268 = vrot.lane.b32.xlu0 %v3266, 126
        %v3269 = vpop.permute.xlu0 %3268
        %v3271 = vadd.f32 %v3263, %v3269
        %s3272 = sld [smem:[#allocation8 + $0x19f]]
        %v3273 = vstv %s3272
        %v3274 = vmul.f32 %v3273, %v329
        %3276 = vrot.lane.b32.xlu0 %v3274, 126
        %v3277 = vpop.permute.xlu0 %3276
        %v3279 = vadd.f32 %v3271, %v3277
        %s3280 = sld [smem:[#allocation8 + $0x1af]]
        %v3281 = vstv %s3280
        %v3282 = vmul.f32 %v3281, %v330
        %3284 = vrot.lane.b32.xlu0 %v3282, 126
        %v3285 = vpop.permute.xlu0 %3284
        %v3287 = vadd.f32 %v3279, %v3285
        %v3288 = vmax.f32 %v3287, 0.0
        %s3289 = scalar_lea.vmem %s231, 120 [#allocation10]
        %3290 = vst.msk [vmem:[%s3289] sm:$0xff] %vm514, %v3288
        %s3291 = sand.u32 %s112, 1
        %s3292 = scalar_lea.sflag [#allocation5], %s3291
        %s3293 = sand.u32 %s112, 1
        %s3294 = smul.addr %s3293, 128
        %s3295 = scalar_lea.vmem [#allocation10], %s3294
        // Predicated region
        $region45: #{tpu_custom_call.1} parent=31 // pred_check
          %p3296 = pneg %p122
        $region46: #{tpu_custom_call.1} parent=31 // pred_check_branch
          %3298 = sbr.rel (%p3296) target = $region48
        $region47: #{tpu_custom_call.1} parent=31 // pred_region
          %3300 = vsyncadd %s3292, 0
          %s3301 = smul.addr %s26, 32
          %s3302 = sadd.s32 %s27, %s3301
          %s3303 = smul.addr %s3302, 8
          %s3304 = scalar_lea.hbm %s3, %s3303
          %s3305 = sshll.u32 %s3295, 4
          %s3306 = int_to_ptr.vmem [resolvable:$true] %s3305
          %s3307 = sshll.u32 %s3304, 4
          %s3308 = int_to_ptr.hbm [resolvable:$true] %s3307
          %3313 = dma.vmem_to_hbm [thread:$0]  %s3306, 2048, %s3308, %s3292, 128, 256, 8
        $region48: #{tpu_custom_call.1} parent=31 // pred_fallthru
          _
      $region32: #{tpu_custom_call.1} parent=5 // pred_fallthru
        _
      %p3314 = scmp.le.s32.totalorder 2, %s17
      // Predicated region
      $region49: #{tpu_custom_call.1} parent=5 // pred_check
        %p3315 = pneg %p3314
      $region50: #{tpu_custom_call.1} parent=5 // pred_check_branch
        %3317 = sbr.rel (%p3315) target = $region52
      $region51: #{tpu_custom_call.1} parent=5 // pred_region
        %s3318 = ssub.s32 %s17, 2
        // Predicated region
        $region53: #{tpu_custom_call.1} parent=51 // pred_check
          %p3319 = pneg %p128
        $region54: #{tpu_custom_call.1} parent=51 // pred_check_branch
          %3321 = sbr.rel (%p3319) target = $region56
        $region55: #{tpu_custom_call.1} parent=51 // pred_region
          %s3322 = sand.u32 %s113, 1
          %s3323 = scalar_lea.sflag [#allocation5], %s3322
          %s3324 = sand.u32 %s113, 1
          %s3325 = smul.addr %s3324, 128
          %s3326 = scalar_lea.vmem [#allocation10], %s3325
          %3328 = dma.done %s3323, 2048
        $region56: #{tpu_custom_call.1} parent=51 // pred_fallthru
          _
      $region52: #{tpu_custom_call.1} parent=5 // pred_fallthru
        _
    $region6: #{tpu_custom_call.1} parent=1 // loop_footer
      %s21 = sadd.s32 1, %s17
    $region7: #{tpu_custom_call.1} parent=1 // loop_footer_branch
      %16 = sbr.rel target = $region3
    $region8: #{tpu_custom_call.1} parent=1 // loop_exit
      _
    %3329 = vsyncpa [#allocation4], 1
    %s3330 = scalar_lea.sflag [#allocation4], 1
    %3331 = vsyncpa %s3330, 1
    %3332 = vsyncpa [#allocation5], 1
    %s3333 = scalar_lea.sflag [#allocation5], 1
    %3334 = vsyncpa %s3333, 1
    %3335 = vsyncpa [#allocation6], 1
    %s3336 = scalar_lea.sflag [#allocation6], 1
    %3337 = vsyncpa %s3336, 1
    %3338 = vsyncpa [#allocation7], 1
    %s3339 = scalar_lea.sflag [#allocation7], 1
    %3340 = vsyncpa %s3339, 1

</llo_original>
